<compile_context>
chip_gen: v7x
topology: tpu7x:2x2x1
jax: 0.10.0
libtpu: 0.0.40
codegen_flags: <defaults>
</compile_context>

<pallas_src>
import jax
import jax.numpy as jnp
import numpy as np
from jax.experimental import pallas as pl
from jax.experimental.pallas import tpu as pltpu

H = 256          # LSTM hidden size
F_IN = 512       # LSTM input size (256 + 256 concat)
G = 4 * H        # gate width (i, f, g, o)
N_OUT = 2        # final FC output width
FC_PAD = 128     # lane-dense padded FC width (sliced to N_OUT in the wrapper)


def temporal_kernel(imgs_ref, cells_ref,            # SMEM (T, B) int32
                    emb_img_ref, emb_cell_ref,      # VMEM (900, 256) / (5, 256) f32
                    wih_ref, whh_ref, b_ref,        # VMEM bf16 / bf16 / f32
                    wfc_ref, bfc_ref,               # VMEM (256, 128) / (1, 128) f32
                    out_ref,                        # VMEM (T, 128) f32 output
                    x_ref, gx_ref, hseq_ref):       # VMEM scratch
    """Fused embedding gather + LSTM recurrence + FC + sigmoid for one batch row."""
    T = out_ref.shape[0]
    b_last = imgs_ref.shape[1] - 1                  # y[:, -1, :] -> last batch row

    # 1) Fused embedding gather + concat: build x = (T, 512) in VMEM scratch.
    def gather(t, carry):
        img_idx = imgs_ref[t, b_last]
        cell_idx = cells_ref[t, b_last]
        x_ref[pl.ds(t, 1), 0:H] = emb_img_ref[pl.ds(img_idx, 1), :]
        x_ref[pl.ds(t, 1), H:F_IN] = emb_cell_ref[pl.ds(cell_idx, 1), :]
        return carry

    jax.lax.fori_loop(0, T, gather, 0, unroll=min(T, 8))

    # 2) Hoisted non-recurrent input projection: one dense MXU matmul over all T.
    gx_ref[...] = (jnp.dot(x_ref[...].astype(jnp.bfloat16), wih_ref[...],
                           preferred_element_type=jnp.float32) + b_ref[...])

    # 3) Serial recurrence: only h_{t-1} @ W_hh^T per step (streamed from VMEM).
    def step(t, carry):
        h_prev, c_prev = carry                      # (1, 256) f32
        gates = (gx_ref[pl.ds(t, 1), :]
                 + jnp.dot(h_prev.astype(whh_ref.dtype), whh_ref[...],
                           preferred_element_type=jnp.float32))     # (1, 1024)
        i_g = jax.nn.sigmoid(gates[:, 0 * H:1 * H])
        f_g = jax.nn.sigmoid(gates[:, 1 * H:2 * H])
        g_g = jnp.tanh(gates[:, 2 * H:3 * H])
        o_g = jax.nn.sigmoid(gates[:, 3 * H:4 * H])
        c_new = f_g * c_prev + i_g * g_g
        h_new = o_g * jnp.tanh(c_new)
        hseq_ref[pl.ds(t, 1), :] = h_new
        return (h_new, c_new)

    h0 = jnp.zeros((1, H), jnp.float32)
    c0 = jnp.zeros((1, H), jnp.float32)
    # Bounded unroll: enough LLO scheduling visibility, flat vreg/compile cost at large T.
    # Note: h_prev is cast f32->bf16 each step for the MXU; acceptable at small T.
    jax.lax.fori_loop(0, T, step, (h0, c0), unroll=min(T, 8))

    # 4) Final Linear(256 -> 2) + Sigmoid, lane-padded to 128 columns so the store
    #    stays lane-dense (wrapper slices [:, :2]).  Padded cols have zero weights.
    logits = jnp.dot(hseq_ref[...], wfc_ref[...],
                     preferred_element_type=jnp.float32) + bfc_ref[...]
    out_ref[...] = jax.nn.sigmoid(logits)


def prepare_kernel_params(params):
    """One-time parameter prep (transpose / cast / bias-sum / FC lane padding).

    Keeps the per-call path free of weight-reformat XLA ops."""
    wfc_pad = jnp.zeros((H, FC_PAD), jnp.float32).at[:, :N_OUT].set(params["w_fc"].T)
    bfc_pad = jnp.zeros((1, FC_PAD), jnp.float32).at[0, :N_OUT].set(params["b_fc"])
    return {
        "emb_img": params["emb_indice"].astype(jnp.float32),        # (900, 256)
        "emb_cell": params["emb_cell"].astype(jnp.float32),         # (5, 256)
        "wih_t": params["w_ih"].T.astype(jnp.bfloat16),             # (512, 1024)
        "whh_t": params["w_hh"].T.astype(jnp.bfloat16),             # (256, 1024)
        "bias": (params["b_ih"] + params["b_hh"]).reshape(1, G).astype(jnp.float32),
        "wfc_pad": wfc_pad,                                         # (256, 128)
        "bfc_pad": bfc_pad,                                         # (1, 128)
    }


def temporal_model_pallas(cells, imgs, kp):
    """cells, imgs: (T, B) int32 index tensors. Returns (T, 2) f32."""
    T, _ = cells.shape
    smem = pl.BlockSpec(memory_space=pltpu.MemorySpace.SMEM)
    vmem = pl.BlockSpec(memory_space=pltpu.MemorySpace.VMEM)

    out_pad = pl.pallas_call(
        temporal_kernel,
        out_shape=jax.ShapeDtypeStruct((T, FC_PAD), jnp.float32),
        in_specs=[smem, smem,                       # imgs, cells index tables
                  vmem, vmem,                       # embedding tables
                  vmem, vmem, vmem,                 # W_ih^T, W_hh^T, bias
                  vmem, vmem],                      # padded FC weight / bias
        out_specs=vmem,
        scratch_shapes=[
            pltpu.VMEM((T, F_IN), jnp.float32),     # x   : gathered embeddings
            pltpu.VMEM((T, G), jnp.float32),        # gx  : hoisted input projection
            pltpu.VMEM((T, H), jnp.float32),        # hseq: per-step hidden states
        ],
        compiler_params=pltpu.CompilerParams(vmem_limit_bytes=32 * 1024 * 1024),
    )(imgs, cells, kp["emb_img"], kp["emb_cell"],
      kp["wih_t"], kp["whh_t"], kp["bias"], kp["wfc_pad"], kp["bfc_pad"])

    # TODO(synk): Dropout(p=0.5) is identity in eval mode; training-mode RNG mask omitted.
    return out_pad[:, :N_OUT]


def temporal_model_reference(cells, imgs, params):
    # Pure-JAX f32 reference over the FULL batch (validates the batch-slice optimization
    # and the y[:, -1, :] = "last batch row" semantics of the PyTorch module).
    emb_c = params["emb_cell"][cells]
    emb_i = params["emb_indice"][imgs]
    data = jnp.concatenate([emb_i, emb_c], axis=2)                      # (T, B, 512)
    T, B, _ = data.shape

    def step(carry, x_t):
        h, c = carry
        gates = (x_t @ params["w_ih"].T + params["b_ih"]
                 + h @ params["w_hh"].T + params["b_hh"])
        i_g = jax.nn.sigmoid(gates[:, 0 * H:1 * H])
        f_g = jax.nn.sigmoid(gates[:, 1 * H:2 * H])
        g_g = jnp.tanh(gates[:, 2 * H:3 * H])
        o_g = jax.nn.sigmoid(gates[:, 3 * H:4 * H])
        c = f_g * c + i_g * g_g
        h = o_g * jnp.tanh(c)
        return (h, c), h

    h0 = jnp.zeros((B, H), jnp.float32)
    c0 = jnp.zeros((B, H), jnp.float32)
    (_, _), hs = jax.lax.scan(step, (h0, c0), data)                     # (T, B, H)
    last = hs[:, -1, :]                                                 # (T, H)
    return jax.nn.sigmoid(last @ params["w_fc"].T + params["b_fc"])


def init_params(key):
    ks = jax.random.split(key, 8)
    k = 1.0 / jnp.sqrt(jnp.float32(H))
    return {
        # nn.Embedding default init: N(0, 1)
        "emb_indice": jax.random.normal(ks[0], (900, H), jnp.float32),
        "emb_cell": jax.random.normal(ks[1], (5, H), jnp.float32),
        # nn.LSTM default init: U(-1/sqrt(H), 1/sqrt(H)); gate order i, f, g, o
        "w_ih": jax.random.uniform(ks[2], (G, F_IN), jnp.float32, -k, k),
        "w_hh": jax.random.uniform(ks[3], (G, H), jnp.float32, -k, k),
        "b_ih": jax.random.uniform(ks[4], (G,), jnp.float32, -k, k),
        "b_hh": jax.random.uniform(ks[5], (G,), jnp.float32, -k, k),
        # nn.Linear(256, 2)
        "w_fc": jax.random.uniform(ks[6], (N_OUT, H), jnp.float32, -k, k),
        "b_fc": jax.random.uniform(ks[7], (N_OUT,), jnp.float32, -k, k),
    }


if __name__ == "__main__":
    key = jax.random.PRNGKey(0)
    k_cells, k_imgs, k_params = jax.random.split(key, 3)

    # (T=2 seq-major, B=8) integer index inputs
    cells = jax.random.randint(k_cells, (2, 8), 0, 5, dtype=jnp.int32)
    imgs = jax.random.randint(k_imgs, (2, 8), 0, 900, dtype=jnp.int32)
    params = init_params(k_params)

    # One-time parameter prep (transpose / cast / bias sum / FC padding).
    kparams = jax.tree_util.tree_map(jax.block_until_ready, prepare_kernel_params(params))

    fn = jax.jit(temporal_model_pallas)
    out = jax.block_until_ready(fn(cells, imgs, kparams))

    ref = jax.block_until_ready(temporal_model_reference(cells, imgs, params))
    assert out.shape == ref.shape == (2, 2), (out.shape, ref.shape)

    # bf16 MXU operands (f32 accumulation) => slightly looser tolerance than pure f32.
    np.testing.assert_allclose(np.asarray(out), np.asarray(ref), atol=2e-2, rtol=2e-2)

    print("KERNEL_OK")
</pallas_src>

<mosaic_0001>
module attributes {stable_mosaic.version = 11 : i64} {
  func.func @temporal_kernel(%arg0: memref<2x8xi32, #tpu.memory_space<smem>>, %arg1: memref<2x8xi32, #tpu.memory_space<smem>>, %arg2: memref<900x256xf32, #tpu.memory_space<vmem>>, %arg3: memref<5x256xf32, #tpu.memory_space<vmem>>, %arg4: memref<512x1024xbf16, #tpu.memory_space<vmem>>, %arg5: memref<256x1024xbf16, #tpu.memory_space<vmem>>, %arg6: memref<1x1024xf32, #tpu.memory_space<vmem>>, %arg7: memref<256x128xf32, #tpu.memory_space<vmem>>, %arg8: memref<1x128xf32, #tpu.memory_space<vmem>>, %arg9: memref<2x128xf32, #tpu.memory_space<vmem>>, %arg10: memref<2x512xf32, #tpu.memory_space<vmem>>, %arg11: memref<2x1024xf32, #tpu.memory_space<vmem>>, %arg12: memref<2x256xf32, #tpu.memory_space<vmem>>) attributes {dimension_semantics = [], scalar_prefetch = 0 : i64, scratch_operands = 3 : i64, tpu.core_type = #tpu.core_type<tc>} {
    %c0_i32 = arith.constant 0 : i32
    %0 = arith.index_cast %c0_i32 : i32 to index
    %c7 = arith.constant 7 : index
    %1 = memref.load %arg0[%0, %c7] : memref<2x8xi32, #tpu.memory_space<smem>>
    %2 = arith.index_cast %c0_i32 : i32 to index
    %c7_0 = arith.constant 7 : index
    %3 = memref.load %arg1[%2, %c7_0] : memref<2x8xi32, #tpu.memory_space<smem>>
    %4 = arith.index_cast %1 : i32 to index
    %c0 = arith.constant 0 : index
    %5 = vector.load %arg2[%4, %c0] : memref<900x256xf32, #tpu.memory_space<vmem>>, vector<1x256xf32>
    %6 = arith.index_cast %c0_i32 : i32 to index
    %c0_1 = arith.constant 0 : index
    %7 = vector.load %arg10[%6, %c0_1] : memref<2x512xf32, #tpu.memory_space<vmem>>, vector<1x256xf32>
    tpu.vector_store %arg10[%6, %c0_1], %5 {strides = array<i32>} : memref<2x512xf32, #tpu.memory_space<vmem>>, vector<1x256xf32>,
    %8 = arith.index_cast %3 : i32 to index
    %c0_2 = arith.constant 0 : index
    %9 = vector.load %arg3[%8, %c0_2] : memref<5x256xf32, #tpu.memory_space<vmem>>, vector<1x256xf32>
    %10 = arith.index_cast %c0_i32 : i32 to index
    %c256 = arith.constant 256 : index
    %11 = vector.load %arg10[%10, %c256] : memref<2x512xf32, #tpu.memory_space<vmem>>, vector<1x256xf32>
    tpu.vector_store %arg10[%10, %c256], %9 {strides = array<i32>} : memref<2x512xf32, #tpu.memory_space<vmem>>, vector<1x256xf32>,
    %c1_i32 = arith.constant 1 : i32
    %12 = arith.index_cast %c1_i32 : i32 to index
    %c7_3 = arith.constant 7 : index
    %13 = memref.load %arg0[%12, %c7_3] : memref<2x8xi32, #tpu.memory_space<smem>>
    %14 = arith.index_cast %c1_i32 : i32 to index
    %c7_4 = arith.constant 7 : index
    %15 = memref.load %arg1[%14, %c7_4] : memref<2x8xi32, #tpu.memory_space<smem>>
    %16 = arith.index_cast %13 : i32 to index
    %c0_5 = arith.constant 0 : index
    %17 = vector.load %arg2[%16, %c0_5] : memref<900x256xf32, #tpu.memory_space<vmem>>, vector<1x256xf32>
    %18 = arith.index_cast %c1_i32 : i32 to index
    %c0_6 = arith.constant 0 : index
    %19 = vector.load %arg10[%18, %c0_6] : memref<2x512xf32, #tpu.memory_space<vmem>>, vector<1x256xf32>
    tpu.vector_store %arg10[%18, %c0_6], %17 {strides = array<i32>} : memref<2x512xf32, #tpu.memory_space<vmem>>, vector<1x256xf32>,
    %20 = arith.index_cast %15 : i32 to index
    %c0_7 = arith.constant 0 : index
    %21 = vector.load %arg3[%20, %c0_7] : memref<5x256xf32, #tpu.memory_space<vmem>>, vector<1x256xf32>
    %22 = arith.index_cast %c1_i32 : i32 to index
    %c256_8 = arith.constant 256 : index
    %23 = vector.load %arg10[%22, %c256_8] : memref<2x512xf32, #tpu.memory_space<vmem>>, vector<1x256xf32>
    tpu.vector_store %arg10[%22, %c256_8], %21 {strides = array<i32>} : memref<2x512xf32, #tpu.memory_space<vmem>>, vector<1x256xf32>,
    %c2_i32 = arith.constant 2 : i32
    %c0_9 = arith.constant 0 : index
    %c0_10 = arith.constant 0 : index
    %24 = vector.load %arg10[%c0_9, %c0_10] : memref<2x512xf32, #tpu.memory_space<vmem>>, vector<2x512xf32>
    %25 = arith.truncf %24 : vector<2x512xf32> to vector<2x512xbf16>
    %c0_11 = arith.constant 0 : index
    %c0_12 = arith.constant 0 : index
    %26 = vector.load %arg4[%c0_11, %c0_12] : memref<512x1024xbf16, #tpu.memory_space<vmem>>, vector<512x1024xbf16>
    %cst = arith.constant dense<0.000000e+00> : vector<2x1024xf32>
    %27 = tpu.matmul %25, %26, %cst {dimension_numbers = #tpu.dot_dimension_numbers<[1], [0], [0], [1], [0, 0, 1, 1], [], []>} : vector<2x512xbf16>, vector<512x1024xbf16>, vector<2x1024xf32> -> vector<2x1024xf32>
    %c0_13 = arith.constant 0 : index
    %c0_14 = arith.constant 0 : index
    %28 = vector.load %arg6[%c0_13, %c0_14] : memref<1x1024xf32, #tpu.memory_space<vmem>>, vector<1x1024xf32>
    %29 = vector.broadcast %28 : vector<1x1024xf32> to vector<2x1024xf32>
    %30 = arith.addf %27, %29 : vector<2x1024xf32>
    %c0_15 = arith.constant 0 : index
    %c0_16 = arith.constant 0 : index
    %31 = vector.load %arg11[%c0_15, %c0_16] : memref<2x1024xf32, #tpu.memory_space<vmem>>, vector<2x1024xf32>
    tpu.vector_store %arg11[%c0_15, %c0_16], %30 {strides = array<i32>} : memref<2x1024xf32, #tpu.memory_space<vmem>>, vector<2x1024xf32>,
    %cst_17 = arith.constant 0.000000e+00 : f32
    %32 = vector.broadcast %cst_17 : f32 to vector<1x256xf32>
    %cst_18 = arith.constant 0.000000e+00 : f32
    %33 = vector.broadcast %cst_18 : f32 to vector<1x256xf32>
    %c0_i32_19 = arith.constant 0 : i32
    %34 = arith.index_cast %c0_i32_19 : i32 to index
    %c0_20 = arith.constant 0 : index
    %35 = vector.load %arg11[%34, %c0_20] : memref<2x1024xf32, #tpu.memory_space<vmem>>, vector<1x1024xf32>
    %36 = arith.truncf %32 : vector<1x256xf32> to vector<1x256xbf16>
    %c0_21 = arith.constant 0 : index
    %c0_22 = arith.constant 0 : index
    %37 = vector.load %arg5[%c0_21, %c0_22] : memref<256x1024xbf16, #tpu.memory_space<vmem>>, vector<256x1024xbf16>
    %cst_23 = arith.constant dense<0.000000e+00> : vector<1x1024xf32>
    %38 = tpu.matmul %36, %37, %cst_23 {dimension_numbers = #tpu.dot_dimension_numbers<[1], [0], [0], [1], [0, 0, 1, 1], [], []>} : vector<1x256xbf16>, vector<256x1024xbf16>, vector<1x1024xf32> -> vector<1x1024xf32>
    %39 = arith.addf %35, %38 : vector<1x1024xf32>
    %40 = vector.extract_strided_slice %39 {offsets = [0, 0], sizes = [1, 256], strides = [1, 1]} : vector<1x1024xf32> to vector<1x256xf32>
    %41 = arith.negf %40 : vector<1x256xf32>
    %42 = math.exp %41 : vector<1x256xf32>
    %cst_24 = arith.constant 1.000000e+00 : f32
    %43 = vector.broadcast %cst_24 : f32 to vector<1x256xf32>
    %44 = arith.addf %43, %42 : vector<1x256xf32>
    %45 = arith.divf %43, %44 : vector<1x256xf32>
    %46 = vector.extract_strided_slice %39 {offsets = [0, 256], sizes = [1, 256], strides = [1, 1]} : vector<1x1024xf32> to vector<1x256xf32>
    %47 = arith.negf %46 : vector<1x256xf32>
    %48 = math.exp %47 : vector<1x256xf32>
    %cst_25 = arith.constant 1.000000e+00 : f32
    %49 = vector.broadcast %cst_25 : f32 to vector<1x256xf32>
    %50 = arith.addf %49, %48 : vector<1x256xf32>
    %51 = arith.divf %49, %50 : vector<1x256xf32>
    %52 = vector.extract_strided_slice %39 {offsets = [0, 512], sizes = [1, 256], strides = [1, 1]} : vector<1x1024xf32> to vector<1x256xf32>
    %53 = math.tanh %52 : vector<1x256xf32>
    %54 = vector.extract_strided_slice %39 {offsets = [0, 768], sizes = [1, 256], strides = [1, 1]} : vector<1x1024xf32> to vector<1x256xf32>
    %55 = arith.negf %54 : vector<1x256xf32>
    %56 = math.exp %55 : vector<1x256xf32>
    %cst_26 = arith.constant 1.000000e+00 : f32
    %57 = vector.broadcast %cst_26 : f32 to vector<1x256xf32>
    %58 = arith.addf %57, %56 : vector<1x256xf32>
    %59 = arith.divf %57, %58 : vector<1x256xf32>
    %60 = arith.mulf %51, %33 : vector<1x256xf32>
    %61 = arith.mulf %45, %53 : vector<1x256xf32>
    %62 = arith.addf %60, %61 : vector<1x256xf32>
    %63 = math.tanh %62 : vector<1x256xf32>
    %64 = arith.mulf %59, %63 : vector<1x256xf32>
    %65 = arith.index_cast %c0_i32_19 : i32 to index
    %c0_27 = arith.constant 0 : index
    %66 = vector.load %arg12[%65, %c0_27] : memref<2x256xf32, #tpu.memory_space<vmem>>, vector<1x256xf32>
    tpu.vector_store %arg12[%65, %c0_27], %64 {strides = array<i32>} : memref<2x256xf32, #tpu.memory_space<vmem>>, vector<1x256xf32>,
    %c1_i32_28 = arith.constant 1 : i32
    %67 = arith.index_cast %c1_i32_28 : i32 to index
    %c0_29 = arith.constant 0 : index
    %68 = vector.load %arg11[%67, %c0_29] : memref<2x1024xf32, #tpu.memory_space<vmem>>, vector<1x1024xf32>
    %69 = arith.truncf %64 : vector<1x256xf32> to vector<1x256xbf16>
    %c0_30 = arith.constant 0 : index
    %c0_31 = arith.constant 0 : index
    %70 = vector.load %arg5[%c0_30, %c0_31] : memref<256x1024xbf16, #tpu.memory_space<vmem>>, vector<256x1024xbf16>
    %cst_32 = arith.constant dense<0.000000e+00> : vector<1x1024xf32>
    %71 = tpu.matmul %69, %70, %cst_32 {dimension_numbers = #tpu.dot_dimension_numbers<[1], [0], [0], [1], [0, 0, 1, 1], [], []>} : vector<1x256xbf16>, vector<256x1024xbf16>, vector<1x1024xf32> -> vector<1x1024xf32>
    %72 = arith.addf %68, %71 : vector<1x1024xf32>
    %73 = vector.extract_strided_slice %72 {offsets = [0, 0], sizes = [1, 256], strides = [1, 1]} : vector<1x1024xf32> to vector<1x256xf32>
    %74 = arith.negf %73 : vector<1x256xf32>
    %75 = math.exp %74 : vector<1x256xf32>
    %cst_33 = arith.constant 1.000000e+00 : f32
    %76 = vector.broadcast %cst_33 : f32 to vector<1x256xf32>
    %77 = arith.addf %76, %75 : vector<1x256xf32>
    %78 = arith.divf %76, %77 : vector<1x256xf32>
    %79 = vector.extract_strided_slice %72 {offsets = [0, 256], sizes = [1, 256], strides = [1, 1]} : vector<1x1024xf32> to vector<1x256xf32>
    %80 = arith.negf %79 : vector<1x256xf32>
    %81 = math.exp %80 : vector<1x256xf32>
    %cst_34 = arith.constant 1.000000e+00 : f32
    %82 = vector.broadcast %cst_34 : f32 to vector<1x256xf32>
    %83 = arith.addf %82, %81 : vector<1x256xf32>
    %84 = arith.divf %82, %83 : vector<1x256xf32>
    %85 = vector.extract_strided_slice %72 {offsets = [0, 512], sizes = [1, 256], strides = [1, 1]} : vector<1x1024xf32> to vector<1x256xf32>
    %86 = math.tanh %85 : vector<1x256xf32>
    %87 = vector.extract_strided_slice %72 {offsets = [0, 768], sizes = [1, 256], strides = [1, 1]} : vector<1x1024xf32> to vector<1x256xf32>
    %88 = arith.negf %87 : vector<1x256xf32>
    %89 = math.exp %88 : vector<1x256xf32>
    %cst_35 = arith.constant 1.000000e+00 : f32
    %90 = vector.broadcast %cst_35 : f32 to vector<1x256xf32>
    %91 = arith.addf %90, %89 : vector<1x256xf32>
    %92 = arith.divf %90, %91 : vector<1x256xf32>
    %93 = arith.mulf %84, %62 : vector<1x256xf32>
    %94 = arith.mulf %78, %86 : vector<1x256xf32>
    %95 = arith.addf %93, %94 : vector<1x256xf32>
    %96 = math.tanh %95 : vector<1x256xf32>
    %97 = arith.mulf %92, %96 : vector<1x256xf32>
    %98 = arith.index_cast %c1_i32_28 : i32 to index
    %c0_36 = arith.constant 0 : index
    %99 = vector.load %arg12[%98, %c0_36] : memref<2x256xf32, #tpu.memory_space<vmem>>, vector<1x256xf32>
    tpu.vector_store %arg12[%98, %c0_36], %97 {strides = array<i32>} : memref<2x256xf32, #tpu.memory_space<vmem>>, vector<1x256xf32>,
    %c2_i32_37 = arith.constant 2 : i32
    %c0_38 = arith.constant 0 : index
    %c0_39 = arith.constant 0 : index
    %100 = vector.load %arg12[%c0_38, %c0_39] : memref<2x256xf32, #tpu.memory_space<vmem>>, vector<2x256xf32>
    %c0_40 = arith.constant 0 : index
    %c0_41 = arith.constant 0 : index
    %101 = vector.load %arg7[%c0_40, %c0_41] : memref<256x128xf32, #tpu.memory_space<vmem>>, vector<256x128xf32>
    %cst_42 = arith.constant dense<0.000000e+00> : vector<2x128xf32>
    %102 = tpu.matmul %100, %101, %cst_42 {dimension_numbers = #tpu.dot_dimension_numbers<[1], [0], [0], [1], [0, 0, 1, 1], [], []>} : vector<2x256xf32>, vector<256x128xf32>, vector<2x128xf32> -> vector<2x128xf32>
    %c0_43 = arith.constant 0 : index
    %c0_44 = arith.constant 0 : index
    %103 = vector.load %arg8[%c0_43, %c0_44] : memref<1x128xf32, #tpu.memory_space<vmem>>, vector<1x128xf32>
    %104 = vector.broadcast %103 : vector<1x128xf32> to vector<2x128xf32>
    %105 = arith.addf %102, %104 : vector<2x128xf32>
    %106 = arith.negf %105 : vector<2x128xf32>
    %107 = math.exp %106 : vector<2x128xf32>
    %cst_45 = arith.constant 1.000000e+00 : f32
    %108 = vector.broadcast %cst_45 : f32 to vector<2x128xf32>
    %109 = arith.addf %108, %107 : vector<2x128xf32>
    %110 = arith.divf %108, %109 : vector<2x128xf32>
    %c0_46 = arith.constant 0 : index
    %c0_47 = arith.constant 0 : index
    %111 = vector.load %arg9[%c0_46, %c0_47] : memref<2x128xf32, #tpu.memory_space<vmem>>, vector<2x128xf32>
    tpu.vector_store %arg9[%c0_46, %c0_47], %110 {strides = array<i32>} : memref<2x128xf32, #tpu.memory_space<vmem>>, vector<2x128xf32>,
    return
  }
}

</mosaic_0001>

<llo_original>
// kernel: temporal_model_pallas.1
$region0: #{temporal_model_pallas.1}
  #allocation0 [shape = 'u32[]', space=smem, size = 0x4, offset = 0x4, fixed_abs, tag = 'smem constant byte address 0x4 - core index']
  #allocation1 [shape = 'u32[144,128]{1,0:T(1,128)}', space=vmem, size = 0x12000, scoped, tag = 'internal scratch']
  #allocation2 [shape = 'f32[2,512]{1,0:T(2,128)}', space=vmem, size = 0x1000, scoped, tag = 'scratch operand']
  #allocation3 [shape = 'f32[2,1024]{1,0:T(2,128)}', space=vmem, size = 0x2000, scoped, tag = 'scratch operand']
  #allocation4 [shape = 'f32[2,256]{1,0:T(2,128)}', space=vmem, size = 0x800, scoped, tag = 'scratch operand']
  %s0 = inlined_call_operand.vmem [shape: s32[2,8], index: 0, kind: input, shape index: {}]
  %s1 = inlined_call_operand.hbm [shape: s32[2,8], index: 1, kind: input, shape index: {}]
  %s2 = inlined_call_operand.hbm [shape: f32[900,256], index: 2, kind: input, shape index: {}]
  %s3 = inlined_call_operand.hbm [shape: f32[5,256], index: 3, kind: input, shape index: {}]
  %s4 = inlined_call_operand.hbm [shape: bf16[512,1024], index: 4, kind: input, shape index: {}]
  %s5 = inlined_call_operand.hbm [shape: bf16[256,1024], index: 5, kind: input, shape index: {}]
  %s6 = inlined_call_operand.vmem [shape: f32[1,1024], index: 6, kind: input, shape index: {}]
  %s7 = inlined_call_operand.hbm [shape: f32[256,128], index: 7, kind: input, shape index: {}]
  %s8 = inlined_call_operand.vmem [shape: f32[1,128], index: 8, kind: input, shape index: {}]
  %s9 = inlined_call_operand.hbm [shape: f32[2,128], index: 9, kind: output, shape index: {}]
  %s10 = sld [smem:[#allocation0]]
  $region74: #{temporal_model_pallas.1} parent=0
    _
  %s12 = ssub.s32 1, %s10
  %s13 = scalar_select 0, %s12, %s10
  $region1: #{temporal_model_pallas.1} parent=0
    #allocation5 [shape = 'u8[1024]{0}', space=smem, size = 0x400, scoped, tag = 'input window, operand 0, single buffered']
    #allocation6 [shape = 's32[1]{0}', space=sflag, size = 0x4, scoped, tag = 'scoped memory for temporal_model_pallas.1']
    #allocation7 [shape = 's32[1]{0}', space=sflag, size = 0x4, scoped, tag = 'scoped memory for temporal_model_pallas.1']
    #allocation8 [shape = 's32[1]{0}', space=sflag, size = 0x4, scoped, tag = 'scoped memory for temporal_model_pallas.1']
    #allocation9 [shape = 's32[1]{0}', space=sflag, size = 0x4, scoped, tag = 'scoped memory for temporal_model_pallas.1']
    #allocation10 [shape = 'u8[1024]{0}', space=smem, size = 0x400, scoped, tag = 'input window, operand 1, single buffered']
    #allocation11 [shape = 'u8[925696]{0}', space=vmem, size = 0xe2000, scoped, tag = 'input window, operand 2, single buffered']
    #allocation12 [shape = 'u8[8192]{0}', space=vmem, size = 0x2000, scoped, tag = 'input window, operand 3, single buffered']
    #allocation13 [shape = 's32[1]{0}', space=sflag, size = 0x4, scoped, tag = 'scoped memory for temporal_model_pallas.1']
    #allocation14 [shape = 'u8[1048576]{0}', space=vmem, size = 0x100000, scoped, tag = 'input window, operand 4, single buffered']
    #allocation15 [shape = 'u8[524288]{0}', space=vmem, size = 0x80000, scoped, tag = 'input window, operand 5, single buffered']
    #allocation16 [shape = 's32[1]{0}', space=sflag, size = 0x4, scoped, tag = 'scoped memory for temporal_model_pallas.1']
    #allocation17 [shape = 'u8[131072]{0}', space=vmem, size = 0x20000, scoped, tag = 'input window, operand 7, single buffered']
    #allocation18 [shape = 'u8[1024]{0}', space=vmem, size = 0x400, scoped, tag = 'output window, operand 0, single buffered']
    %14 = vsyncpa [#allocation9], 0
    %15 = vsyncpa [#allocation8], 0
    %16 = vsyncpa [#allocation6], 0
    %17 = vsyncpa [#allocation13], 0
    %18 = vsyncpa [#allocation16], 0
    %19 = vsyncpa [#allocation7], 0
    // Predicated region
    $region2: #{temporal_model_pallas.1} parent=1 // pred_check
      _
    $region3: #{temporal_model_pallas.1} parent=1 // pred_check_branch
      %21 = sbr.rel (0) target = $region5
    $region4: #{temporal_model_pallas.1} parent=1 // pred_region
      %s23 = ssub.s32 32, 32
      %24 = vsyncadd [#allocation9], %s23
      %s26 = sshll.u32 %s0, 4
      %s27 = int_to_ptr.vmem [resolvable:$true] %s26
      %29 = dma.vmem_to_smem %s27, 32, [#allocation5], [#allocation9]
    $region5: #{temporal_model_pallas.1} parent=1 // pred_fallthru
      _
    // Predicated region
    $region6: #{temporal_model_pallas.1} parent=1 // pred_check
      _
    $region7: #{temporal_model_pallas.1} parent=1 // pred_check_branch
      %31 = sbr.rel (0) target = $region9
    $region8: #{temporal_model_pallas.1} parent=1 // pred_region
      %s33 = ssub.s32 32, 32
      %34 = vsyncadd [#allocation8], %s33
      %37 = dma.hbm_to_smem %s1, 32, [#allocation10], [#allocation8]
    $region9: #{temporal_model_pallas.1} parent=1 // pred_fallthru
      _
    // Predicated region
    $region10: #{temporal_model_pallas.1} parent=1 // pred_check
      _
    $region11: #{temporal_model_pallas.1} parent=1 // pred_check_branch
      %39 = sbr.rel (0) target = $region13
    $region12: #{temporal_model_pallas.1} parent=1 // pred_region
      %s41 = ssub.s32 28928, 28928
      %42 = vsyncadd [#allocation6], %s41
      %s43 = sshll.u32 [#allocation11], 4
      %s44 = int_to_ptr.vmem [resolvable:$true] %s43
      %49 = dma.hbm_to_vmem [thread:$0]  %s2, 28928, %s44, [#allocation6], 256, 256, 16
    $region13: #{temporal_model_pallas.1} parent=1 // pred_fallthru
      _
    // Predicated region
    $region14: #{temporal_model_pallas.1} parent=1 // pred_check
      _
    $region15: #{temporal_model_pallas.1} parent=1 // pred_check_branch
      %51 = sbr.rel (0) target = $region17
    $region16: #{temporal_model_pallas.1} parent=1 // pred_region
      %s53 = ssub.s32 256, 256
      %54 = vsyncadd [#allocation13], %s53
      %s56 = sshll.u32 [#allocation12], 4
      %s57 = int_to_ptr.vmem [resolvable:$true] %s56
      %59 = dma.hbm_to_vmem [thread:$0]  %s3, 256, %s57, [#allocation13]
    $region17: #{temporal_model_pallas.1} parent=1 // pred_fallthru
      _
    // Predicated region
    $region18: #{temporal_model_pallas.1} parent=1 // pred_check
      _
    $region19: #{temporal_model_pallas.1} parent=1 // pred_check_branch
      %61 = sbr.rel (0) target = $region21
    $region20: #{temporal_model_pallas.1} parent=1 // pred_region
      %s63 = ssub.s32 32768, 32768
      %64 = vsyncadd [#allocation13], %s63
      %s65 = sshll.u32 [#allocation14], 4
      %s66 = int_to_ptr.vmem [resolvable:$true] %s65
      %71 = dma.hbm_to_vmem [thread:$0]  %s4, 32768, %s66, [#allocation13], 512, 512, 32
    $region21: #{temporal_model_pallas.1} parent=1 // pred_fallthru
      _
    // Predicated region
    $region22: #{temporal_model_pallas.1} parent=1 // pred_check
      _
    $region23: #{temporal_model_pallas.1} parent=1 // pred_check_branch
      %73 = sbr.rel (0) target = $region25
    $region24: #{temporal_model_pallas.1} parent=1 // pred_region
      %s75 = ssub.s32 16384, 16384
      %76 = vsyncadd [#allocation16], %s75
      %s77 = sshll.u32 [#allocation15], 4
      %s78 = int_to_ptr.vmem [resolvable:$true] %s77
      %83 = dma.hbm_to_vmem [thread:$0]  %s5, 16384, %s78, [#allocation16], 512, 512, 32
    $region25: #{temporal_model_pallas.1} parent=1 // pred_fallthru
      _
    // Predicated region
    $region26: #{temporal_model_pallas.1} parent=1 // pred_check
      _
    $region27: #{temporal_model_pallas.1} parent=1 // pred_check_branch
      %85 = sbr.rel (0) target = $region29
    $region28: #{temporal_model_pallas.1} parent=1 // pred_region
      _
    $region29: #{temporal_model_pallas.1} parent=1 // pred_fallthru
      _
    // Predicated region
    $region30: #{temporal_model_pallas.1} parent=1 // pred_check
      _
    $region31: #{temporal_model_pallas.1} parent=1 // pred_check_branch
      %87 = sbr.rel (0) target = $region33
    $region32: #{temporal_model_pallas.1} parent=1 // pred_region
      %s89 = ssub.s32 4096, 4096
      %90 = vsyncadd [#allocation16], %s89
      %s91 = sshll.u32 [#allocation17], 4
      %s92 = int_to_ptr.vmem [resolvable:$true] %s91
      %97 = dma.hbm_to_vmem [thread:$0]  %s7, 4096, %s92, [#allocation16], 128, 128, 8
    $region33: #{temporal_model_pallas.1} parent=1 // pred_fallthru
      _
    // Predicated region
    $region34: #{temporal_model_pallas.1} parent=1 // pred_check
      _
    $region35: #{temporal_model_pallas.1} parent=1 // pred_check_branch
      %99 = sbr.rel (0) target = $region37
    $region36: #{temporal_model_pallas.1} parent=1 // pred_region
      _
    $region37: #{temporal_model_pallas.1} parent=1 // pred_fallthru
      _
    // Predicated region
    $region38: #{temporal_model_pallas.1} parent=1 // pred_check
      _
    $region39: #{temporal_model_pallas.1} parent=1 // pred_check_branch
      %101 = sbr.rel (0) target = $region41
    $region40: #{temporal_model_pallas.1} parent=1 // pred_region
      %102 = dma.done [#allocation9], 32
    $region41: #{temporal_model_pallas.1} parent=1 // pred_fallthru
      _
    // Predicated region
    $region42: #{temporal_model_pallas.1} parent=1 // pred_check
      _
    $region43: #{temporal_model_pallas.1} parent=1 // pred_check_branch
      %104 = sbr.rel (0) target = $region45
    $region44: #{temporal_model_pallas.1} parent=1 // pred_region
      %105 = dma.done [#allocation8], 32
    $region45: #{temporal_model_pallas.1} parent=1 // pred_fallthru
      _
    // Predicated region
    $region46: #{temporal_model_pallas.1} parent=1 // pred_check
      _
    $region47: #{temporal_model_pallas.1} parent=1 // pred_check_branch
      %107 = sbr.rel (0) target = $region49
    $region48: #{temporal_model_pallas.1} parent=1 // pred_region
      %108 = dma.done [#allocation6], 28928
    $region49: #{temporal_model_pallas.1} parent=1 // pred_fallthru
      _
    // Predicated region
    $region50: #{temporal_model_pallas.1} parent=1 // pred_check
      _
    $region51: #{temporal_model_pallas.1} parent=1 // pred_check_branch
      %110 = sbr.rel (0) target = $region53
    $region52: #{temporal_model_pallas.1} parent=1 // pred_region
      %111 = dma.done [#allocation13], 256
    $region53: #{temporal_model_pallas.1} parent=1 // pred_fallthru
      _
    // Predicated region
    $region54: #{temporal_model_pallas.1} parent=1 // pred_check
      _
    $region55: #{temporal_model_pallas.1} parent=1 // pred_check_branch
      %113 = sbr.rel (0) target = $region57
    $region56: #{temporal_model_pallas.1} parent=1 // pred_region
      %114 = dma.done [#allocation13], 32768
    $region57: #{temporal_model_pallas.1} parent=1 // pred_fallthru
      _
    // Predicated region
    $region58: #{temporal_model_pallas.1} parent=1 // pred_check
      _
    $region59: #{temporal_model_pallas.1} parent=1 // pred_check_branch
      %116 = sbr.rel (0) target = $region61
    $region60: #{temporal_model_pallas.1} parent=1 // pred_region
      %117 = dma.done [#allocation16], 16384
    $region61: #{temporal_model_pallas.1} parent=1 // pred_fallthru
      _
    // Predicated region
    $region62: #{temporal_model_pallas.1} parent=1 // pred_check
      _
    $region63: #{temporal_model_pallas.1} parent=1 // pred_check_branch
      %119 = sbr.rel (0) target = $region65
    $region64: #{temporal_model_pallas.1} parent=1 // pred_region
      %120 = dma.done [#allocation16], 4096
    $region65: #{temporal_model_pallas.1} parent=1 // pred_fallthru
      _
    %121 = sfence
    %s123 = sld [smem:[#allocation5 + $0x7]]
    %s124 = sld [smem:[#allocation10 + $0x7]]
    %s125 = sshra.s32 %s123, 3
    %s126 = sand.u32 %s123, 7
    %s127 = sshra.s32 %s123, 3
    %s128 = sand.u32 %s123, 7
    %s129 = smul.u32 %s125, 2
    %s130 = smul.u32 %s129, 8
    %s131 = sadd.s32 %s130, %s128
    %s132 = scalar_lea.vmem [#allocation11], %s131
    %v133 = vld [vmem:[%s132] ss:$8 sm:$0x3]
    %v134 = vlaneseq
    %vm135 = vcmp.ge.s32.totalorder %v134, 0
    %vm136 = vcmp.lt.s32.totalorder %v134, 256
    %vm137 = vmand %vm135, %vm136
    %138 = vst.msk [vmem:[#allocation2] ss:$2 sm:$0x3] %vm137, %v133
    %s139 = sshra.s32 %s124, 3
    %s140 = sand.u32 %s124, 7
    %s141 = sshra.s32 %s124, 3
    %s142 = sand.u32 %s124, 7
    %s143 = smul.u32 %s139, 2
    %s144 = smul.u32 %s143, 8
    %s145 = sadd.s32 %s144, %s142
    %s146 = scalar_lea.vmem [#allocation12], %s145
    %v147 = vld [vmem:[%s146] ss:$8 sm:$0x3]
    %s148 = scalar_lea.vmem [#allocation2], 4
    %149 = vst.msk [vmem:[%s148] ss:$2 sm:$0x3] %vm137, %v147
    %s150 = sld [smem:[#allocation5 + $0x87]]
    %s151 = sld [smem:[#allocation10 + $0x87]]
    %s152 = sshra.s32 %s150, 3
    %s153 = sand.u32 %s150, 7
    %s154 = sshra.s32 %s150, 3
    %s155 = sand.u32 %s150, 7
    %s156 = smul.u32 %s152, 2
    %s157 = smul.u32 %s156, 8
    %s158 = sadd.s32 %s157, %s155
    %s159 = scalar_lea.vmem [#allocation11], %s158
    %v160 = vld [vmem:[%s159] ss:$8 sm:$0x3]
    %s161 = scalar_lea.vmem [#allocation2], 1
    %162 = vst.msk [vmem:[%s161] ss:$2 sm:$0x3] %vm137, %v160
    %s163 = sshra.s32 %s151, 3
    %s164 = sand.u32 %s151, 7
    %s165 = sshra.s32 %s151, 3
    %s166 = sand.u32 %s151, 7
    %s167 = smul.u32 %s163, 2
    %s168 = smul.u32 %s167, 8
    %s169 = sadd.s32 %s168, %s166
    %s170 = scalar_lea.vmem [#allocation12], %s169
    %v171 = vld [vmem:[%s170] ss:$8 sm:$0x3]
    %s172 = scalar_lea.vmem [#allocation2], 5
    %173 = vst.msk [vmem:[%s172] ss:$2 sm:$0x3] %vm137, %v171
    %v174 = vld [vmem:[#allocation2] sm:$0xff]
    %v176 = vcombine.high %v174, %v174
    %v178 = vunpack.c.l.s4 1983009808
    %v179 = vunpack.c.0.s8 %v178
    %v180 = vlaneseq
    %v181 = vshrl.u32 %v180, 7
    %v182 = vsub.s32 %v179, %v181
    %v183 = vrot.slane %v174, %v182
    %v185 = vunpack.c.l.s4 1983009808
    %v186 = vunpack.c.0.s8 %v185
    %v187 = vlaneseq
    %v188 = vshrl.u32 %v187, 7
    %v189 = vsub.s32 %v186, %v188
    %v190 = vrot.slane %v176, %v189
    %v191 = vcombine.high %v183, %v183
    %v192 = vcombine.high %v190, %v190
    %v197 = vpack.c.bf16 %v183, %v183
    %v198 = vpack.c.bf16 %v191, %v191
    %v199 = vpack.c.bf16 %v190, %v190
    %v200 = vpack.c.bf16 %v192, %v192
    %v201 = vld [vmem:[#allocation14] sm:$0xff]
    %v202 = vld [vmem:[#allocation14 + $0x8] sm:$0xff]
    %v203 = vld [vmem:[#allocation14 + $0x10] sm:$0xff]
    %v204 = vld [vmem:[#allocation14 + $0x18] sm:$0xff]
    %v205 = vld [vmem:[#allocation14 + $0x20] sm:$0xff]
    %v206 = vld [vmem:[#allocation14 + $0x28] sm:$0xff]
    %v207 = vld [vmem:[#allocation14 + $0x30] sm:$0xff]
    %v208 = vld [vmem:[#allocation14 + $0x38] sm:$0xff]
    %v209 = vld [vmem:[#allocation14 + $0x40] sm:$0xff]
    %v210 = vld [vmem:[#allocation14 + $0x48] sm:$0xff]
    %v211 = vld [vmem:[#allocation14 + $0x50] sm:$0xff]
    %v212 = vld [vmem:[#allocation14 + $0x58] sm:$0xff]
    %v213 = vld [vmem:[#allocation14 + $0x60] sm:$0xff]
    %v214 = vld [vmem:[#allocation14 + $0x68] sm:$0xff]
    %v215 = vld [vmem:[#allocation14 + $0x70] sm:$0xff]
    %v216 = vld [vmem:[#allocation14 + $0x78] sm:$0xff]
    %v217 = vld [vmem:[#allocation14 + $0x80] sm:$0xff]
    %v218 = vld [vmem:[#allocation14 + $0x88] sm:$0xff]
    %v219 = vld [vmem:[#allocation14 + $0x90] sm:$0xff]
    %v220 = vld [vmem:[#allocation14 + $0x98] sm:$0xff]
    %v221 = vld [vmem:[#allocation14 + $0xa0] sm:$0xff]
    %v222 = vld [vmem:[#allocation14 + $0xa8] sm:$0xff]
    %v223 = vld [vmem:[#allocation14 + $0xb0] sm:$0xff]
    %v224 = vld [vmem:[#allocation14 + $0xb8] sm:$0xff]
    %v225 = vld [vmem:[#allocation14 + $0xc0] sm:$0xff]
    %v226 = vld [vmem:[#allocation14 + $0xc8] sm:$0xff]
    %v227 = vld [vmem:[#allocation14 + $0xd0] sm:$0xff]
    %v228 = vld [vmem:[#allocation14 + $0xd8] sm:$0xff]
    %v229 = vld [vmem:[#allocation14 + $0xe0] sm:$0xff]
    %v230 = vld [vmem:[#allocation14 + $0xe8] sm:$0xff]
    %v231 = vld [vmem:[#allocation14 + $0xf0] sm:$0xff]
    %v232 = vld [vmem:[#allocation14 + $0xf8] sm:$0xff]
    %v233 = vld [vmem:[#allocation14 + $0x100] sm:$0xff]
    %v234 = vld [vmem:[#allocation14 + $0x108] sm:$0xff]
    %v235 = vld [vmem:[#allocation14 + $0x110] sm:$0xff]
    %v236 = vld [vmem:[#allocation14 + $0x118] sm:$0xff]
    %v237 = vld [vmem:[#allocation14 + $0x120] sm:$0xff]
    %v238 = vld [vmem:[#allocation14 + $0x128] sm:$0xff]
    %v239 = vld [vmem:[#allocation14 + $0x130] sm:$0xff]
    %v240 = vld [vmem:[#allocation14 + $0x138] sm:$0xff]
    %v241 = vld [vmem:[#allocation14 + $0x140] sm:$0xff]
    %v242 = vld [vmem:[#allocation14 + $0x148] sm:$0xff]
    %v243 = vld [vmem:[#allocation14 + $0x150] sm:$0xff]
    %v244 = vld [vmem:[#allocation14 + $0x158] sm:$0xff]
    %v245 = vld [vmem:[#allocation14 + $0x160] sm:$0xff]
    %v246 = vld [vmem:[#allocation14 + $0x168] sm:$0xff]
    %v247 = vld [vmem:[#allocation14 + $0x170] sm:$0xff]
    %v248 = vld [vmem:[#allocation14 + $0x178] sm:$0xff]
    %v249 = vld [vmem:[#allocation14 + $0x180] sm:$0xff]
    %v250 = vld [vmem:[#allocation14 + $0x188] sm:$0xff]
    %v251 = vld [vmem:[#allocation14 + $0x190] sm:$0xff]
    %v252 = vld [vmem:[#allocation14 + $0x198] sm:$0xff]
    %v253 = vld [vmem:[#allocation14 + $0x1a0] sm:$0xff]
    %v254 = vld [vmem:[#allocation14 + $0x1a8] sm:$0xff]
    %v255 = vld [vmem:[#allocation14 + $0x1b0] sm:$0xff]
    %v256 = vld [vmem:[#allocation14 + $0x1b8] sm:$0xff]
    %v257 = vld [vmem:[#allocation14 + $0x1c0] sm:$0xff]
    %v258 = vld [vmem:[#allocation14 + $0x1c8] sm:$0xff]
    %v259 = vld [vmem:[#allocation14 + $0x1d0] sm:$0xff]
    %v260 = vld [vmem:[#allocation14 + $0x1d8] sm:$0xff]
    %v261 = vld [vmem:[#allocation14 + $0x1e0] sm:$0xff]
    %v262 = vld [vmem:[#allocation14 + $0x1e8] sm:$0xff]
    %v263 = vld [vmem:[#allocation14 + $0x1f0] sm:$0xff]
    %v264 = vld [vmem:[#allocation14 + $0x1f8] sm:$0xff]
    %v265 = vld [vmem:[#allocation14 + $0x200] sm:$0xff]
    %v266 = vld [vmem:[#allocation14 + $0x208] sm:$0xff]
    %v267 = vld [vmem:[#allocation14 + $0x210] sm:$0xff]
    %v268 = vld [vmem:[#allocation14 + $0x218] sm:$0xff]
    %v269 = vld [vmem:[#allocation14 + $0x220] sm:$0xff]
    %v270 = vld [vmem:[#allocation14 + $0x228] sm:$0xff]
    %v271 = vld [vmem:[#allocation14 + $0x230] sm:$0xff]
    %v272 = vld [vmem:[#allocation14 + $0x238] sm:$0xff]
    %v273 = vld [vmem:[#allocation14 + $0x240] sm:$0xff]
    %v274 = vld [vmem:[#allocation14 + $0x248] sm:$0xff]
    %v275 = vld [vmem:[#allocation14 + $0x250] sm:$0xff]
    %v276 = vld [vmem:[#allocation14 + $0x258] sm:$0xff]
    %v277 = vld [vmem:[#allocation14 + $0x260] sm:$0xff]
    %v278 = vld [vmem:[#allocation14 + $0x268] sm:$0xff]
    %v279 = vld [vmem:[#allocation14 + $0x270] sm:$0xff]
    %v280 = vld [vmem:[#allocation14 + $0x278] sm:$0xff]
    %v281 = vld [vmem:[#allocation14 + $0x280] sm:$0xff]
    %v282 = vld [vmem:[#allocation14 + $0x288] sm:$0xff]
    %v283 = vld [vmem:[#allocation14 + $0x290] sm:$0xff]
    %v284 = vld [vmem:[#allocation14 + $0x298] sm:$0xff]
    %v285 = vld [vmem:[#allocation14 + $0x2a0] sm:$0xff]
    %v286 = vld [vmem:[#allocation14 + $0x2a8] sm:$0xff]
    %v287 = vld [vmem:[#allocation14 + $0x2b0] sm:$0xff]
    %v288 = vld [vmem:[#allocation14 + $0x2b8] sm:$0xff]
    %v289 = vld [vmem:[#allocation14 + $0x2c0] sm:$0xff]
    %v290 = vld [vmem:[#allocation14 + $0x2c8] sm:$0xff]
    %v291 = vld [vmem:[#allocation14 + $0x2d0] sm:$0xff]
    %v292 = vld [vmem:[#allocation14 + $0x2d8] sm:$0xff]
    %v293 = vld [vmem:[#allocation14 + $0x2e0] sm:$0xff]
    %v294 = vld [vmem:[#allocation14 + $0x2e8] sm:$0xff]
    %v295 = vld [vmem:[#allocation14 + $0x2f0] sm:$0xff]
    %v296 = vld [vmem:[#allocation14 + $0x2f8] sm:$0xff]
    %v297 = vld [vmem:[#allocation14 + $0x300] sm:$0xff]
    %v298 = vld [vmem:[#allocation14 + $0x308] sm:$0xff]
    %v299 = vld [vmem:[#allocation14 + $0x310] sm:$0xff]
    %v300 = vld [vmem:[#allocation14 + $0x318] sm:$0xff]
    %v301 = vld [vmem:[#allocation14 + $0x320] sm:$0xff]
    %v302 = vld [vmem:[#allocation14 + $0x328] sm:$0xff]
    %v303 = vld [vmem:[#allocation14 + $0x330] sm:$0xff]
    %v304 = vld [vmem:[#allocation14 + $0x338] sm:$0xff]
    %v305 = vld [vmem:[#allocation14 + $0x340] sm:$0xff]
    %v306 = vld [vmem:[#allocation14 + $0x348] sm:$0xff]
    %v307 = vld [vmem:[#allocation14 + $0x350] sm:$0xff]
    %v308 = vld [vmem:[#allocation14 + $0x358] sm:$0xff]
    %v309 = vld [vmem:[#allocation14 + $0x360] sm:$0xff]
    %v310 = vld [vmem:[#allocation14 + $0x368] sm:$0xff]
    %v311 = vld [vmem:[#allocation14 + $0x370] sm:$0xff]
    %v312 = vld [vmem:[#allocation14 + $0x378] sm:$0xff]
    %v313 = vld [vmem:[#allocation14 + $0x380] sm:$0xff]
    %v314 = vld [vmem:[#allocation14 + $0x388] sm:$0xff]
    %v315 = vld [vmem:[#allocation14 + $0x390] sm:$0xff]
    %v316 = vld [vmem:[#allocation14 + $0x398] sm:$0xff]
    %v317 = vld [vmem:[#allocation14 + $0x3a0] sm:$0xff]
    %v318 = vld [vmem:[#allocation14 + $0x3a8] sm:$0xff]
    %v319 = vld [vmem:[#allocation14 + $0x3b0] sm:$0xff]
    %v320 = vld [vmem:[#allocation14 + $0x3b8] sm:$0xff]
    %v321 = vld [vmem:[#allocation14 + $0x3c0] sm:$0xff]
    %v322 = vld [vmem:[#allocation14 + $0x3c8] sm:$0xff]
    %v323 = vld [vmem:[#allocation14 + $0x3d0] sm:$0xff]
    %v324 = vld [vmem:[#allocation14 + $0x3d8] sm:$0xff]
    %v325 = vld [vmem:[#allocation14 + $0x3e0] sm:$0xff]
    %v326 = vld [vmem:[#allocation14 + $0x3e8] sm:$0xff]
    %v327 = vld [vmem:[#allocation14 + $0x3f0] sm:$0xff]
    %v328 = vld [vmem:[#allocation14 + $0x3f8] sm:$0xff]
    %v329 = vld [vmem:[#allocation14 + $0x400] sm:$0xff]
    %v330 = vld [vmem:[#allocation14 + $0x408] sm:$0xff]
    %v331 = vld [vmem:[#allocation14 + $0x410] sm:$0xff]
    %v332 = vld [vmem:[#allocation14 + $0x418] sm:$0xff]
    %v333 = vld [vmem:[#allocation14 + $0x420] sm:$0xff]
    %v334 = vld [vmem:[#allocation14 + $0x428] sm:$0xff]
    %v335 = vld [vmem:[#allocation14 + $0x430] sm:$0xff]
    %v336 = vld [vmem:[#allocation14 + $0x438] sm:$0xff]
    %v337 = vld [vmem:[#allocation14 + $0x440] sm:$0xff]
    %v338 = vld [vmem:[#allocation14 + $0x448] sm:$0xff]
    %v339 = vld [vmem:[#allocation14 + $0x450] sm:$0xff]
    %v340 = vld [vmem:[#allocation14 + $0x458] sm:$0xff]
    %v341 = vld [vmem:[#allocation14 + $0x460] sm:$0xff]
    %v342 = vld [vmem:[#allocation14 + $0x468] sm:$0xff]
    %v343 = vld [vmem:[#allocation14 + $0x470] sm:$0xff]
    %v344 = vld [vmem:[#allocation14 + $0x478] sm:$0xff]
    %v345 = vld [vmem:[#allocation14 + $0x480] sm:$0xff]
    %v346 = vld [vmem:[#allocation14 + $0x488] sm:$0xff]
    %v347 = vld [vmem:[#allocation14 + $0x490] sm:$0xff]
    %v348 = vld [vmem:[#allocation14 + $0x498] sm:$0xff]
    %v349 = vld [vmem:[#allocation14 + $0x4a0] sm:$0xff]
    %v350 = vld [vmem:[#allocation14 + $0x4a8] sm:$0xff]
    %v351 = vld [vmem:[#allocation14 + $0x4b0] sm:$0xff]
    %v352 = vld [vmem:[#allocation14 + $0x4b8] sm:$0xff]
    %v353 = vld [vmem:[#allocation14 + $0x4c0] sm:$0xff]
    %v354 = vld [vmem:[#allocation14 + $0x4c8] sm:$0xff]
    %v355 = vld [vmem:[#allocation14 + $0x4d0] sm:$0xff]
    %v356 = vld [vmem:[#allocation14 + $0x4d8] sm:$0xff]
    %v357 = vld [vmem:[#allocation14 + $0x4e0] sm:$0xff]
    %v358 = vld [vmem:[#allocation14 + $0x4e8] sm:$0xff]
    %v359 = vld [vmem:[#allocation14 + $0x4f0] sm:$0xff]
    %v360 = vld [vmem:[#allocation14 + $0x4f8] sm:$0xff]
    %v361 = vld [vmem:[#allocation14 + $0x500] sm:$0xff]
    %v362 = vld [vmem:[#allocation14 + $0x508] sm:$0xff]
    %v363 = vld [vmem:[#allocation14 + $0x510] sm:$0xff]
    %v364 = vld [vmem:[#allocation14 + $0x518] sm:$0xff]
    %v365 = vld [vmem:[#allocation14 + $0x520] sm:$0xff]
    %v366 = vld [vmem:[#allocation14 + $0x528] sm:$0xff]
    %v367 = vld [vmem:[#allocation14 + $0x530] sm:$0xff]
    %v368 = vld [vmem:[#allocation14 + $0x538] sm:$0xff]
    %v369 = vld [vmem:[#allocation14 + $0x540] sm:$0xff]
    %v370 = vld [vmem:[#allocation14 + $0x548] sm:$0xff]
    %v371 = vld [vmem:[#allocation14 + $0x550] sm:$0xff]
    %v372 = vld [vmem:[#allocation14 + $0x558] sm:$0xff]
    %v373 = vld [vmem:[#allocation14 + $0x560] sm:$0xff]
    %v374 = vld [vmem:[#allocation14 + $0x568] sm:$0xff]
    %v375 = vld [vmem:[#allocation14 + $0x570] sm:$0xff]
    %v376 = vld [vmem:[#allocation14 + $0x578] sm:$0xff]
    %v377 = vld [vmem:[#allocation14 + $0x580] sm:$0xff]
    %v378 = vld [vmem:[#allocation14 + $0x588] sm:$0xff]
    %v379 = vld [vmem:[#allocation14 + $0x590] sm:$0xff]
    %v380 = vld [vmem:[#allocation14 + $0x598] sm:$0xff]
    %v381 = vld [vmem:[#allocation14 + $0x5a0] sm:$0xff]
    %v382 = vld [vmem:[#allocation14 + $0x5a8] sm:$0xff]
    %v383 = vld [vmem:[#allocation14 + $0x5b0] sm:$0xff]
    %v384 = vld [vmem:[#allocation14 + $0x5b8] sm:$0xff]
    %v385 = vld [vmem:[#allocation14 + $0x5c0] sm:$0xff]
    %v386 = vld [vmem:[#allocation14 + $0x5c8] sm:$0xff]
    %v387 = vld [vmem:[#allocation14 + $0x5d0] sm:$0xff]
    %v388 = vld [vmem:[#allocation14 + $0x5d8] sm:$0xff]
    %v389 = vld [vmem:[#allocation14 + $0x5e0] sm:$0xff]
    %v390 = vld [vmem:[#allocation14 + $0x5e8] sm:$0xff]
    %v391 = vld [vmem:[#allocation14 + $0x5f0] sm:$0xff]
    %v392 = vld [vmem:[#allocation14 + $0x5f8] sm:$0xff]
    %v393 = vld [vmem:[#allocation14 + $0x600] sm:$0xff]
    %v394 = vld [vmem:[#allocation14 + $0x608] sm:$0xff]
    %v395 = vld [vmem:[#allocation14 + $0x610] sm:$0xff]
    %v396 = vld [vmem:[#allocation14 + $0x618] sm:$0xff]
    %v397 = vld [vmem:[#allocation14 + $0x620] sm:$0xff]
    %v398 = vld [vmem:[#allocation14 + $0x628] sm:$0xff]
    %v399 = vld [vmem:[#allocation14 + $0x630] sm:$0xff]
    %v400 = vld [vmem:[#allocation14 + $0x638] sm:$0xff]
    %v401 = vld [vmem:[#allocation14 + $0x640] sm:$0xff]
    %v402 = vld [vmem:[#allocation14 + $0x648] sm:$0xff]
    %v403 = vld [vmem:[#allocation14 + $0x650] sm:$0xff]
    %v404 = vld [vmem:[#allocation14 + $0x658] sm:$0xff]
    %v405 = vld [vmem:[#allocation14 + $0x660] sm:$0xff]
    %v406 = vld [vmem:[#allocation14 + $0x668] sm:$0xff]
    %v407 = vld [vmem:[#allocation14 + $0x670] sm:$0xff]
    %v408 = vld [vmem:[#allocation14 + $0x678] sm:$0xff]
    %v409 = vld [vmem:[#allocation14 + $0x680] sm:$0xff]
    %v410 = vld [vmem:[#allocation14 + $0x688] sm:$0xff]
    %v411 = vld [vmem:[#allocation14 + $0x690] sm:$0xff]
    %v412 = vld [vmem:[#allocation14 + $0x698] sm:$0xff]
    %v413 = vld [vmem:[#allocation14 + $0x6a0] sm:$0xff]
    %v414 = vld [vmem:[#allocation14 + $0x6a8] sm:$0xff]
    %v415 = vld [vmem:[#allocation14 + $0x6b0] sm:$0xff]
    %v416 = vld [vmem:[#allocation14 + $0x6b8] sm:$0xff]
    %v417 = vld [vmem:[#allocation14 + $0x6c0] sm:$0xff]
    %v418 = vld [vmem:[#allocation14 + $0x6c8] sm:$0xff]
    %v419 = vld [vmem:[#allocation14 + $0x6d0] sm:$0xff]
    %v420 = vld [vmem:[#allocation14 + $0x6d8] sm:$0xff]
    %v421 = vld [vmem:[#allocation14 + $0x6e0] sm:$0xff]
    %v422 = vld [vmem:[#allocation14 + $0x6e8] sm:$0xff]
    %v423 = vld [vmem:[#allocation14 + $0x6f0] sm:$0xff]
    %v424 = vld [vmem:[#allocation14 + $0x6f8] sm:$0xff]
    %v425 = vld [vmem:[#allocation14 + $0x700] sm:$0xff]
    %v426 = vld [vmem:[#allocation14 + $0x708] sm:$0xff]
    %v427 = vld [vmem:[#allocation14 + $0x710] sm:$0xff]
    %v428 = vld [vmem:[#allocation14 + $0x718] sm:$0xff]
    %v429 = vld [vmem:[#allocation14 + $0x720] sm:$0xff]
    %v430 = vld [vmem:[#allocation14 + $0x728] sm:$0xff]
    %v431 = vld [vmem:[#allocation14 + $0x730] sm:$0xff]
    %v432 = vld [vmem:[#allocation14 + $0x738] sm:$0xff]
    %v433 = vld [vmem:[#allocation14 + $0x740] sm:$0xff]
    %v434 = vld [vmem:[#allocation14 + $0x748] sm:$0xff]
    %v435 = vld [vmem:[#allocation14 + $0x750] sm:$0xff]
    %v436 = vld [vmem:[#allocation14 + $0x758] sm:$0xff]
    %v437 = vld [vmem:[#allocation14 + $0x760] sm:$0xff]
    %v438 = vld [vmem:[#allocation14 + $0x768] sm:$0xff]
    %v439 = vld [vmem:[#allocation14 + $0x770] sm:$0xff]
    %v440 = vld [vmem:[#allocation14 + $0x778] sm:$0xff]
    %v441 = vld [vmem:[#allocation14 + $0x780] sm:$0xff]
    %v442 = vld [vmem:[#allocation14 + $0x788] sm:$0xff]
    %v443 = vld [vmem:[#allocation14 + $0x790] sm:$0xff]
    %v444 = vld [vmem:[#allocation14 + $0x798] sm:$0xff]
    %v445 = vld [vmem:[#allocation14 + $0x7a0] sm:$0xff]
    %v446 = vld [vmem:[#allocation14 + $0x7a8] sm:$0xff]
    %v447 = vld [vmem:[#allocation14 + $0x7b0] sm:$0xff]
    %v448 = vld [vmem:[#allocation14 + $0x7b8] sm:$0xff]
    %v449 = vld [vmem:[#allocation14 + $0x7c0] sm:$0xff]
    %v450 = vld [vmem:[#allocation14 + $0x7c8] sm:$0xff]
    %v451 = vld [vmem:[#allocation14 + $0x7d0] sm:$0xff]
    %v452 = vld [vmem:[#allocation14 + $0x7d8] sm:$0xff]
    %v453 = vld [vmem:[#allocation14 + $0x7e0] sm:$0xff]
    %v454 = vld [vmem:[#allocation14 + $0x7e8] sm:$0xff]
    %v455 = vld [vmem:[#allocation14 + $0x7f0] sm:$0xff]
    %v456 = vld [vmem:[#allocation14 + $0x7f8] sm:$0xff]
    %v457 = vld [vmem:[%s6] sm:$0xff]
    %v459 = vlaneseq
    %v460 = vshrl.u32 %v459, 7
    %v461 = vsub.s32 0, %v460
    %v462 = vrot.slane %v457, %v461
    %v463 = vlaneseq
    %v464 = vshrl.u32 %v463, 7
    %v465 = vsub.s32 1, %v464
    %v466 = vrot.slane %v457, %v465
    %v467 = vlaneseq
    %v468 = vshrl.u32 %v467, 7
    %v469 = vsub.s32 2, %v468
    %v470 = vrot.slane %v457, %v469
    %v471 = vlaneseq
    %v472 = vshrl.u32 %v471, 7
    %v473 = vsub.s32 3, %v472
    %v474 = vrot.slane %v457, %v473
    %v475 = vlaneseq
    %v476 = vshrl.u32 %v475, 7
    %v477 = vsub.s32 4, %v476
    %v478 = vrot.slane %v457, %v477
    %v479 = vlaneseq
    %v480 = vshrl.u32 %v479, 7
    %v481 = vsub.s32 5, %v480
    %v482 = vrot.slane %v457, %v481
    %v483 = vlaneseq
    %v484 = vshrl.u32 %v483, 7
    %v485 = vsub.s32 6, %v484
    %v486 = vrot.slane %v457, %v485
    %v487 = vlaneseq
    %v488 = vshrl.u32 %v487, 7
    %v489 = vsub.s32 7, %v488
    %v490 = vrot.slane %v457, %v489
    %v755 = vunpack.c.l.b16 %v201
    %v756 = vunpack.c.h.b16 %v201
    %v757 = vunpack.c.l.b16 %v202
    %v758 = vunpack.c.h.b16 %v202
    %v759 = vunpack.c.l.b16 %v203
    %v760 = vunpack.c.h.b16 %v203
    %v761 = vunpack.c.l.b16 %v204
    %v762 = vunpack.c.h.b16 %v204
    %v763 = vunpack.c.l.b16 %v205
    %v764 = vunpack.c.h.b16 %v205
    %v765 = vunpack.c.l.b16 %v206
    %v766 = vunpack.c.h.b16 %v206
    %v767 = vunpack.c.l.b16 %v207
    %v768 = vunpack.c.h.b16 %v207
    %v769 = vunpack.c.l.b16 %v208
    %v770 = vunpack.c.h.b16 %v208
    %v771 = vunpack.c.l.b16 %v209
    %v772 = vunpack.c.h.b16 %v209
    %v773 = vunpack.c.l.b16 %v210
    %v774 = vunpack.c.h.b16 %v210
    %v775 = vunpack.c.l.b16 %v211
    %v776 = vunpack.c.h.b16 %v211
    %v777 = vunpack.c.l.b16 %v212
    %v778 = vunpack.c.h.b16 %v212
    %v779 = vunpack.c.l.b16 %v213
    %v780 = vunpack.c.h.b16 %v213
    %v781 = vunpack.c.l.b16 %v214
    %v782 = vunpack.c.h.b16 %v214
    %v783 = vunpack.c.l.b16 %v215
    %v784 = vunpack.c.h.b16 %v215
    %v785 = vunpack.c.l.b16 %v216
    %v786 = vunpack.c.h.b16 %v216
    %v787 = vunpack.c.l.b16 %v217
    %v788 = vunpack.c.h.b16 %v217
    %v789 = vunpack.c.l.b16 %v218
    %v790 = vunpack.c.h.b16 %v218
    %v791 = vunpack.c.l.b16 %v219
    %v792 = vunpack.c.h.b16 %v219
    %v793 = vunpack.c.l.b16 %v220
    %v794 = vunpack.c.h.b16 %v220
    %v795 = vunpack.c.l.b16 %v221
    %v796 = vunpack.c.h.b16 %v221
    %v797 = vunpack.c.l.b16 %v222
    %v798 = vunpack.c.h.b16 %v222
    %v799 = vunpack.c.l.b16 %v223
    %v800 = vunpack.c.h.b16 %v223
    %v801 = vunpack.c.l.b16 %v224
    %v802 = vunpack.c.h.b16 %v224
    %v803 = vunpack.c.l.b16 %v225
    %v804 = vunpack.c.h.b16 %v225
    %v805 = vunpack.c.l.b16 %v226
    %v806 = vunpack.c.h.b16 %v226
    %v807 = vunpack.c.l.b16 %v227
    %v808 = vunpack.c.h.b16 %v227
    %v809 = vunpack.c.l.b16 %v228
    %v810 = vunpack.c.h.b16 %v228
    %v811 = vunpack.c.l.b16 %v229
    %v812 = vunpack.c.h.b16 %v229
    %v813 = vunpack.c.l.b16 %v230
    %v814 = vunpack.c.h.b16 %v230
    %v815 = vunpack.c.l.b16 %v231
    %v816 = vunpack.c.h.b16 %v231
    %v817 = vunpack.c.l.b16 %v232
    %v818 = vunpack.c.h.b16 %v232
    %v819 = vunpack.c.l.b16 %v233
    %v820 = vunpack.c.h.b16 %v233
    %v821 = vunpack.c.l.b16 %v234
    %v822 = vunpack.c.h.b16 %v234
    %v823 = vunpack.c.l.b16 %v235
    %v824 = vunpack.c.h.b16 %v235
    %v825 = vunpack.c.l.b16 %v236
    %v826 = vunpack.c.h.b16 %v236
    %v827 = vunpack.c.l.b16 %v237
    %v828 = vunpack.c.h.b16 %v237
    %v829 = vunpack.c.l.b16 %v238
    %v830 = vunpack.c.h.b16 %v238
    %v831 = vunpack.c.l.b16 %v239
    %v832 = vunpack.c.h.b16 %v239
    %v833 = vunpack.c.l.b16 %v240
    %v834 = vunpack.c.h.b16 %v240
    %v835 = vunpack.c.l.b16 %v241
    %v836 = vunpack.c.h.b16 %v241
    %v837 = vunpack.c.l.b16 %v242
    %v838 = vunpack.c.h.b16 %v242
    %v839 = vunpack.c.l.b16 %v243
    %v840 = vunpack.c.h.b16 %v243
    %v841 = vunpack.c.l.b16 %v244
    %v842 = vunpack.c.h.b16 %v244
    %v843 = vunpack.c.l.b16 %v245
    %v844 = vunpack.c.h.b16 %v245
    %v845 = vunpack.c.l.b16 %v246
    %v846 = vunpack.c.h.b16 %v246
    %v847 = vunpack.c.l.b16 %v247
    %v848 = vunpack.c.h.b16 %v247
    %v849 = vunpack.c.l.b16 %v248
    %v850 = vunpack.c.h.b16 %v248
    %v851 = vunpack.c.l.b16 %v249
    %v852 = vunpack.c.h.b16 %v249
    %v853 = vunpack.c.l.b16 %v250
    %v854 = vunpack.c.h.b16 %v250
    %v855 = vunpack.c.l.b16 %v251
    %v856 = vunpack.c.h.b16 %v251
    %v857 = vunpack.c.l.b16 %v252
    %v858 = vunpack.c.h.b16 %v252
    %v859 = vunpack.c.l.b16 %v253
    %v860 = vunpack.c.h.b16 %v253
    %v861 = vunpack.c.l.b16 %v254
    %v862 = vunpack.c.h.b16 %v254
    %v863 = vunpack.c.l.b16 %v255
    %v864 = vunpack.c.h.b16 %v255
    %v865 = vunpack.c.l.b16 %v256
    %v866 = vunpack.c.h.b16 %v256
    %v867 = vunpack.c.l.b16 %v257
    %v868 = vunpack.c.h.b16 %v257
    %v869 = vunpack.c.l.b16 %v258
    %v870 = vunpack.c.h.b16 %v258
    %v871 = vunpack.c.l.b16 %v259
    %v872 = vunpack.c.h.b16 %v259
    %v873 = vunpack.c.l.b16 %v260
    %v874 = vunpack.c.h.b16 %v260
    %v875 = vunpack.c.l.b16 %v261
    %v876 = vunpack.c.h.b16 %v261
    %v877 = vunpack.c.l.b16 %v262
    %v878 = vunpack.c.h.b16 %v262
    %v879 = vunpack.c.l.b16 %v263
    %v880 = vunpack.c.h.b16 %v263
    %v881 = vunpack.c.l.b16 %v264
    %v882 = vunpack.c.h.b16 %v264
    %v883 = vunpack.c.l.b16 %v265
    %v884 = vunpack.c.h.b16 %v265
    %v885 = vunpack.c.l.b16 %v266
    %v886 = vunpack.c.h.b16 %v266
    %v887 = vunpack.c.l.b16 %v267
    %v888 = vunpack.c.h.b16 %v267
    %v889 = vunpack.c.l.b16 %v268
    %v890 = vunpack.c.h.b16 %v268
    %v891 = vunpack.c.l.b16 %v269
    %v892 = vunpack.c.h.b16 %v269
    %v893 = vunpack.c.l.b16 %v270
    %v894 = vunpack.c.h.b16 %v270
    %v895 = vunpack.c.l.b16 %v271
    %v896 = vunpack.c.h.b16 %v271
    %v897 = vunpack.c.l.b16 %v272
    %v898 = vunpack.c.h.b16 %v272
    %v899 = vunpack.c.l.b16 %v273
    %v900 = vunpack.c.h.b16 %v273
    %v901 = vunpack.c.l.b16 %v274
    %v902 = vunpack.c.h.b16 %v274
    %v903 = vunpack.c.l.b16 %v275
    %v904 = vunpack.c.h.b16 %v275
    %v905 = vunpack.c.l.b16 %v276
    %v906 = vunpack.c.h.b16 %v276
    %v907 = vunpack.c.l.b16 %v277
    %v908 = vunpack.c.h.b16 %v277
    %v909 = vunpack.c.l.b16 %v278
    %v910 = vunpack.c.h.b16 %v278
    %v911 = vunpack.c.l.b16 %v279
    %v912 = vunpack.c.h.b16 %v279
    %v913 = vunpack.c.l.b16 %v280
    %v914 = vunpack.c.h.b16 %v280
    %v915 = vunpack.c.l.b16 %v281
    %v916 = vunpack.c.h.b16 %v281
    %v917 = vunpack.c.l.b16 %v282
    %v918 = vunpack.c.h.b16 %v282
    %v919 = vunpack.c.l.b16 %v283
    %v920 = vunpack.c.h.b16 %v283
    %v921 = vunpack.c.l.b16 %v284
    %v922 = vunpack.c.h.b16 %v284
    %v923 = vunpack.c.l.b16 %v285
    %v924 = vunpack.c.h.b16 %v285
    %v925 = vunpack.c.l.b16 %v286
    %v926 = vunpack.c.h.b16 %v286
    %v927 = vunpack.c.l.b16 %v287
    %v928 = vunpack.c.h.b16 %v287
    %v929 = vunpack.c.l.b16 %v288
    %v930 = vunpack.c.h.b16 %v288
    %v931 = vunpack.c.l.b16 %v289
    %v932 = vunpack.c.h.b16 %v289
    %v933 = vunpack.c.l.b16 %v290
    %v934 = vunpack.c.h.b16 %v290
    %v935 = vunpack.c.l.b16 %v291
    %v936 = vunpack.c.h.b16 %v291
    %v937 = vunpack.c.l.b16 %v292
    %v938 = vunpack.c.h.b16 %v292
    %v939 = vunpack.c.l.b16 %v293
    %v940 = vunpack.c.h.b16 %v293
    %v941 = vunpack.c.l.b16 %v294
    %v942 = vunpack.c.h.b16 %v294
    %v943 = vunpack.c.l.b16 %v295
    %v944 = vunpack.c.h.b16 %v295
    %v945 = vunpack.c.l.b16 %v296
    %v946 = vunpack.c.h.b16 %v296
    %v947 = vunpack.c.l.b16 %v297
    %v948 = vunpack.c.h.b16 %v297
    %v949 = vunpack.c.l.b16 %v298
    %v950 = vunpack.c.h.b16 %v298
    %v951 = vunpack.c.l.b16 %v299
    %v952 = vunpack.c.h.b16 %v299
    %v953 = vunpack.c.l.b16 %v300
    %v954 = vunpack.c.h.b16 %v300
    %v955 = vunpack.c.l.b16 %v301
    %v956 = vunpack.c.h.b16 %v301
    %v957 = vunpack.c.l.b16 %v302
    %v958 = vunpack.c.h.b16 %v302
    %v959 = vunpack.c.l.b16 %v303
    %v960 = vunpack.c.h.b16 %v303
    %v961 = vunpack.c.l.b16 %v304
    %v962 = vunpack.c.h.b16 %v304
    %v963 = vunpack.c.l.b16 %v305
    %v964 = vunpack.c.h.b16 %v305
    %v965 = vunpack.c.l.b16 %v306
    %v966 = vunpack.c.h.b16 %v306
    %v967 = vunpack.c.l.b16 %v307
    %v968 = vunpack.c.h.b16 %v307
    %v969 = vunpack.c.l.b16 %v308
    %v970 = vunpack.c.h.b16 %v308
    %v971 = vunpack.c.l.b16 %v309
    %v972 = vunpack.c.h.b16 %v309
    %v973 = vunpack.c.l.b16 %v310
    %v974 = vunpack.c.h.b16 %v310
    %v975 = vunpack.c.l.b16 %v311
    %v976 = vunpack.c.h.b16 %v311
    %v977 = vunpack.c.l.b16 %v312
    %v978 = vunpack.c.h.b16 %v312
    %v979 = vunpack.c.l.b16 %v313
    %v980 = vunpack.c.h.b16 %v313
    %v981 = vunpack.c.l.b16 %v314
    %v982 = vunpack.c.h.b16 %v314
    %v983 = vunpack.c.l.b16 %v315
    %v984 = vunpack.c.h.b16 %v315
    %v985 = vunpack.c.l.b16 %v316
    %v986 = vunpack.c.h.b16 %v316
    %v987 = vunpack.c.l.b16 %v317
    %v988 = vunpack.c.h.b16 %v317
    %v989 = vunpack.c.l.b16 %v318
    %v990 = vunpack.c.h.b16 %v318
    %v991 = vunpack.c.l.b16 %v319
    %v992 = vunpack.c.h.b16 %v319
    %v993 = vunpack.c.l.b16 %v320
    %v994 = vunpack.c.h.b16 %v320
    %v995 = vunpack.c.l.b16 %v321
    %v996 = vunpack.c.h.b16 %v321
    %v997 = vunpack.c.l.b16 %v322
    %v998 = vunpack.c.h.b16 %v322
    %v999 = vunpack.c.l.b16 %v323
    %v1000 = vunpack.c.h.b16 %v323
    %v1001 = vunpack.c.l.b16 %v324
    %v1002 = vunpack.c.h.b16 %v324
    %v1003 = vunpack.c.l.b16 %v325
    %v1004 = vunpack.c.h.b16 %v325
    %v1005 = vunpack.c.l.b16 %v326
    %v1006 = vunpack.c.h.b16 %v326
    %v1007 = vunpack.c.l.b16 %v327
    %v1008 = vunpack.c.h.b16 %v327
    %v1009 = vunpack.c.l.b16 %v328
    %v1010 = vunpack.c.h.b16 %v328
    %v1011 = vunpack.c.l.b16 %v329
    %v1012 = vunpack.c.h.b16 %v329
    %v1013 = vunpack.c.l.b16 %v330
    %v1014 = vunpack.c.h.b16 %v330
    %v1015 = vunpack.c.l.b16 %v331
    %v1016 = vunpack.c.h.b16 %v331
    %v1017 = vunpack.c.l.b16 %v332
    %v1018 = vunpack.c.h.b16 %v332
    %v1019 = vunpack.c.l.b16 %v333
    %v1020 = vunpack.c.h.b16 %v333
    %v1021 = vunpack.c.l.b16 %v334
    %v1022 = vunpack.c.h.b16 %v334
    %v1023 = vunpack.c.l.b16 %v335
    %v1024 = vunpack.c.h.b16 %v335
    %v1025 = vunpack.c.l.b16 %v336
    %v1026 = vunpack.c.h.b16 %v336
    %v1027 = vunpack.c.l.b16 %v337
    %v1028 = vunpack.c.h.b16 %v337
    %v1029 = vunpack.c.l.b16 %v338
    %v1030 = vunpack.c.h.b16 %v338
    %v1031 = vunpack.c.l.b16 %v339
    %v1032 = vunpack.c.h.b16 %v339
    %v1033 = vunpack.c.l.b16 %v340
    %v1034 = vunpack.c.h.b16 %v340
    %v1035 = vunpack.c.l.b16 %v341
    %v1036 = vunpack.c.h.b16 %v341
    %v1037 = vunpack.c.l.b16 %v342
    %v1038 = vunpack.c.h.b16 %v342
    %v1039 = vunpack.c.l.b16 %v343
    %v1040 = vunpack.c.h.b16 %v343
    %v1041 = vunpack.c.l.b16 %v344
    %v1042 = vunpack.c.h.b16 %v344
    %v1043 = vunpack.c.l.b16 %v345
    %v1044 = vunpack.c.h.b16 %v345
    %v1045 = vunpack.c.l.b16 %v346
    %v1046 = vunpack.c.h.b16 %v346
    %v1047 = vunpack.c.l.b16 %v347
    %v1048 = vunpack.c.h.b16 %v347
    %v1049 = vunpack.c.l.b16 %v348
    %v1050 = vunpack.c.h.b16 %v348
    %v1051 = vunpack.c.l.b16 %v349
    %v1052 = vunpack.c.h.b16 %v349
    %v1053 = vunpack.c.l.b16 %v350
    %v1054 = vunpack.c.h.b16 %v350
    %v1055 = vunpack.c.l.b16 %v351
    %v1056 = vunpack.c.h.b16 %v351
    %v1057 = vunpack.c.l.b16 %v352
    %v1058 = vunpack.c.h.b16 %v352
    %v1059 = vunpack.c.l.b16 %v353
    %v1060 = vunpack.c.h.b16 %v353
    %v1061 = vunpack.c.l.b16 %v354
    %v1062 = vunpack.c.h.b16 %v354
    %v1063 = vunpack.c.l.b16 %v355
    %v1064 = vunpack.c.h.b16 %v355
    %v1065 = vunpack.c.l.b16 %v356
    %v1066 = vunpack.c.h.b16 %v356
    %v1067 = vunpack.c.l.b16 %v357
    %v1068 = vunpack.c.h.b16 %v357
    %v1069 = vunpack.c.l.b16 %v358
    %v1070 = vunpack.c.h.b16 %v358
    %v1071 = vunpack.c.l.b16 %v359
    %v1072 = vunpack.c.h.b16 %v359
    %v1073 = vunpack.c.l.b16 %v360
    %v1074 = vunpack.c.h.b16 %v360
    %v1075 = vunpack.c.l.b16 %v361
    %v1076 = vunpack.c.h.b16 %v361
    %v1077 = vunpack.c.l.b16 %v362
    %v1078 = vunpack.c.h.b16 %v362
    %v1079 = vunpack.c.l.b16 %v363
    %v1080 = vunpack.c.h.b16 %v363
    %v1081 = vunpack.c.l.b16 %v364
    %v1082 = vunpack.c.h.b16 %v364
    %v1083 = vunpack.c.l.b16 %v365
    %v1084 = vunpack.c.h.b16 %v365
    %v1085 = vunpack.c.l.b16 %v366
    %v1086 = vunpack.c.h.b16 %v366
    %v1087 = vunpack.c.l.b16 %v367
    %v1088 = vunpack.c.h.b16 %v367
    %v1089 = vunpack.c.l.b16 %v368
    %v1090 = vunpack.c.h.b16 %v368
    %v1091 = vunpack.c.l.b16 %v369
    %v1092 = vunpack.c.h.b16 %v369
    %v1093 = vunpack.c.l.b16 %v370
    %v1094 = vunpack.c.h.b16 %v370
    %v1095 = vunpack.c.l.b16 %v371
    %v1096 = vunpack.c.h.b16 %v371
    %v1097 = vunpack.c.l.b16 %v372
    %v1098 = vunpack.c.h.b16 %v372
    %v1099 = vunpack.c.l.b16 %v373
    %v1100 = vunpack.c.h.b16 %v373
    %v1101 = vunpack.c.l.b16 %v374
    %v1102 = vunpack.c.h.b16 %v374
    %v1103 = vunpack.c.l.b16 %v375
    %v1104 = vunpack.c.h.b16 %v375
    %v1105 = vunpack.c.l.b16 %v376
    %v1106 = vunpack.c.h.b16 %v376
    %v1107 = vunpack.c.l.b16 %v377
    %v1108 = vunpack.c.h.b16 %v377
    %v1109 = vunpack.c.l.b16 %v378
    %v1110 = vunpack.c.h.b16 %v378
    %v1111 = vunpack.c.l.b16 %v379
    %v1112 = vunpack.c.h.b16 %v379
    %v1113 = vunpack.c.l.b16 %v380
    %v1114 = vunpack.c.h.b16 %v380
    %v1115 = vunpack.c.l.b16 %v381
    %v1116 = vunpack.c.h.b16 %v381
    %v1117 = vunpack.c.l.b16 %v382
    %v1118 = vunpack.c.h.b16 %v382
    %v1119 = vunpack.c.l.b16 %v383
    %v1120 = vunpack.c.h.b16 %v383
    %v1121 = vunpack.c.l.b16 %v384
    %v1122 = vunpack.c.h.b16 %v384
    %v1123 = vunpack.c.l.b16 %v385
    %v1124 = vunpack.c.h.b16 %v385
    %v1125 = vunpack.c.l.b16 %v386
    %v1126 = vunpack.c.h.b16 %v386
    %v1127 = vunpack.c.l.b16 %v387
    %v1128 = vunpack.c.h.b16 %v387
    %v1129 = vunpack.c.l.b16 %v388
    %v1130 = vunpack.c.h.b16 %v388
    %v1131 = vunpack.c.l.b16 %v389
    %v1132 = vunpack.c.h.b16 %v389
    %v1133 = vunpack.c.l.b16 %v390
    %v1134 = vunpack.c.h.b16 %v390
    %v1135 = vunpack.c.l.b16 %v391
    %v1136 = vunpack.c.h.b16 %v391
    %v1137 = vunpack.c.l.b16 %v392
    %v1138 = vunpack.c.h.b16 %v392
    %v1139 = vunpack.c.l.b16 %v393
    %v1140 = vunpack.c.h.b16 %v393
    %v1141 = vunpack.c.l.b16 %v394
    %v1142 = vunpack.c.h.b16 %v394
    %v1143 = vunpack.c.l.b16 %v395
    %v1144 = vunpack.c.h.b16 %v395
    %v1145 = vunpack.c.l.b16 %v396
    %v1146 = vunpack.c.h.b16 %v396
    %v1147 = vunpack.c.l.b16 %v397
    %v1148 = vunpack.c.h.b16 %v397
    %v1149 = vunpack.c.l.b16 %v398
    %v1150 = vunpack.c.h.b16 %v398
    %v1151 = vunpack.c.l.b16 %v399
    %v1152 = vunpack.c.h.b16 %v399
    %v1153 = vunpack.c.l.b16 %v400
    %v1154 = vunpack.c.h.b16 %v400
    %v1155 = vunpack.c.l.b16 %v401
    %v1156 = vunpack.c.h.b16 %v401
    %v1157 = vunpack.c.l.b16 %v402
    %v1158 = vunpack.c.h.b16 %v402
    %v1159 = vunpack.c.l.b16 %v403
    %v1160 = vunpack.c.h.b16 %v403
    %v1161 = vunpack.c.l.b16 %v404
    %v1162 = vunpack.c.h.b16 %v404
    %v1163 = vunpack.c.l.b16 %v405
    %v1164 = vunpack.c.h.b16 %v405
    %v1165 = vunpack.c.l.b16 %v406
    %v1166 = vunpack.c.h.b16 %v406
    %v1167 = vunpack.c.l.b16 %v407
    %v1168 = vunpack.c.h.b16 %v407
    %v1169 = vunpack.c.l.b16 %v408
    %v1170 = vunpack.c.h.b16 %v408
    %v1171 = vunpack.c.l.b16 %v409
    %v1172 = vunpack.c.h.b16 %v409
    %v1173 = vunpack.c.l.b16 %v410
    %v1174 = vunpack.c.h.b16 %v410
    %v1175 = vunpack.c.l.b16 %v411
    %v1176 = vunpack.c.h.b16 %v411
    %v1177 = vunpack.c.l.b16 %v412
    %v1178 = vunpack.c.h.b16 %v412
    %v1179 = vunpack.c.l.b16 %v413
    %v1180 = vunpack.c.h.b16 %v413
    %v1181 = vunpack.c.l.b16 %v414
    %v1182 = vunpack.c.h.b16 %v414
    %v1183 = vunpack.c.l.b16 %v415
    %v1184 = vunpack.c.h.b16 %v415
    %v1185 = vunpack.c.l.b16 %v416
    %v1186 = vunpack.c.h.b16 %v416
    %v1187 = vunpack.c.l.b16 %v417
    %v1188 = vunpack.c.h.b16 %v417
    %v1189 = vunpack.c.l.b16 %v418
    %v1190 = vunpack.c.h.b16 %v418
    %v1191 = vunpack.c.l.b16 %v419
    %v1192 = vunpack.c.h.b16 %v419
    %v1193 = vunpack.c.l.b16 %v420
    %v1194 = vunpack.c.h.b16 %v420
    %v1195 = vunpack.c.l.b16 %v421
    %v1196 = vunpack.c.h.b16 %v421
    %v1197 = vunpack.c.l.b16 %v422
    %v1198 = vunpack.c.h.b16 %v422
    %v1199 = vunpack.c.l.b16 %v423
    %v1200 = vunpack.c.h.b16 %v423
    %v1201 = vunpack.c.l.b16 %v424
    %v1202 = vunpack.c.h.b16 %v424
    %v1203 = vunpack.c.l.b16 %v425
    %v1204 = vunpack.c.h.b16 %v425
    %v1205 = vunpack.c.l.b16 %v426
    %v1206 = vunpack.c.h.b16 %v426
    %v1207 = vunpack.c.l.b16 %v427
    %v1208 = vunpack.c.h.b16 %v427
    %v1209 = vunpack.c.l.b16 %v428
    %v1210 = vunpack.c.h.b16 %v428
    %v1211 = vunpack.c.l.b16 %v429
    %v1212 = vunpack.c.h.b16 %v429
    %v1213 = vunpack.c.l.b16 %v430
    %v1214 = vunpack.c.h.b16 %v430
    %v1215 = vunpack.c.l.b16 %v431
    %v1216 = vunpack.c.h.b16 %v431
    %v1217 = vunpack.c.l.b16 %v432
    %v1218 = vunpack.c.h.b16 %v432
    %v1219 = vunpack.c.l.b16 %v433
    %v1220 = vunpack.c.h.b16 %v433
    %v1221 = vunpack.c.l.b16 %v434
    %v1222 = vunpack.c.h.b16 %v434
    %v1223 = vunpack.c.l.b16 %v435
    %v1224 = vunpack.c.h.b16 %v435
    %v1225 = vunpack.c.l.b16 %v436
    %v1226 = vunpack.c.h.b16 %v436
    %v1227 = vunpack.c.l.b16 %v437
    %v1228 = vunpack.c.h.b16 %v437
    %v1229 = vunpack.c.l.b16 %v438
    %v1230 = vunpack.c.h.b16 %v438
    %v1231 = vunpack.c.l.b16 %v439
    %v1232 = vunpack.c.h.b16 %v439
    %v1233 = vunpack.c.l.b16 %v440
    %v1234 = vunpack.c.h.b16 %v440
    %v1235 = vunpack.c.l.b16 %v441
    %v1236 = vunpack.c.h.b16 %v441
    %v1237 = vunpack.c.l.b16 %v442
    %v1238 = vunpack.c.h.b16 %v442
    %v1239 = vunpack.c.l.b16 %v443
    %v1240 = vunpack.c.h.b16 %v443
    %v1241 = vunpack.c.l.b16 %v444
    %v1242 = vunpack.c.h.b16 %v444
    %v1243 = vunpack.c.l.b16 %v445
    %v1244 = vunpack.c.h.b16 %v445
    %v1245 = vunpack.c.l.b16 %v446
    %v1246 = vunpack.c.h.b16 %v446
    %v1247 = vunpack.c.l.b16 %v447
    %v1248 = vunpack.c.h.b16 %v447
    %v1249 = vunpack.c.l.b16 %v448
    %v1250 = vunpack.c.h.b16 %v448
    %v1251 = vunpack.c.l.b16 %v449
    %v1252 = vunpack.c.h.b16 %v449
    %v1253 = vunpack.c.l.b16 %v450
    %v1254 = vunpack.c.h.b16 %v450
    %v1255 = vunpack.c.l.b16 %v451
    %v1256 = vunpack.c.h.b16 %v451
    %v1257 = vunpack.c.l.b16 %v452
    %v1258 = vunpack.c.h.b16 %v452
    %v1259 = vunpack.c.l.b16 %v453
    %v1260 = vunpack.c.h.b16 %v453
    %v1261 = vunpack.c.l.b16 %v454
    %v1262 = vunpack.c.h.b16 %v454
    %v1263 = vunpack.c.l.b16 %v455
    %v1264 = vunpack.c.h.b16 %v455
    %v1265 = vunpack.c.l.b16 %v456
    %v1266 = vunpack.c.h.b16 %v456
    %v1267 = vpack.c.b16 %v763, %v755
    %v1268 = vpack.c.b16 %v764, %v756
    %v1269 = vpack.c.b16 %v765, %v757
    %v1270 = vpack.c.b16 %v766, %v758
    %v1271 = vpack.c.b16 %v767, %v759
    %v1272 = vpack.c.b16 %v768, %v760
    %v1273 = vpack.c.b16 %v769, %v761
    %v1274 = vpack.c.b16 %v770, %v762
    %v1275 = vpack.c.b16 %v779, %v771
    %v1276 = vpack.c.b16 %v780, %v772
    %v1277 = vpack.c.b16 %v781, %v773
    %v1278 = vpack.c.b16 %v782, %v774
    %v1279 = vpack.c.b16 %v783, %v775
    %v1280 = vpack.c.b16 %v784, %v776
    %v1281 = vpack.c.b16 %v785, %v777
    %v1282 = vpack.c.b16 %v786, %v778
    %v1283 = vpack.c.b16 %v795, %v787
    %v1284 = vpack.c.b16 %v796, %v788
    %v1285 = vpack.c.b16 %v797, %v789
    %v1286 = vpack.c.b16 %v798, %v790
    %v1287 = vpack.c.b16 %v799, %v791
    %v1288 = vpack.c.b16 %v800, %v792
    %v1289 = vpack.c.b16 %v801, %v793
    %v1290 = vpack.c.b16 %v802, %v794
    %v1291 = vpack.c.b16 %v811, %v803
    %v1292 = vpack.c.b16 %v812, %v804
    %v1293 = vpack.c.b16 %v813, %v805
    %v1294 = vpack.c.b16 %v814, %v806
    %v1295 = vpack.c.b16 %v815, %v807
    %v1296 = vpack.c.b16 %v816, %v808
    %v1297 = vpack.c.b16 %v817, %v809
    %v1298 = vpack.c.b16 %v818, %v810
    %v1299 = vpack.c.b16 %v827, %v819
    %v1300 = vpack.c.b16 %v828, %v820
    %v1301 = vpack.c.b16 %v829, %v821
    %v1302 = vpack.c.b16 %v830, %v822
    %v1303 = vpack.c.b16 %v831, %v823
    %v1304 = vpack.c.b16 %v832, %v824
    %v1305 = vpack.c.b16 %v833, %v825
    %v1306 = vpack.c.b16 %v834, %v826
    %v1307 = vpack.c.b16 %v843, %v835
    %v1308 = vpack.c.b16 %v844, %v836
    %v1309 = vpack.c.b16 %v845, %v837
    %v1310 = vpack.c.b16 %v846, %v838
    %v1311 = vpack.c.b16 %v847, %v839
    %v1312 = vpack.c.b16 %v848, %v840
    %v1313 = vpack.c.b16 %v849, %v841
    %v1314 = vpack.c.b16 %v850, %v842
    %v1315 = vpack.c.b16 %v859, %v851
    %v1316 = vpack.c.b16 %v860, %v852
    %v1317 = vpack.c.b16 %v861, %v853
    %v1318 = vpack.c.b16 %v862, %v854
    %v1319 = vpack.c.b16 %v863, %v855
    %v1320 = vpack.c.b16 %v864, %v856
    %v1321 = vpack.c.b16 %v865, %v857
    %v1322 = vpack.c.b16 %v866, %v858
    %v1323 = vpack.c.b16 %v875, %v867
    %v1324 = vpack.c.b16 %v876, %v868
    %v1325 = vpack.c.b16 %v877, %v869
    %v1326 = vpack.c.b16 %v878, %v870
    %v1327 = vpack.c.b16 %v879, %v871
    %v1328 = vpack.c.b16 %v880, %v872
    %v1329 = vpack.c.b16 %v881, %v873
    %v1330 = vpack.c.b16 %v882, %v874
    %v1331 = vpack.c.b16 %v891, %v883
    %v1332 = vpack.c.b16 %v892, %v884
    %v1333 = vpack.c.b16 %v893, %v885
    %v1334 = vpack.c.b16 %v894, %v886
    %v1335 = vpack.c.b16 %v895, %v887
    %v1336 = vpack.c.b16 %v896, %v888
    %v1337 = vpack.c.b16 %v897, %v889
    %v1338 = vpack.c.b16 %v898, %v890
    %v1339 = vpack.c.b16 %v907, %v899
    %v1340 = vpack.c.b16 %v908, %v900
    %v1341 = vpack.c.b16 %v909, %v901
    %v1342 = vpack.c.b16 %v910, %v902
    %v1343 = vpack.c.b16 %v911, %v903
    %v1344 = vpack.c.b16 %v912, %v904
    %v1345 = vpack.c.b16 %v913, %v905
    %v1346 = vpack.c.b16 %v914, %v906
    %v1347 = vpack.c.b16 %v923, %v915
    %v1348 = vpack.c.b16 %v924, %v916
    %v1349 = vpack.c.b16 %v925, %v917
    %v1350 = vpack.c.b16 %v926, %v918
    %v1351 = vpack.c.b16 %v927, %v919
    %v1352 = vpack.c.b16 %v928, %v920
    %v1353 = vpack.c.b16 %v929, %v921
    %v1354 = vpack.c.b16 %v930, %v922
    %v1355 = vpack.c.b16 %v939, %v931
    %v1356 = vpack.c.b16 %v940, %v932
    %v1357 = vpack.c.b16 %v941, %v933
    %v1358 = vpack.c.b16 %v942, %v934
    %v1359 = vpack.c.b16 %v943, %v935
    %v1360 = vpack.c.b16 %v944, %v936
    %v1361 = vpack.c.b16 %v945, %v937
    %v1362 = vpack.c.b16 %v946, %v938
    %v1363 = vpack.c.b16 %v955, %v947
    %v1364 = vpack.c.b16 %v956, %v948
    %v1365 = vpack.c.b16 %v957, %v949
    %v1366 = vpack.c.b16 %v958, %v950
    %v1367 = vpack.c.b16 %v959, %v951
    %v1368 = vpack.c.b16 %v960, %v952
    %v1369 = vpack.c.b16 %v961, %v953
    %v1370 = vpack.c.b16 %v962, %v954
    %v1371 = vpack.c.b16 %v971, %v963
    %v1372 = vpack.c.b16 %v972, %v964
    %v1373 = vpack.c.b16 %v973, %v965
    %v1374 = vpack.c.b16 %v974, %v966
    %v1375 = vpack.c.b16 %v975, %v967
    %v1376 = vpack.c.b16 %v976, %v968
    %v1377 = vpack.c.b16 %v977, %v969
    %v1378 = vpack.c.b16 %v978, %v970
    %v1379 = vpack.c.b16 %v987, %v979
    %v1380 = vpack.c.b16 %v988, %v980
    %v1381 = vpack.c.b16 %v989, %v981
    %v1382 = vpack.c.b16 %v990, %v982
    %v1383 = vpack.c.b16 %v991, %v983
    %v1384 = vpack.c.b16 %v992, %v984
    %v1385 = vpack.c.b16 %v993, %v985
    %v1386 = vpack.c.b16 %v994, %v986
    %v1387 = vpack.c.b16 %v1003, %v995
    %v1388 = vpack.c.b16 %v1004, %v996
    %v1389 = vpack.c.b16 %v1005, %v997
    %v1390 = vpack.c.b16 %v1006, %v998
    %v1391 = vpack.c.b16 %v1007, %v999
    %v1392 = vpack.c.b16 %v1008, %v1000
    %v1393 = vpack.c.b16 %v1009, %v1001
    %v1394 = vpack.c.b16 %v1010, %v1002
    %v1395 = vpack.c.b16 %v1019, %v1011
    %v1396 = vpack.c.b16 %v1020, %v1012
    %v1397 = vpack.c.b16 %v1021, %v1013
    %v1398 = vpack.c.b16 %v1022, %v1014
    %v1399 = vpack.c.b16 %v1023, %v1015
    %v1400 = vpack.c.b16 %v1024, %v1016
    %v1401 = vpack.c.b16 %v1025, %v1017
    %v1402 = vpack.c.b16 %v1026, %v1018
    %v1403 = vpack.c.b16 %v1035, %v1027
    %v1404 = vpack.c.b16 %v1036, %v1028
    %v1405 = vpack.c.b16 %v1037, %v1029
    %v1406 = vpack.c.b16 %v1038, %v1030
    %v1407 = vpack.c.b16 %v1039, %v1031
    %v1408 = vpack.c.b16 %v1040, %v1032
    %v1409 = vpack.c.b16 %v1041, %v1033
    %v1410 = vpack.c.b16 %v1042, %v1034
    %v1411 = vpack.c.b16 %v1051, %v1043
    %v1412 = vpack.c.b16 %v1052, %v1044
    %v1413 = vpack.c.b16 %v1053, %v1045
    %v1414 = vpack.c.b16 %v1054, %v1046
    %v1415 = vpack.c.b16 %v1055, %v1047
    %v1416 = vpack.c.b16 %v1056, %v1048
    %v1417 = vpack.c.b16 %v1057, %v1049
    %v1418 = vpack.c.b16 %v1058, %v1050
    %v1419 = vpack.c.b16 %v1067, %v1059
    %v1420 = vpack.c.b16 %v1068, %v1060
    %v1421 = vpack.c.b16 %v1069, %v1061
    %v1422 = vpack.c.b16 %v1070, %v1062
    %v1423 = vpack.c.b16 %v1071, %v1063
    %v1424 = vpack.c.b16 %v1072, %v1064
    %v1425 = vpack.c.b16 %v1073, %v1065
    %v1426 = vpack.c.b16 %v1074, %v1066
    %v1427 = vpack.c.b16 %v1083, %v1075
    %v1428 = vpack.c.b16 %v1084, %v1076
    %v1429 = vpack.c.b16 %v1085, %v1077
    %v1430 = vpack.c.b16 %v1086, %v1078
    %v1431 = vpack.c.b16 %v1087, %v1079
    %v1432 = vpack.c.b16 %v1088, %v1080
    %v1433 = vpack.c.b16 %v1089, %v1081
    %v1434 = vpack.c.b16 %v1090, %v1082
    %v1435 = vpack.c.b16 %v1099, %v1091
    %v1436 = vpack.c.b16 %v1100, %v1092
    %v1437 = vpack.c.b16 %v1101, %v1093
    %v1438 = vpack.c.b16 %v1102, %v1094
    %v1439 = vpack.c.b16 %v1103, %v1095
    %v1440 = vpack.c.b16 %v1104, %v1096
    %v1441 = vpack.c.b16 %v1105, %v1097
    %v1442 = vpack.c.b16 %v1106, %v1098
    %v1443 = vpack.c.b16 %v1115, %v1107
    %v1444 = vpack.c.b16 %v1116, %v1108
    %v1445 = vpack.c.b16 %v1117, %v1109
    %v1446 = vpack.c.b16 %v1118, %v1110
    %v1447 = vpack.c.b16 %v1119, %v1111
    %v1448 = vpack.c.b16 %v1120, %v1112
    %v1449 = vpack.c.b16 %v1121, %v1113
    %v1450 = vpack.c.b16 %v1122, %v1114
    %v1451 = vpack.c.b16 %v1131, %v1123
    %v1452 = vpack.c.b16 %v1132, %v1124
    %v1453 = vpack.c.b16 %v1133, %v1125
    %v1454 = vpack.c.b16 %v1134, %v1126
    %v1455 = vpack.c.b16 %v1135, %v1127
    %v1456 = vpack.c.b16 %v1136, %v1128
    %v1457 = vpack.c.b16 %v1137, %v1129
    %v1458 = vpack.c.b16 %v1138, %v1130
    %v1459 = vpack.c.b16 %v1147, %v1139
    %v1460 = vpack.c.b16 %v1148, %v1140
    %v1461 = vpack.c.b16 %v1149, %v1141
    %v1462 = vpack.c.b16 %v1150, %v1142
    %v1463 = vpack.c.b16 %v1151, %v1143
    %v1464 = vpack.c.b16 %v1152, %v1144
    %v1465 = vpack.c.b16 %v1153, %v1145
    %v1466 = vpack.c.b16 %v1154, %v1146
    %v1467 = vpack.c.b16 %v1163, %v1155
    %v1468 = vpack.c.b16 %v1164, %v1156
    %v1469 = vpack.c.b16 %v1165, %v1157
    %v1470 = vpack.c.b16 %v1166, %v1158
    %v1471 = vpack.c.b16 %v1167, %v1159
    %v1472 = vpack.c.b16 %v1168, %v1160
    %v1473 = vpack.c.b16 %v1169, %v1161
    %v1474 = vpack.c.b16 %v1170, %v1162
    %v1475 = vpack.c.b16 %v1179, %v1171
    %v1476 = vpack.c.b16 %v1180, %v1172
    %v1477 = vpack.c.b16 %v1181, %v1173
    %v1478 = vpack.c.b16 %v1182, %v1174
    %v1479 = vpack.c.b16 %v1183, %v1175
    %v1480 = vpack.c.b16 %v1184, %v1176
    %v1481 = vpack.c.b16 %v1185, %v1177
    %v1482 = vpack.c.b16 %v1186, %v1178
    %v1483 = vpack.c.b16 %v1195, %v1187
    %v1484 = vpack.c.b16 %v1196, %v1188
    %v1485 = vpack.c.b16 %v1197, %v1189
    %v1486 = vpack.c.b16 %v1198, %v1190
    %v1487 = vpack.c.b16 %v1199, %v1191
    %v1488 = vpack.c.b16 %v1200, %v1192
    %v1489 = vpack.c.b16 %v1201, %v1193
    %v1490 = vpack.c.b16 %v1202, %v1194
    %v1491 = vpack.c.b16 %v1211, %v1203
    %v1492 = vpack.c.b16 %v1212, %v1204
    %v1493 = vpack.c.b16 %v1213, %v1205
    %v1494 = vpack.c.b16 %v1214, %v1206
    %v1495 = vpack.c.b16 %v1215, %v1207
    %v1496 = vpack.c.b16 %v1216, %v1208
    %v1497 = vpack.c.b16 %v1217, %v1209
    %v1498 = vpack.c.b16 %v1218, %v1210
    %v1499 = vpack.c.b16 %v1227, %v1219
    %v1500 = vpack.c.b16 %v1228, %v1220
    %v1501 = vpack.c.b16 %v1229, %v1221
    %v1502 = vpack.c.b16 %v1230, %v1222
    %v1503 = vpack.c.b16 %v1231, %v1223
    %v1504 = vpack.c.b16 %v1232, %v1224
    %v1505 = vpack.c.b16 %v1233, %v1225
    %v1506 = vpack.c.b16 %v1234, %v1226
    %v1507 = vpack.c.b16 %v1243, %v1235
    %v1508 = vpack.c.b16 %v1244, %v1236
    %v1509 = vpack.c.b16 %v1245, %v1237
    %v1510 = vpack.c.b16 %v1246, %v1238
    %v1511 = vpack.c.b16 %v1247, %v1239
    %v1512 = vpack.c.b16 %v1248, %v1240
    %v1513 = vpack.c.b16 %v1249, %v1241
    %v1514 = vpack.c.b16 %v1250, %v1242
    %v1515 = vpack.c.b16 %v1259, %v1251
    %v1516 = vpack.c.b16 %v1260, %v1252
    %v1517 = vpack.c.b16 %v1261, %v1253
    %v1518 = vpack.c.b16 %v1262, %v1254
    %v1519 = vpack.c.b16 %v1263, %v1255
    %v1520 = vpack.c.b16 %v1264, %v1256
    %v1521 = vpack.c.b16 %v1265, %v1257
    %v1522 = vpack.c.b16 %v1266, %v1258
    %1779 = vmatprep.subr.bf16.mxu0 %v1268
    %1780 = vmatpush1.bf16.msra.mxu0 %v1267
    %1781 = vmatprep.subr.bf16.mxu0 %v1276
    %1782 = vmatpush1.bf16.msra.mxu0 %v1275
    %1783 = vmatprep.subr.bf16.mxu0 %v1284
    %1784 = vmatpush1.bf16.msra.mxu0 %v1283
    %1785 = vmatprep.subr.bf16.mxu0 %v1292
    %1786 = vmatpush1.bf16.msra.mxu0 %v1291
    %1787 = vmatprep.subr.bf16.mxu0 %v1300
    %1788 = vmatpush1.bf16.msra.mxu0 %v1299
    %1789 = vmatprep.subr.bf16.mxu0 %v1308
    %1790 = vmatpush1.bf16.msra.mxu0 %v1307
    %1791 = vmatprep.subr.bf16.mxu0 %v1316
    %1792 = vmatpush1.bf16.msra.mxu0 %v1315
    %1793 = vmatprep.subr.bf16.mxu0 %v1324
    %1794 = vmatpush1.bf16.msra.mxu0 %v1323
    %1795 = vmatprep.subr.bf16.mxu0 %v1332
    %1796 = vmatpush1.bf16.msra.mxu0 %v1331
    %1797 = vmatprep.subr.bf16.mxu0 %v1340
    %1798 = vmatpush1.bf16.msra.mxu0 %v1339
    %1799 = vmatprep.subr.bf16.mxu0 %v1348
    %1800 = vmatpush1.bf16.msra.mxu0 %v1347
    %1801 = vmatprep.subr.bf16.mxu0 %v1356
    %1802 = vmatpush1.bf16.msra.mxu0 %v1355
    %1803 = vmatprep.subr.bf16.mxu0 %v1364
    %1804 = vmatpush1.bf16.msra.mxu0 %v1363
    %1805 = vmatprep.subr.bf16.mxu0 %v1372
    %1806 = vmatpush1.bf16.msra.mxu0 %v1371
    %1807 = vmatprep.subr.bf16.mxu0 %v1380
    %1808 = vmatpush1.bf16.msra.mxu0 %v1379
    %1809 = vmatprep.subr.bf16.mxu0 %v1388
    %1810 = vmatpush1.bf16.msra.mxu0 %v1387
    %1811 = vmatprep.mubr.bf16.mxu0 %v198
    %1812 = vmatmul.mubr.bf16.gmra.mrb[0].mxu0 %v197
    %v1813 = vpop.f32.mrb[0].mxu0
    %v1814 = vadd.f32 %v462, %v1813
    %v1815 = vpop.f32.mrb[0].mxu0
    %v1816 = vadd.f32 %v466, %v1815
    %v1817 = vpop.f32.mrb[0].mxu0
    %v1818 = vpop.f32.mrb[0].mxu0
    %1819 = vdwg.mxu0
    %1820 = vmatprep.subr.bf16.mxu0 %v1396
    %1821 = vmatpush1.bf16.msra.mxu0 %v1395
    %1822 = vmatprep.subr.bf16.mxu0 %v1404
    %1823 = vmatpush1.bf16.msra.mxu0 %v1403
    %1824 = vmatprep.subr.bf16.mxu0 %v1412
    %1825 = vmatpush1.bf16.msra.mxu0 %v1411
    %1826 = vmatprep.subr.bf16.mxu0 %v1420
    %1827 = vmatpush1.bf16.msra.mxu0 %v1419
    %1828 = vmatprep.subr.bf16.mxu0 %v1428
    %1829 = vmatpush1.bf16.msra.mxu0 %v1427
    %1830 = vmatprep.subr.bf16.mxu0 %v1436
    %1831 = vmatpush1.bf16.msra.mxu0 %v1435
    %1832 = vmatprep.subr.bf16.mxu0 %v1444
    %1833 = vmatpush1.bf16.msra.mxu0 %v1443
    %1834 = vmatprep.subr.bf16.mxu0 %v1452
    %1835 = vmatpush1.bf16.msra.mxu0 %v1451
    %1836 = vmatprep.subr.bf16.mxu0 %v1460
    %1837 = vmatpush1.bf16.msra.mxu0 %v1459
    %1838 = vmatprep.subr.bf16.mxu0 %v1468
    %1839 = vmatpush1.bf16.msra.mxu0 %v1467
    %1840 = vmatprep.subr.bf16.mxu0 %v1476
    %1841 = vmatpush1.bf16.msra.mxu0 %v1475
    %1842 = vmatprep.subr.bf16.mxu0 %v1484
    %1843 = vmatpush1.bf16.msra.mxu0 %v1483
    %1844 = vmatprep.subr.bf16.mxu0 %v1492
    %1845 = vmatpush1.bf16.msra.mxu0 %v1491
    %1846 = vmatprep.subr.bf16.mxu0 %v1500
    %1847 = vmatpush1.bf16.msra.mxu0 %v1499
    %1848 = vmatprep.subr.bf16.mxu0 %v1508
    %1849 = vmatpush1.bf16.msra.mxu0 %v1507
    %1850 = vmatprep.subr.bf16.mxu0 %v1516
    %1851 = vmatpush1.bf16.msra.mxu0 %v1515
    %1852 = vmatprep.mubr.bf16.mxu0 %v200
    %1853 = vmatmul.mubr.bf16.gmra.mrb[0].mxu0 %v199
    %v1854 = vpop.f32.mrb[0].mxu0
    %v1855 = vadd.f32 %v1814, %v1854
    %v1856 = vpop.f32.mrb[0].mxu0
    %v1857 = vadd.f32 %v1816, %v1856
    %v1858 = vpop.f32.mrb[0].mxu0
    %v1859 = vpop.f32.mrb[0].mxu0
    %1860 = vdwg.mxu0
    %1861 = vmatprep.subr.bf16.mxu0 %v1270
    %1862 = vmatpush1.bf16.msra.mxu0 %v1269
    %1863 = vmatprep.subr.bf16.mxu0 %v1278
    %1864 = vmatpush1.bf16.msra.mxu0 %v1277
    %1865 = vmatprep.subr.bf16.mxu0 %v1286
    %1866 = vmatpush1.bf16.msra.mxu0 %v1285
    %1867 = vmatprep.subr.bf16.mxu0 %v1294
    %1868 = vmatpush1.bf16.msra.mxu0 %v1293
    %1869 = vmatprep.subr.bf16.mxu0 %v1302
    %1870 = vmatpush1.bf16.msra.mxu0 %v1301
    %1871 = vmatprep.subr.bf16.mxu0 %v1310
    %1872 = vmatpush1.bf16.msra.mxu0 %v1309
    %1873 = vmatprep.subr.bf16.mxu0 %v1318
    %1874 = vmatpush1.bf16.msra.mxu0 %v1317
    %1875 = vmatprep.subr.bf16.mxu0 %v1326
    %1876 = vmatpush1.bf16.msra.mxu0 %v1325
    %1877 = vmatprep.subr.bf16.mxu0 %v1334
    %1878 = vmatpush1.bf16.msra.mxu0 %v1333
    %1879 = vmatprep.subr.bf16.mxu0 %v1342
    %1880 = vmatpush1.bf16.msra.mxu0 %v1341
    %1881 = vmatprep.subr.bf16.mxu0 %v1350
    %1882 = vmatpush1.bf16.msra.mxu0 %v1349
    %1883 = vmatprep.subr.bf16.mxu0 %v1358
    %1884 = vmatpush1.bf16.msra.mxu0 %v1357
    %1885 = vmatprep.subr.bf16.mxu0 %v1366
    %1886 = vmatpush1.bf16.msra.mxu0 %v1365
    %1887 = vmatprep.subr.bf16.mxu0 %v1374
    %1888 = vmatpush1.bf16.msra.mxu0 %v1373
    %1889 = vmatprep.subr.bf16.mxu0 %v1382
    %1890 = vmatpush1.bf16.msra.mxu0 %v1381
    %1891 = vmatprep.subr.bf16.mxu0 %v1390
    %1892 = vmatpush1.bf16.msra.mxu0 %v1389
    %1893 = vmatprep.mubr.bf16.mxu0 %v198
    %1894 = vmatmul.mubr.bf16.gmra.mrb[0].mxu0 %v197
    %v1895 = vpop.f32.mrb[0].mxu0
    %v1896 = vadd.f32 %v470, %v1895
    %v1897 = vpop.f32.mrb[0].mxu0
    %v1898 = vadd.f32 %v474, %v1897
    %v1899 = vpop.f32.mrb[0].mxu0
    %v1900 = vpop.f32.mrb[0].mxu0
    %1901 = vdwg.mxu0
    %1902 = vmatprep.subr.bf16.mxu0 %v1398
    %1903 = vmatpush1.bf16.msra.mxu0 %v1397
    %1904 = vmatprep.subr.bf16.mxu0 %v1406
    %1905 = vmatpush1.bf16.msra.mxu0 %v1405
    %1906 = vmatprep.subr.bf16.mxu0 %v1414
    %1907 = vmatpush1.bf16.msra.mxu0 %v1413
    %1908 = vmatprep.subr.bf16.mxu0 %v1422
    %1909 = vmatpush1.bf16.msra.mxu0 %v1421
    %1910 = vmatprep.subr.bf16.mxu0 %v1430
    %1911 = vmatpush1.bf16.msra.mxu0 %v1429
    %1912 = vmatprep.subr.bf16.mxu0 %v1438
    %1913 = vmatpush1.bf16.msra.mxu0 %v1437
    %1914 = vmatprep.subr.bf16.mxu0 %v1446
    %1915 = vmatpush1.bf16.msra.mxu0 %v1445
    %1916 = vmatprep.subr.bf16.mxu0 %v1454
    %1917 = vmatpush1.bf16.msra.mxu0 %v1453
    %1918 = vmatprep.subr.bf16.mxu0 %v1462
    %1919 = vmatpush1.bf16.msra.mxu0 %v1461
    %1920 = vmatprep.subr.bf16.mxu0 %v1470
    %1921 = vmatpush1.bf16.msra.mxu0 %v1469
    %1922 = vmatprep.subr.bf16.mxu0 %v1478
    %1923 = vmatpush1.bf16.msra.mxu0 %v1477
    %1924 = vmatprep.subr.bf16.mxu0 %v1486
    %1925 = vmatpush1.bf16.msra.mxu0 %v1485
    %1926 = vmatprep.subr.bf16.mxu0 %v1494
    %1927 = vmatpush1.bf16.msra.mxu0 %v1493
    %1928 = vmatprep.subr.bf16.mxu0 %v1502
    %1929 = vmatpush1.bf16.msra.mxu0 %v1501
    %1930 = vmatprep.subr.bf16.mxu0 %v1510
    %1931 = vmatpush1.bf16.msra.mxu0 %v1509
    %1932 = vmatprep.subr.bf16.mxu0 %v1518
    %1933 = vmatpush1.bf16.msra.mxu0 %v1517
    %1934 = vmatprep.mubr.bf16.mxu0 %v200
    %1935 = vmatmul.mubr.bf16.gmra.mrb[0].mxu0 %v199
    %v1936 = vpop.f32.mrb[0].mxu0
    %v1937 = vadd.f32 %v1896, %v1936
    %v1938 = vpop.f32.mrb[0].mxu0
    %v1939 = vadd.f32 %v1898, %v1938
    %v1940 = vpop.f32.mrb[0].mxu0
    %v1941 = vpop.f32.mrb[0].mxu0
    %1942 = vdwg.mxu0
    %1943 = vmatprep.subr.bf16.mxu0 %v1272
    %1944 = vmatpush1.bf16.msra.mxu0 %v1271
    %1945 = vmatprep.subr.bf16.mxu0 %v1280
    %1946 = vmatpush1.bf16.msra.mxu0 %v1279
    %1947 = vmatprep.subr.bf16.mxu0 %v1288
    %1948 = vmatpush1.bf16.msra.mxu0 %v1287
    %1949 = vmatprep.subr.bf16.mxu0 %v1296
    %1950 = vmatpush1.bf16.msra.mxu0 %v1295
    %1951 = vmatprep.subr.bf16.mxu0 %v1304
    %1952 = vmatpush1.bf16.msra.mxu0 %v1303
    %1953 = vmatprep.subr.bf16.mxu0 %v1312
    %1954 = vmatpush1.bf16.msra.mxu0 %v1311
    %1955 = vmatprep.subr.bf16.mxu0 %v1320
    %1956 = vmatpush1.bf16.msra.mxu0 %v1319
    %1957 = vmatprep.subr.bf16.mxu0 %v1328
    %1958 = vmatpush1.bf16.msra.mxu0 %v1327
    %1959 = vmatprep.subr.bf16.mxu0 %v1336
    %1960 = vmatpush1.bf16.msra.mxu0 %v1335
    %1961 = vmatprep.subr.bf16.mxu0 %v1344
    %1962 = vmatpush1.bf16.msra.mxu0 %v1343
    %1963 = vmatprep.subr.bf16.mxu0 %v1352
    %1964 = vmatpush1.bf16.msra.mxu0 %v1351
    %1965 = vmatprep.subr.bf16.mxu0 %v1360
    %1966 = vmatpush1.bf16.msra.mxu0 %v1359
    %1967 = vmatprep.subr.bf16.mxu0 %v1368
    %1968 = vmatpush1.bf16.msra.mxu0 %v1367
    %1969 = vmatprep.subr.bf16.mxu0 %v1376
    %1970 = vmatpush1.bf16.msra.mxu0 %v1375
    %1971 = vmatprep.subr.bf16.mxu0 %v1384
    %1972 = vmatpush1.bf16.msra.mxu0 %v1383
    %1973 = vmatprep.subr.bf16.mxu0 %v1392
    %1974 = vmatpush1.bf16.msra.mxu0 %v1391
    %1975 = vmatprep.mubr.bf16.mxu0 %v198
    %1976 = vmatmul.mubr.bf16.gmra.mrb[0].mxu0 %v197
    %v1977 = vpop.f32.mrb[0].mxu0
    %v1978 = vadd.f32 %v478, %v1977
    %v1979 = vpop.f32.mrb[0].mxu0
    %v1980 = vadd.f32 %v482, %v1979
    %v1981 = vpop.f32.mrb[0].mxu0
    %v1982 = vpop.f32.mrb[0].mxu0
    %1983 = vdwg.mxu0
    %1984 = vmatprep.subr.bf16.mxu0 %v1400
    %1985 = vmatpush1.bf16.msra.mxu0 %v1399
    %1986 = vmatprep.subr.bf16.mxu0 %v1408
    %1987 = vmatpush1.bf16.msra.mxu0 %v1407
    %1988 = vmatprep.subr.bf16.mxu0 %v1416
    %1989 = vmatpush1.bf16.msra.mxu0 %v1415
    %1990 = vmatprep.subr.bf16.mxu0 %v1424
    %1991 = vmatpush1.bf16.msra.mxu0 %v1423
    %1992 = vmatprep.subr.bf16.mxu0 %v1432
    %1993 = vmatpush1.bf16.msra.mxu0 %v1431
    %1994 = vmatprep.subr.bf16.mxu0 %v1440
    %1995 = vmatpush1.bf16.msra.mxu0 %v1439
    %1996 = vmatprep.subr.bf16.mxu0 %v1448
    %1997 = vmatpush1.bf16.msra.mxu0 %v1447
    %1998 = vmatprep.subr.bf16.mxu0 %v1456
    %1999 = vmatpush1.bf16.msra.mxu0 %v1455
    %2000 = vmatprep.subr.bf16.mxu0 %v1464
    %2001 = vmatpush1.bf16.msra.mxu0 %v1463
    %2002 = vmatprep.subr.bf16.mxu0 %v1472
    %2003 = vmatpush1.bf16.msra.mxu0 %v1471
    %2004 = vmatprep.subr.bf16.mxu0 %v1480
    %2005 = vmatpush1.bf16.msra.mxu0 %v1479
    %2006 = vmatprep.subr.bf16.mxu0 %v1488
    %2007 = vmatpush1.bf16.msra.mxu0 %v1487
    %2008 = vmatprep.subr.bf16.mxu0 %v1496
    %2009 = vmatpush1.bf16.msra.mxu0 %v1495
    %2010 = vmatprep.subr.bf16.mxu0 %v1504
    %2011 = vmatpush1.bf16.msra.mxu0 %v1503
    %2012 = vmatprep.subr.bf16.mxu0 %v1512
    %2013 = vmatpush1.bf16.msra.mxu0 %v1511
    %2014 = vmatprep.subr.bf16.mxu0 %v1520
    %2015 = vmatpush1.bf16.msra.mxu0 %v1519
    %2016 = vmatprep.mubr.bf16.mxu0 %v200
    %2017 = vmatmul.mubr.bf16.gmra.mrb[0].mxu0 %v199
    %v2018 = vpop.f32.mrb[0].mxu0
    %v2019 = vadd.f32 %v1978, %v2018
    %v2020 = vpop.f32.mrb[0].mxu0
    %v2021 = vadd.f32 %v1980, %v2020
    %v2022 = vpop.f32.mrb[0].mxu0
    %v2023 = vpop.f32.mrb[0].mxu0
    %2024 = vdwg.mxu0
    %2025 = vmatprep.subr.bf16.mxu0 %v1274
    %2026 = vmatpush1.bf16.msra.mxu0 %v1273
    %2027 = vmatprep.subr.bf16.mxu0 %v1282
    %2028 = vmatpush1.bf16.msra.mxu0 %v1281
    %2029 = vmatprep.subr.bf16.mxu0 %v1290
    %2030 = vmatpush1.bf16.msra.mxu0 %v1289
    %2031 = vmatprep.subr.bf16.mxu0 %v1298
    %2032 = vmatpush1.bf16.msra.mxu0 %v1297
    %2033 = vmatprep.subr.bf16.mxu0 %v1306
    %2034 = vmatpush1.bf16.msra.mxu0 %v1305
    %2035 = vmatprep.subr.bf16.mxu0 %v1314
    %2036 = vmatpush1.bf16.msra.mxu0 %v1313
    %2037 = vmatprep.subr.bf16.mxu0 %v1322
    %2038 = vmatpush1.bf16.msra.mxu0 %v1321
    %2039 = vmatprep.subr.bf16.mxu0 %v1330
    %2040 = vmatpush1.bf16.msra.mxu0 %v1329
    %2041 = vmatprep.subr.bf16.mxu0 %v1338
    %2042 = vmatpush1.bf16.msra.mxu0 %v1337
    %2043 = vmatprep.subr.bf16.mxu0 %v1346
    %2044 = vmatpush1.bf16.msra.mxu0 %v1345
    %2045 = vmatprep.subr.bf16.mxu0 %v1354
    %2046 = vmatpush1.bf16.msra.mxu0 %v1353
    %2047 = vmatprep.subr.bf16.mxu0 %v1362
    %2048 = vmatpush1.bf16.msra.mxu0 %v1361
    %2049 = vmatprep.subr.bf16.mxu0 %v1370
    %2050 = vmatpush1.bf16.msra.mxu0 %v1369
    %2051 = vmatprep.subr.bf16.mxu0 %v1378
    %2052 = vmatpush1.bf16.msra.mxu0 %v1377
    %2053 = vmatprep.subr.bf16.mxu0 %v1386
    %2054 = vmatpush1.bf16.msra.mxu0 %v1385
    %2055 = vmatprep.subr.bf16.mxu0 %v1394
    %2056 = vmatpush1.bf16.msra.mxu0 %v1393
    %2057 = vmatprep.mubr.bf16.mxu0 %v198
    %2058 = vmatmul.mubr.bf16.gmra.mrb[0].mxu0 %v197
    %v2059 = vpop.f32.mrb[0].mxu0
    %v2060 = vadd.f32 %v486, %v2059
    %v2061 = vpop.f32.mrb[0].mxu0
    %v2062 = vadd.f32 %v490, %v2061
    %v2063 = vpop.f32.mrb[0].mxu0
    %v2064 = vpop.f32.mrb[0].mxu0
    %2065 = vdwg.mxu0
    %2066 = vmatprep.subr.bf16.mxu0 %v1402
    %2067 = vmatpush1.bf16.msra.mxu0 %v1401
    %2068 = vmatprep.subr.bf16.mxu0 %v1410
    %2069 = vmatpush1.bf16.msra.mxu0 %v1409
    %2070 = vmatprep.subr.bf16.mxu0 %v1418
    %2071 = vmatpush1.bf16.msra.mxu0 %v1417
    %2072 = vmatprep.subr.bf16.mxu0 %v1426
    %2073 = vmatpush1.bf16.msra.mxu0 %v1425
    %2074 = vmatprep.subr.bf16.mxu0 %v1434
    %2075 = vmatpush1.bf16.msra.mxu0 %v1433
    %2076 = vmatprep.subr.bf16.mxu0 %v1442
    %2077 = vmatpush1.bf16.msra.mxu0 %v1441
    %2078 = vmatprep.subr.bf16.mxu0 %v1450
    %2079 = vmatpush1.bf16.msra.mxu0 %v1449
    %2080 = vmatprep.subr.bf16.mxu0 %v1458
    %2081 = vmatpush1.bf16.msra.mxu0 %v1457
    %2082 = vmatprep.subr.bf16.mxu0 %v1466
    %2083 = vmatpush1.bf16.msra.mxu0 %v1465
    %2084 = vmatprep.subr.bf16.mxu0 %v1474
    %2085 = vmatpush1.bf16.msra.mxu0 %v1473
    %2086 = vmatprep.subr.bf16.mxu0 %v1482
    %2087 = vmatpush1.bf16.msra.mxu0 %v1481
    %2088 = vmatprep.subr.bf16.mxu0 %v1490
    %2089 = vmatpush1.bf16.msra.mxu0 %v1489
    %2090 = vmatprep.subr.bf16.mxu0 %v1498
    %2091 = vmatpush1.bf16.msra.mxu0 %v1497
    %2092 = vmatprep.subr.bf16.mxu0 %v1506
    %2093 = vmatpush1.bf16.msra.mxu0 %v1505
    %2094 = vmatprep.subr.bf16.mxu0 %v1514
    %2095 = vmatpush1.bf16.msra.mxu0 %v1513
    %2096 = vmatprep.subr.bf16.mxu0 %v1522
    %2097 = vmatpush1.bf16.msra.mxu0 %v1521
    %2098 = vmatprep.mubr.bf16.mxu0 %v200
    %2099 = vmatmul.mubr.bf16.gmra.mrb[0].mxu0 %v199
    %v2100 = vpop.f32.mrb[0].mxu0
    %v2101 = vadd.f32 %v2060, %v2100
    %v2102 = vpop.f32.mrb[0].mxu0
    %v2103 = vadd.f32 %v2062, %v2102
    %v2104 = vpop.f32.mrb[0].mxu0
    %v2105 = vpop.f32.mrb[0].mxu0
    %2106 = vdwg.mxu0
    %v2115 = vcombine.low %v1855, %v1857
    %v2116 = vcombine.low %v1937, %v1939
    %v2118 = vunpack.c.l.s4 1983009808
    %v2119 = vunpack.c.0.s8 %v2118
    %v2120 = vlaneseq
    %v2121 = vshrl.u32 %v2120, 7
    %v2122 = vsub.s32 %v2119, %v2121
    %v2123 = vrot.slane %v2115, %v2122
    %v2125 = vunpack.c.l.s4 1983009808
    %v2126 = vunpack.c.0.s8 %v2125
    %v2127 = vlaneseq
    %v2128 = vshrl.u32 %v2127, 7
    %v2129 = vsub.s32 %v2126, %v2128
    %v2130 = vrot.slane %v2116, %v2129
    %v2131 = vcombine.low %v2123, %v2130
    %v2132 = vcombine.low %v2019, %v2021
    %v2133 = vcombine.low %v2101, %v2103
    %v2135 = vunpack.c.l.s4 1983009808
    %v2136 = vunpack.c.0.s8 %v2135
    %v2137 = vlaneseq
    %v2138 = vshrl.u32 %v2137, 7
    %v2139 = vsub.s32 %v2136, %v2138
    %v2140 = vrot.slane %v2132, %v2139
    %v2142 = vunpack.c.l.s4 1983009808
    %v2143 = vunpack.c.0.s8 %v2142
    %v2144 = vlaneseq
    %v2145 = vshrl.u32 %v2144, 7
    %v2146 = vsub.s32 %v2143, %v2145
    %v2147 = vrot.slane %v2133, %v2146
    %v2148 = vcombine.low %v2140, %v2147
    %2151 = vst [vmem:[#allocation3] sm:$0xff] %v2131
    %2152 = vst [vmem:[#allocation3 + $0x8] sm:$0xff] %v2148
    %v2153 = vld [vmem:[#allocation3] ss:$2 sm:$0xff]
    %v2154 = vld [vmem:[#allocation15] sm:$0xff]
    %v2155 = vld [vmem:[#allocation15 + $0x8] sm:$0xff]
    %v2156 = vld [vmem:[#allocation15 + $0x10] sm:$0xff]
    %v2157 = vld [vmem:[#allocation15 + $0x18] sm:$0xff]
    %v2158 = vld [vmem:[#allocation15 + $0x20] sm:$0xff]
    %v2159 = vld [vmem:[#allocation15 + $0x28] sm:$0xff]
    %v2160 = vld [vmem:[#allocation15 + $0x30] sm:$0xff]
    %v2161 = vld [vmem:[#allocation15 + $0x38] sm:$0xff]
    %v2162 = vld [vmem:[#allocation15 + $0x40] sm:$0xff]
    %v2163 = vld [vmem:[#allocation15 + $0x48] sm:$0xff]
    %v2164 = vld [vmem:[#allocation15 + $0x50] sm:$0xff]
    %v2165 = vld [vmem:[#allocation15 + $0x58] sm:$0xff]
    %v2166 = vld [vmem:[#allocation15 + $0x60] sm:$0xff]
    %v2167 = vld [vmem:[#allocation15 + $0x68] sm:$0xff]
    %v2168 = vld [vmem:[#allocation15 + $0x70] sm:$0xff]
    %v2169 = vld [vmem:[#allocation15 + $0x78] sm:$0xff]
    %v2170 = vld [vmem:[#allocation15 + $0x80] sm:$0xff]
    %v2171 = vld [vmem:[#allocation15 + $0x88] sm:$0xff]
    %v2172 = vld [vmem:[#allocation15 + $0x90] sm:$0xff]
    %v2173 = vld [vmem:[#allocation15 + $0x98] sm:$0xff]
    %v2174 = vld [vmem:[#allocation15 + $0xa0] sm:$0xff]
    %v2175 = vld [vmem:[#allocation15 + $0xa8] sm:$0xff]
    %v2176 = vld [vmem:[#allocation15 + $0xb0] sm:$0xff]
    %v2177 = vld [vmem:[#allocation15 + $0xb8] sm:$0xff]
    %v2178 = vld [vmem:[#allocation15 + $0xc0] sm:$0xff]
    %v2179 = vld [vmem:[#allocation15 + $0xc8] sm:$0xff]
    %v2180 = vld [vmem:[#allocation15 + $0xd0] sm:$0xff]
    %v2181 = vld [vmem:[#allocation15 + $0xd8] sm:$0xff]
    %v2182 = vld [vmem:[#allocation15 + $0xe0] sm:$0xff]
    %v2183 = vld [vmem:[#allocation15 + $0xe8] sm:$0xff]
    %v2184 = vld [vmem:[#allocation15 + $0xf0] sm:$0xff]
    %v2185 = vld [vmem:[#allocation15 + $0xf8] sm:$0xff]
    %v2186 = vld [vmem:[#allocation15 + $0x100] sm:$0xff]
    %v2187 = vld [vmem:[#allocation15 + $0x108] sm:$0xff]
    %v2188 = vld [vmem:[#allocation15 + $0x110] sm:$0xff]
    %v2189 = vld [vmem:[#allocation15 + $0x118] sm:$0xff]
    %v2190 = vld [vmem:[#allocation15 + $0x120] sm:$0xff]
    %v2191 = vld [vmem:[#allocation15 + $0x128] sm:$0xff]
    %v2192 = vld [vmem:[#allocation15 + $0x130] sm:$0xff]
    %v2193 = vld [vmem:[#allocation15 + $0x138] sm:$0xff]
    %v2194 = vld [vmem:[#allocation15 + $0x140] sm:$0xff]
    %v2195 = vld [vmem:[#allocation15 + $0x148] sm:$0xff]
    %v2196 = vld [vmem:[#allocation15 + $0x150] sm:$0xff]
    %v2197 = vld [vmem:[#allocation15 + $0x158] sm:$0xff]
    %v2198 = vld [vmem:[#allocation15 + $0x160] sm:$0xff]
    %v2199 = vld [vmem:[#allocation15 + $0x168] sm:$0xff]
    %v2200 = vld [vmem:[#allocation15 + $0x170] sm:$0xff]
    %v2201 = vld [vmem:[#allocation15 + $0x178] sm:$0xff]
    %v2202 = vld [vmem:[#allocation15 + $0x180] sm:$0xff]
    %v2203 = vld [vmem:[#allocation15 + $0x188] sm:$0xff]
    %v2204 = vld [vmem:[#allocation15 + $0x190] sm:$0xff]
    %v2205 = vld [vmem:[#allocation15 + $0x198] sm:$0xff]
    %v2206 = vld [vmem:[#allocation15 + $0x1a0] sm:$0xff]
    %v2207 = vld [vmem:[#allocation15 + $0x1a8] sm:$0xff]
    %v2208 = vld [vmem:[#allocation15 + $0x1b0] sm:$0xff]
    %v2209 = vld [vmem:[#allocation15 + $0x1b8] sm:$0xff]
    %v2210 = vld [vmem:[#allocation15 + $0x1c0] sm:$0xff]
    %v2211 = vld [vmem:[#allocation15 + $0x1c8] sm:$0xff]
    %v2212 = vld [vmem:[#allocation15 + $0x1d0] sm:$0xff]
    %v2213 = vld [vmem:[#allocation15 + $0x1d8] sm:$0xff]
    %v2214 = vld [vmem:[#allocation15 + $0x1e0] sm:$0xff]
    %v2215 = vld [vmem:[#allocation15 + $0x1e8] sm:$0xff]
    %v2216 = vld [vmem:[#allocation15 + $0x1f0] sm:$0xff]
    %v2217 = vld [vmem:[#allocation15 + $0x1f8] sm:$0xff]
    %v2218 = vld [vmem:[#allocation15 + $0x200] sm:$0xff]
    %v2219 = vld [vmem:[#allocation15 + $0x208] sm:$0xff]
    %v2220 = vld [vmem:[#allocation15 + $0x210] sm:$0xff]
    %v2221 = vld [vmem:[#allocation15 + $0x218] sm:$0xff]
    %v2222 = vld [vmem:[#allocation15 + $0x220] sm:$0xff]
    %v2223 = vld [vmem:[#allocation15 + $0x228] sm:$0xff]
    %v2224 = vld [vmem:[#allocation15 + $0x230] sm:$0xff]
    %v2225 = vld [vmem:[#allocation15 + $0x238] sm:$0xff]
    %v2226 = vld [vmem:[#allocation15 + $0x240] sm:$0xff]
    %v2227 = vld [vmem:[#allocation15 + $0x248] sm:$0xff]
    %v2228 = vld [vmem:[#allocation15 + $0x250] sm:$0xff]
    %v2229 = vld [vmem:[#allocation15 + $0x258] sm:$0xff]
    %v2230 = vld [vmem:[#allocation15 + $0x260] sm:$0xff]
    %v2231 = vld [vmem:[#allocation15 + $0x268] sm:$0xff]
    %v2232 = vld [vmem:[#allocation15 + $0x270] sm:$0xff]
    %v2233 = vld [vmem:[#allocation15 + $0x278] sm:$0xff]
    %v2234 = vld [vmem:[#allocation15 + $0x280] sm:$0xff]
    %v2235 = vld [vmem:[#allocation15 + $0x288] sm:$0xff]
    %v2236 = vld [vmem:[#allocation15 + $0x290] sm:$0xff]
    %v2237 = vld [vmem:[#allocation15 + $0x298] sm:$0xff]
    %v2238 = vld [vmem:[#allocation15 + $0x2a0] sm:$0xff]
    %v2239 = vld [vmem:[#allocation15 + $0x2a8] sm:$0xff]
    %v2240 = vld [vmem:[#allocation15 + $0x2b0] sm:$0xff]
    %v2241 = vld [vmem:[#allocation15 + $0x2b8] sm:$0xff]
    %v2242 = vld [vmem:[#allocation15 + $0x2c0] sm:$0xff]
    %v2243 = vld [vmem:[#allocation15 + $0x2c8] sm:$0xff]
    %v2244 = vld [vmem:[#allocation15 + $0x2d0] sm:$0xff]
    %v2245 = vld [vmem:[#allocation15 + $0x2d8] sm:$0xff]
    %v2246 = vld [vmem:[#allocation15 + $0x2e0] sm:$0xff]
    %v2247 = vld [vmem:[#allocation15 + $0x2e8] sm:$0xff]
    %v2248 = vld [vmem:[#allocation15 + $0x2f0] sm:$0xff]
    %v2249 = vld [vmem:[#allocation15 + $0x2f8] sm:$0xff]
    %v2250 = vld [vmem:[#allocation15 + $0x300] sm:$0xff]
    %v2251 = vld [vmem:[#allocation15 + $0x308] sm:$0xff]
    %v2252 = vld [vmem:[#allocation15 + $0x310] sm:$0xff]
    %v2253 = vld [vmem:[#allocation15 + $0x318] sm:$0xff]
    %v2254 = vld [vmem:[#allocation15 + $0x320] sm:$0xff]
    %v2255 = vld [vmem:[#allocation15 + $0x328] sm:$0xff]
    %v2256 = vld [vmem:[#allocation15 + $0x330] sm:$0xff]
    %v2257 = vld [vmem:[#allocation15 + $0x338] sm:$0xff]
    %v2258 = vld [vmem:[#allocation15 + $0x340] sm:$0xff]
    %v2259 = vld [vmem:[#allocation15 + $0x348] sm:$0xff]
    %v2260 = vld [vmem:[#allocation15 + $0x350] sm:$0xff]
    %v2261 = vld [vmem:[#allocation15 + $0x358] sm:$0xff]
    %v2262 = vld [vmem:[#allocation15 + $0x360] sm:$0xff]
    %v2263 = vld [vmem:[#allocation15 + $0x368] sm:$0xff]
    %v2264 = vld [vmem:[#allocation15 + $0x370] sm:$0xff]
    %v2265 = vld [vmem:[#allocation15 + $0x378] sm:$0xff]
    %v2266 = vld [vmem:[#allocation15 + $0x380] sm:$0xff]
    %v2267 = vld [vmem:[#allocation15 + $0x388] sm:$0xff]
    %v2268 = vld [vmem:[#allocation15 + $0x390] sm:$0xff]
    %v2269 = vld [vmem:[#allocation15 + $0x398] sm:$0xff]
    %v2270 = vld [vmem:[#allocation15 + $0x3a0] sm:$0xff]
    %v2271 = vld [vmem:[#allocation15 + $0x3a8] sm:$0xff]
    %v2272 = vld [vmem:[#allocation15 + $0x3b0] sm:$0xff]
    %v2273 = vld [vmem:[#allocation15 + $0x3b8] sm:$0xff]
    %v2274 = vld [vmem:[#allocation15 + $0x3c0] sm:$0xff]
    %v2275 = vld [vmem:[#allocation15 + $0x3c8] sm:$0xff]
    %v2276 = vld [vmem:[#allocation15 + $0x3d0] sm:$0xff]
    %v2277 = vld [vmem:[#allocation15 + $0x3d8] sm:$0xff]
    %v2278 = vld [vmem:[#allocation15 + $0x3e0] sm:$0xff]
    %v2279 = vld [vmem:[#allocation15 + $0x3e8] sm:$0xff]
    %v2280 = vld [vmem:[#allocation15 + $0x3f0] sm:$0xff]
    %v2281 = vld [vmem:[#allocation15 + $0x3f8] sm:$0xff]
    %v2410 = vunpack.c.l.b16 %v2154
    %v2411 = vunpack.c.h.b16 %v2154
    %v2412 = vunpack.c.l.b16 %v2155
    %v2413 = vunpack.c.h.b16 %v2155
    %v2414 = vunpack.c.l.b16 %v2156
    %v2415 = vunpack.c.h.b16 %v2156
    %v2416 = vunpack.c.l.b16 %v2157
    %v2417 = vunpack.c.h.b16 %v2157
    %v2418 = vunpack.c.l.b16 %v2158
    %v2419 = vunpack.c.h.b16 %v2158
    %v2420 = vunpack.c.l.b16 %v2159
    %v2421 = vunpack.c.h.b16 %v2159
    %v2422 = vunpack.c.l.b16 %v2160
    %v2423 = vunpack.c.h.b16 %v2160
    %v2424 = vunpack.c.l.b16 %v2161
    %v2425 = vunpack.c.h.b16 %v2161
    %v2426 = vunpack.c.l.b16 %v2162
    %v2427 = vunpack.c.h.b16 %v2162
    %v2428 = vunpack.c.l.b16 %v2163
    %v2429 = vunpack.c.h.b16 %v2163
    %v2430 = vunpack.c.l.b16 %v2164
    %v2431 = vunpack.c.h.b16 %v2164
    %v2432 = vunpack.c.l.b16 %v2165
    %v2433 = vunpack.c.h.b16 %v2165
    %v2434 = vunpack.c.l.b16 %v2166
    %v2435 = vunpack.c.h.b16 %v2166
    %v2436 = vunpack.c.l.b16 %v2167
    %v2437 = vunpack.c.h.b16 %v2167
    %v2438 = vunpack.c.l.b16 %v2168
    %v2439 = vunpack.c.h.b16 %v2168
    %v2440 = vunpack.c.l.b16 %v2169
    %v2441 = vunpack.c.h.b16 %v2169
    %v2442 = vunpack.c.l.b16 %v2170
    %v2443 = vunpack.c.h.b16 %v2170
    %v2444 = vunpack.c.l.b16 %v2171
    %v2445 = vunpack.c.h.b16 %v2171
    %v2446 = vunpack.c.l.b16 %v2172
    %v2447 = vunpack.c.h.b16 %v2172
    %v2448 = vunpack.c.l.b16 %v2173
    %v2449 = vunpack.c.h.b16 %v2173
    %v2450 = vunpack.c.l.b16 %v2174
    %v2451 = vunpack.c.h.b16 %v2174
    %v2452 = vunpack.c.l.b16 %v2175
    %v2453 = vunpack.c.h.b16 %v2175
    %v2454 = vunpack.c.l.b16 %v2176
    %v2455 = vunpack.c.h.b16 %v2176
    %v2456 = vunpack.c.l.b16 %v2177
    %v2457 = vunpack.c.h.b16 %v2177
    %v2458 = vunpack.c.l.b16 %v2178
    %v2459 = vunpack.c.h.b16 %v2178
    %v2460 = vunpack.c.l.b16 %v2179
    %v2461 = vunpack.c.h.b16 %v2179
    %v2462 = vunpack.c.l.b16 %v2180
    %v2463 = vunpack.c.h.b16 %v2180
    %v2464 = vunpack.c.l.b16 %v2181
    %v2465 = vunpack.c.h.b16 %v2181
    %v2466 = vunpack.c.l.b16 %v2182
    %v2467 = vunpack.c.h.b16 %v2182
    %v2468 = vunpack.c.l.b16 %v2183
    %v2469 = vunpack.c.h.b16 %v2183
    %v2470 = vunpack.c.l.b16 %v2184
    %v2471 = vunpack.c.h.b16 %v2184
    %v2472 = vunpack.c.l.b16 %v2185
    %v2473 = vunpack.c.h.b16 %v2185
    %v2474 = vunpack.c.l.b16 %v2186
    %v2475 = vunpack.c.h.b16 %v2186
    %v2476 = vunpack.c.l.b16 %v2187
    %v2477 = vunpack.c.h.b16 %v2187
    %v2478 = vunpack.c.l.b16 %v2188
    %v2479 = vunpack.c.h.b16 %v2188
    %v2480 = vunpack.c.l.b16 %v2189
    %v2481 = vunpack.c.h.b16 %v2189
    %v2482 = vunpack.c.l.b16 %v2190
    %v2483 = vunpack.c.h.b16 %v2190
    %v2484 = vunpack.c.l.b16 %v2191
    %v2485 = vunpack.c.h.b16 %v2191
    %v2486 = vunpack.c.l.b16 %v2192
    %v2487 = vunpack.c.h.b16 %v2192
    %v2488 = vunpack.c.l.b16 %v2193
    %v2489 = vunpack.c.h.b16 %v2193
    %v2490 = vunpack.c.l.b16 %v2194
    %v2491 = vunpack.c.h.b16 %v2194
    %v2492 = vunpack.c.l.b16 %v2195
    %v2493 = vunpack.c.h.b16 %v2195
    %v2494 = vunpack.c.l.b16 %v2196
    %v2495 = vunpack.c.h.b16 %v2196
    %v2496 = vunpack.c.l.b16 %v2197
    %v2497 = vunpack.c.h.b16 %v2197
    %v2498 = vunpack.c.l.b16 %v2198
    %v2499 = vunpack.c.h.b16 %v2198
    %v2500 = vunpack.c.l.b16 %v2199
    %v2501 = vunpack.c.h.b16 %v2199
    %v2502 = vunpack.c.l.b16 %v2200
    %v2503 = vunpack.c.h.b16 %v2200
    %v2504 = vunpack.c.l.b16 %v2201
    %v2505 = vunpack.c.h.b16 %v2201
    %v2506 = vunpack.c.l.b16 %v2202
    %v2507 = vunpack.c.h.b16 %v2202
    %v2508 = vunpack.c.l.b16 %v2203
    %v2509 = vunpack.c.h.b16 %v2203
    %v2510 = vunpack.c.l.b16 %v2204
    %v2511 = vunpack.c.h.b16 %v2204
    %v2512 = vunpack.c.l.b16 %v2205
    %v2513 = vunpack.c.h.b16 %v2205
    %v2514 = vunpack.c.l.b16 %v2206
    %v2515 = vunpack.c.h.b16 %v2206
    %v2516 = vunpack.c.l.b16 %v2207
    %v2517 = vunpack.c.h.b16 %v2207
    %v2518 = vunpack.c.l.b16 %v2208
    %v2519 = vunpack.c.h.b16 %v2208
    %v2520 = vunpack.c.l.b16 %v2209
    %v2521 = vunpack.c.h.b16 %v2209
    %v2522 = vunpack.c.l.b16 %v2210
    %v2523 = vunpack.c.h.b16 %v2210
    %v2524 = vunpack.c.l.b16 %v2211
    %v2525 = vunpack.c.h.b16 %v2211
    %v2526 = vunpack.c.l.b16 %v2212
    %v2527 = vunpack.c.h.b16 %v2212
    %v2528 = vunpack.c.l.b16 %v2213
    %v2529 = vunpack.c.h.b16 %v2213
    %v2530 = vunpack.c.l.b16 %v2214
    %v2531 = vunpack.c.h.b16 %v2214
    %v2532 = vunpack.c.l.b16 %v2215
    %v2533 = vunpack.c.h.b16 %v2215
    %v2534 = vunpack.c.l.b16 %v2216
    %v2535 = vunpack.c.h.b16 %v2216
    %v2536 = vunpack.c.l.b16 %v2217
    %v2537 = vunpack.c.h.b16 %v2217
    %v2538 = vunpack.c.l.b16 %v2218
    %v2539 = vunpack.c.h.b16 %v2218
    %v2540 = vunpack.c.l.b16 %v2219
    %v2541 = vunpack.c.h.b16 %v2219
    %v2542 = vunpack.c.l.b16 %v2220
    %v2543 = vunpack.c.h.b16 %v2220
    %v2544 = vunpack.c.l.b16 %v2221
    %v2545 = vunpack.c.h.b16 %v2221
    %v2546 = vunpack.c.l.b16 %v2222
    %v2547 = vunpack.c.h.b16 %v2222
    %v2548 = vunpack.c.l.b16 %v2223
    %v2549 = vunpack.c.h.b16 %v2223
    %v2550 = vunpack.c.l.b16 %v2224
    %v2551 = vunpack.c.h.b16 %v2224
    %v2552 = vunpack.c.l.b16 %v2225
    %v2553 = vunpack.c.h.b16 %v2225
    %v2554 = vunpack.c.l.b16 %v2226
    %v2555 = vunpack.c.h.b16 %v2226
    %v2556 = vunpack.c.l.b16 %v2227
    %v2557 = vunpack.c.h.b16 %v2227
    %v2558 = vunpack.c.l.b16 %v2228
    %v2559 = vunpack.c.h.b16 %v2228
    %v2560 = vunpack.c.l.b16 %v2229
    %v2561 = vunpack.c.h.b16 %v2229
    %v2562 = vunpack.c.l.b16 %v2230
    %v2563 = vunpack.c.h.b16 %v2230
    %v2564 = vunpack.c.l.b16 %v2231
    %v2565 = vunpack.c.h.b16 %v2231
    %v2566 = vunpack.c.l.b16 %v2232
    %v2567 = vunpack.c.h.b16 %v2232
    %v2568 = vunpack.c.l.b16 %v2233
    %v2569 = vunpack.c.h.b16 %v2233
    %v2570 = vunpack.c.l.b16 %v2234
    %v2571 = vunpack.c.h.b16 %v2234
    %v2572 = vunpack.c.l.b16 %v2235
    %v2573 = vunpack.c.h.b16 %v2235
    %v2574 = vunpack.c.l.b16 %v2236
    %v2575 = vunpack.c.h.b16 %v2236
    %v2576 = vunpack.c.l.b16 %v2237
    %v2577 = vunpack.c.h.b16 %v2237
    %v2578 = vunpack.c.l.b16 %v2238
    %v2579 = vunpack.c.h.b16 %v2238
    %v2580 = vunpack.c.l.b16 %v2239
    %v2581 = vunpack.c.h.b16 %v2239
    %v2582 = vunpack.c.l.b16 %v2240
    %v2583 = vunpack.c.h.b16 %v2240
    %v2584 = vunpack.c.l.b16 %v2241
    %v2585 = vunpack.c.h.b16 %v2241
    %v2586 = vunpack.c.l.b16 %v2242
    %v2587 = vunpack.c.h.b16 %v2242
    %v2588 = vunpack.c.l.b16 %v2243
    %v2589 = vunpack.c.h.b16 %v2243
    %v2590 = vunpack.c.l.b16 %v2244
    %v2591 = vunpack.c.h.b16 %v2244
    %v2592 = vunpack.c.l.b16 %v2245
    %v2593 = vunpack.c.h.b16 %v2245
    %v2594 = vunpack.c.l.b16 %v2246
    %v2595 = vunpack.c.h.b16 %v2246
    %v2596 = vunpack.c.l.b16 %v2247
    %v2597 = vunpack.c.h.b16 %v2247
    %v2598 = vunpack.c.l.b16 %v2248
    %v2599 = vunpack.c.h.b16 %v2248
    %v2600 = vunpack.c.l.b16 %v2249
    %v2601 = vunpack.c.h.b16 %v2249
    %v2602 = vunpack.c.l.b16 %v2250
    %v2603 = vunpack.c.h.b16 %v2250
    %v2604 = vunpack.c.l.b16 %v2251
    %v2605 = vunpack.c.h.b16 %v2251
    %v2606 = vunpack.c.l.b16 %v2252
    %v2607 = vunpack.c.h.b16 %v2252
    %v2608 = vunpack.c.l.b16 %v2253
    %v2609 = vunpack.c.h.b16 %v2253
    %v2610 = vunpack.c.l.b16 %v2254
    %v2611 = vunpack.c.h.b16 %v2254
    %v2612 = vunpack.c.l.b16 %v2255
    %v2613 = vunpack.c.h.b16 %v2255
    %v2614 = vunpack.c.l.b16 %v2256
    %v2615 = vunpack.c.h.b16 %v2256
    %v2616 = vunpack.c.l.b16 %v2257
    %v2617 = vunpack.c.h.b16 %v2257
    %v2618 = vunpack.c.l.b16 %v2258
    %v2619 = vunpack.c.h.b16 %v2258
    %v2620 = vunpack.c.l.b16 %v2259
    %v2621 = vunpack.c.h.b16 %v2259
    %v2622 = vunpack.c.l.b16 %v2260
    %v2623 = vunpack.c.h.b16 %v2260
    %v2624 = vunpack.c.l.b16 %v2261
    %v2625 = vunpack.c.h.b16 %v2261
    %v2626 = vunpack.c.l.b16 %v2262
    %v2627 = vunpack.c.h.b16 %v2262
    %v2628 = vunpack.c.l.b16 %v2263
    %v2629 = vunpack.c.h.b16 %v2263
    %v2630 = vunpack.c.l.b16 %v2264
    %v2631 = vunpack.c.h.b16 %v2264
    %v2632 = vunpack.c.l.b16 %v2265
    %v2633 = vunpack.c.h.b16 %v2265
    %v2634 = vunpack.c.l.b16 %v2266
    %v2635 = vunpack.c.h.b16 %v2266
    %v2636 = vunpack.c.l.b16 %v2267
    %v2637 = vunpack.c.h.b16 %v2267
    %v2638 = vunpack.c.l.b16 %v2268
    %v2639 = vunpack.c.h.b16 %v2268
    %v2640 = vunpack.c.l.b16 %v2269
    %v2641 = vunpack.c.h.b16 %v2269
    %v2642 = vunpack.c.l.b16 %v2270
    %v2643 = vunpack.c.h.b16 %v2270
    %v2644 = vunpack.c.l.b16 %v2271
    %v2645 = vunpack.c.h.b16 %v2271
    %v2646 = vunpack.c.l.b16 %v2272
    %v2647 = vunpack.c.h.b16 %v2272
    %v2648 = vunpack.c.l.b16 %v2273
    %v2649 = vunpack.c.h.b16 %v2273
    %v2650 = vunpack.c.l.b16 %v2274
    %v2651 = vunpack.c.h.b16 %v2274
    %v2652 = vunpack.c.l.b16 %v2275
    %v2653 = vunpack.c.h.b16 %v2275
    %v2654 = vunpack.c.l.b16 %v2276
    %v2655 = vunpack.c.h.b16 %v2276
    %v2656 = vunpack.c.l.b16 %v2277
    %v2657 = vunpack.c.h.b16 %v2277
    %v2658 = vunpack.c.l.b16 %v2278
    %v2659 = vunpack.c.h.b16 %v2278
    %v2660 = vunpack.c.l.b16 %v2279
    %v2661 = vunpack.c.h.b16 %v2279
    %v2662 = vunpack.c.l.b16 %v2280
    %v2663 = vunpack.c.h.b16 %v2280
    %v2664 = vunpack.c.l.b16 %v2281
    %v2665 = vunpack.c.h.b16 %v2281
    %v2666 = vpack.c.b16 %v2418, %v2410
    %v2667 = vpack.c.b16 %v2419, %v2411
    %v2668 = vpack.c.b16 %v2420, %v2412
    %v2669 = vpack.c.b16 %v2421, %v2413
    %v2670 = vpack.c.b16 %v2422, %v2414
    %v2671 = vpack.c.b16 %v2423, %v2415
    %v2672 = vpack.c.b16 %v2424, %v2416
    %v2673 = vpack.c.b16 %v2425, %v2417
    %v2674 = vpack.c.b16 %v2434, %v2426
    %v2675 = vpack.c.b16 %v2435, %v2427
    %v2676 = vpack.c.b16 %v2436, %v2428
    %v2677 = vpack.c.b16 %v2437, %v2429
    %v2678 = vpack.c.b16 %v2438, %v2430
    %v2679 = vpack.c.b16 %v2439, %v2431
    %v2680 = vpack.c.b16 %v2440, %v2432
    %v2681 = vpack.c.b16 %v2441, %v2433
    %v2682 = vpack.c.b16 %v2450, %v2442
    %v2683 = vpack.c.b16 %v2451, %v2443
    %v2684 = vpack.c.b16 %v2452, %v2444
    %v2685 = vpack.c.b16 %v2453, %v2445
    %v2686 = vpack.c.b16 %v2454, %v2446
    %v2687 = vpack.c.b16 %v2455, %v2447
    %v2688 = vpack.c.b16 %v2456, %v2448
    %v2689 = vpack.c.b16 %v2457, %v2449
    %v2690 = vpack.c.b16 %v2466, %v2458
    %v2691 = vpack.c.b16 %v2467, %v2459
    %v2692 = vpack.c.b16 %v2468, %v2460
    %v2693 = vpack.c.b16 %v2469, %v2461
    %v2694 = vpack.c.b16 %v2470, %v2462
    %v2695 = vpack.c.b16 %v2471, %v2463
    %v2696 = vpack.c.b16 %v2472, %v2464
    %v2697 = vpack.c.b16 %v2473, %v2465
    %v2698 = vpack.c.b16 %v2482, %v2474
    %v2699 = vpack.c.b16 %v2483, %v2475
    %v2700 = vpack.c.b16 %v2484, %v2476
    %v2701 = vpack.c.b16 %v2485, %v2477
    %v2702 = vpack.c.b16 %v2486, %v2478
    %v2703 = vpack.c.b16 %v2487, %v2479
    %v2704 = vpack.c.b16 %v2488, %v2480
    %v2705 = vpack.c.b16 %v2489, %v2481
    %v2706 = vpack.c.b16 %v2498, %v2490
    %v2707 = vpack.c.b16 %v2499, %v2491
    %v2708 = vpack.c.b16 %v2500, %v2492
    %v2709 = vpack.c.b16 %v2501, %v2493
    %v2710 = vpack.c.b16 %v2502, %v2494
    %v2711 = vpack.c.b16 %v2503, %v2495
    %v2712 = vpack.c.b16 %v2504, %v2496
    %v2713 = vpack.c.b16 %v2505, %v2497
    %v2714 = vpack.c.b16 %v2514, %v2506
    %v2715 = vpack.c.b16 %v2515, %v2507
    %v2716 = vpack.c.b16 %v2516, %v2508
    %v2717 = vpack.c.b16 %v2517, %v2509
    %v2718 = vpack.c.b16 %v2518, %v2510
    %v2719 = vpack.c.b16 %v2519, %v2511
    %v2720 = vpack.c.b16 %v2520, %v2512
    %v2721 = vpack.c.b16 %v2521, %v2513
    %v2722 = vpack.c.b16 %v2530, %v2522
    %v2723 = vpack.c.b16 %v2531, %v2523
    %v2724 = vpack.c.b16 %v2532, %v2524
    %v2725 = vpack.c.b16 %v2533, %v2525
    %v2726 = vpack.c.b16 %v2534, %v2526
    %v2727 = vpack.c.b16 %v2535, %v2527
    %v2728 = vpack.c.b16 %v2536, %v2528
    %v2729 = vpack.c.b16 %v2537, %v2529
    %v2730 = vpack.c.b16 %v2546, %v2538
    %v2731 = vpack.c.b16 %v2547, %v2539
    %v2732 = vpack.c.b16 %v2548, %v2540
    %v2733 = vpack.c.b16 %v2549, %v2541
    %v2734 = vpack.c.b16 %v2550, %v2542
    %v2735 = vpack.c.b16 %v2551, %v2543
    %v2736 = vpack.c.b16 %v2552, %v2544
    %v2737 = vpack.c.b16 %v2553, %v2545
    %v2738 = vpack.c.b16 %v2562, %v2554
    %v2739 = vpack.c.b16 %v2563, %v2555
    %v2740 = vpack.c.b16 %v2564, %v2556
    %v2741 = vpack.c.b16 %v2565, %v2557
    %v2742 = vpack.c.b16 %v2566, %v2558
    %v2743 = vpack.c.b16 %v2567, %v2559
    %v2744 = vpack.c.b16 %v2568, %v2560
    %v2745 = vpack.c.b16 %v2569, %v2561
    %v2746 = vpack.c.b16 %v2578, %v2570
    %v2747 = vpack.c.b16 %v2579, %v2571
    %v2748 = vpack.c.b16 %v2580, %v2572
    %v2749 = vpack.c.b16 %v2581, %v2573
    %v2750 = vpack.c.b16 %v2582, %v2574
    %v2751 = vpack.c.b16 %v2583, %v2575
    %v2752 = vpack.c.b16 %v2584, %v2576
    %v2753 = vpack.c.b16 %v2585, %v2577
    %v2754 = vpack.c.b16 %v2594, %v2586
    %v2755 = vpack.c.b16 %v2595, %v2587
    %v2756 = vpack.c.b16 %v2596, %v2588
    %v2757 = vpack.c.b16 %v2597, %v2589
    %v2758 = vpack.c.b16 %v2598, %v2590
    %v2759 = vpack.c.b16 %v2599, %v2591
    %v2760 = vpack.c.b16 %v2600, %v2592
    %v2761 = vpack.c.b16 %v2601, %v2593
    %v2762 = vpack.c.b16 %v2610, %v2602
    %v2763 = vpack.c.b16 %v2611, %v2603
    %v2764 = vpack.c.b16 %v2612, %v2604
    %v2765 = vpack.c.b16 %v2613, %v2605
    %v2766 = vpack.c.b16 %v2614, %v2606
    %v2767 = vpack.c.b16 %v2615, %v2607
    %v2768 = vpack.c.b16 %v2616, %v2608
    %v2769 = vpack.c.b16 %v2617, %v2609
    %v2770 = vpack.c.b16 %v2626, %v2618
    %v2771 = vpack.c.b16 %v2627, %v2619
    %v2772 = vpack.c.b16 %v2628, %v2620
    %v2773 = vpack.c.b16 %v2629, %v2621
    %v2774 = vpack.c.b16 %v2630, %v2622
    %v2775 = vpack.c.b16 %v2631, %v2623
    %v2776 = vpack.c.b16 %v2632, %v2624
    %v2777 = vpack.c.b16 %v2633, %v2625
    %v2778 = vpack.c.b16 %v2642, %v2634
    %v2779 = vpack.c.b16 %v2643, %v2635
    %v2780 = vpack.c.b16 %v2644, %v2636
    %v2781 = vpack.c.b16 %v2645, %v2637
    %v2782 = vpack.c.b16 %v2646, %v2638
    %v2783 = vpack.c.b16 %v2647, %v2639
    %v2784 = vpack.c.b16 %v2648, %v2640
    %v2785 = vpack.c.b16 %v2649, %v2641
    %v2786 = vpack.c.b16 %v2658, %v2650
    %v2787 = vpack.c.b16 %v2659, %v2651
    %v2788 = vpack.c.b16 %v2660, %v2652
    %v2789 = vpack.c.b16 %v2661, %v2653
    %v2790 = vpack.c.b16 %v2662, %v2654
    %v2791 = vpack.c.b16 %v2663, %v2655
    %v2792 = vpack.c.b16 %v2664, %v2656
    %v2793 = vpack.c.b16 %v2665, %v2657
    %2922 = vmatprep.subr.bf16.mxu0 %v2667
    %2923 = vmatpush1.bf16.msra.mxu0 %v2666
    %2924 = vmatprep.subr.bf16.mxu0 %v2675
    %2925 = vmatpush1.bf16.msra.mxu0 %v2674
    %2926 = vmatprep.subr.bf16.mxu0 %v2683
    %2927 = vmatpush1.bf16.msra.mxu0 %v2682
    %2928 = vmatprep.subr.bf16.mxu0 %v2691
    %2929 = vmatpush1.bf16.msra.mxu0 %v2690
    %2930 = vmatprep.subr.bf16.mxu0 %v2699
    %2931 = vmatpush1.bf16.msra.mxu0 %v2698
    %2932 = vmatprep.subr.bf16.mxu0 %v2707
    %2933 = vmatpush1.bf16.msra.mxu0 %v2706
    %2934 = vmatprep.subr.bf16.mxu0 %v2715
    %2935 = vmatpush1.bf16.msra.mxu0 %v2714
    %2936 = vmatprep.subr.bf16.mxu0 %v2723
    %2937 = vmatpush1.bf16.msra.mxu0 %v2722
    %2938 = vmatprep.subr.bf16.mxu0 %v2731
    %2939 = vmatpush1.bf16.msra.mxu0 %v2730
    %2940 = vmatprep.subr.bf16.mxu0 %v2739
    %2941 = vmatpush1.bf16.msra.mxu0 %v2738
    %2942 = vmatprep.subr.bf16.mxu0 %v2747
    %2943 = vmatpush1.bf16.msra.mxu0 %v2746
    %2944 = vmatprep.subr.bf16.mxu0 %v2755
    %2945 = vmatpush1.bf16.msra.mxu0 %v2754
    %2946 = vmatprep.subr.bf16.mxu0 %v2763
    %2947 = vmatpush1.bf16.msra.mxu0 %v2762
    %2948 = vmatprep.subr.bf16.mxu0 %v2771
    %2949 = vmatpush1.bf16.msra.mxu0 %v2770
    %2950 = vmatprep.subr.bf16.mxu0 %v2779
    %2951 = vmatpush1.bf16.msra.mxu0 %v2778
    %2952 = vmatprep.subr.bf16.mxu0 %v2787
    %2953 = vmatpush1.bf16.msra.mxu0 %v2786
    %2954 = vmatprep.mubr.bf16.mxu0 0
    %2955 = vmatmul.mubr.bf16.gmra.mrb[0].mxu0 0
    %v2956 = vpop.f32.mrb[0].mxu0
    %v2957 = vadd.f32 0.0, %v2956
    %v2958 = vpop.f32.mrb[0].mxu0
    %v2959 = vadd.f32 0.0, %v2958
    %v2960 = vpop.f32.mrb[0].mxu0
    %v2961 = vpop.f32.mrb[0].mxu0
    %2962 = vdwg.mxu0
    %2963 = vmatprep.subr.bf16.mxu0 %v2669
    %2964 = vmatpush1.bf16.msra.mxu0 %v2668
    %2965 = vmatprep.subr.bf16.mxu0 %v2677
    %2966 = vmatpush1.bf16.msra.mxu0 %v2676
    %2967 = vmatprep.subr.bf16.mxu0 %v2685
    %2968 = vmatpush1.bf16.msra.mxu0 %v2684
    %2969 = vmatprep.subr.bf16.mxu0 %v2693
    %2970 = vmatpush1.bf16.msra.mxu0 %v2692
    %2971 = vmatprep.subr.bf16.mxu0 %v2701
    %2972 = vmatpush1.bf16.msra.mxu0 %v2700
    %2973 = vmatprep.subr.bf16.mxu0 %v2709
    %2974 = vmatpush1.bf16.msra.mxu0 %v2708
    %2975 = vmatprep.subr.bf16.mxu0 %v2717
    %2976 = vmatpush1.bf16.msra.mxu0 %v2716
    %2977 = vmatprep.subr.bf16.mxu0 %v2725
    %2978 = vmatpush1.bf16.msra.mxu0 %v2724
    %2979 = vmatprep.subr.bf16.mxu0 %v2733
    %2980 = vmatpush1.bf16.msra.mxu0 %v2732
    %2981 = vmatprep.subr.bf16.mxu0 %v2741
    %2982 = vmatpush1.bf16.msra.mxu0 %v2740
    %2983 = vmatprep.subr.bf16.mxu0 %v2749
    %2984 = vmatpush1.bf16.msra.mxu0 %v2748
    %2985 = vmatprep.subr.bf16.mxu0 %v2757
    %2986 = vmatpush1.bf16.msra.mxu0 %v2756
    %2987 = vmatprep.subr.bf16.mxu0 %v2765
    %2988 = vmatpush1.bf16.msra.mxu0 %v2764
    %2989 = vmatprep.subr.bf16.mxu0 %v2773
    %2990 = vmatpush1.bf16.msra.mxu0 %v2772
    %2991 = vmatprep.subr.bf16.mxu0 %v2781
    %2992 = vmatpush1.bf16.msra.mxu0 %v2780
    %2993 = vmatprep.subr.bf16.mxu0 %v2789
    %2994 = vmatpush1.bf16.msra.mxu0 %v2788
    %2995 = vmatprep.mubr.bf16.mxu0 0
    %2996 = vmatmul.mubr.bf16.gmra.mrb[0].mxu0 0
    %v2997 = vpop.f32.mrb[0].mxu0
    %v2998 = vadd.f32 0.0, %v2997
    %v2999 = vpop.f32.mrb[0].mxu0
    %v3000 = vadd.f32 0.0, %v2999
    %v3001 = vpop.f32.mrb[0].mxu0
    %v3002 = vpop.f32.mrb[0].mxu0
    %3003 = vdwg.mxu0
    %3004 = vmatprep.subr.bf16.mxu0 %v2671
    %3005 = vmatpush1.bf16.msra.mxu0 %v2670
    %3006 = vmatprep.subr.bf16.mxu0 %v2679
    %3007 = vmatpush1.bf16.msra.mxu0 %v2678
    %3008 = vmatprep.subr.bf16.mxu0 %v2687
    %3009 = vmatpush1.bf16.msra.mxu0 %v2686
    %3010 = vmatprep.subr.bf16.mxu0 %v2695
    %3011 = vmatpush1.bf16.msra.mxu0 %v2694
    %3012 = vmatprep.subr.bf16.mxu0 %v2703
    %3013 = vmatpush1.bf16.msra.mxu0 %v2702
    %3014 = vmatprep.subr.bf16.mxu0 %v2711
    %3015 = vmatpush1.bf16.msra.mxu0 %v2710
    %3016 = vmatprep.subr.bf16.mxu0 %v2719
    %3017 = vmatpush1.bf16.msra.mxu0 %v2718
    %3018 = vmatprep.subr.bf16.mxu0 %v2727
    %3019 = vmatpush1.bf16.msra.mxu0 %v2726
    %3020 = vmatprep.subr.bf16.mxu0 %v2735
    %3021 = vmatpush1.bf16.msra.mxu0 %v2734
    %3022 = vmatprep.subr.bf16.mxu0 %v2743
    %3023 = vmatpush1.bf16.msra.mxu0 %v2742
    %3024 = vmatprep.subr.bf16.mxu0 %v2751
    %3025 = vmatpush1.bf16.msra.mxu0 %v2750
    %3026 = vmatprep.subr.bf16.mxu0 %v2759
    %3027 = vmatpush1.bf16.msra.mxu0 %v2758
    %3028 = vmatprep.subr.bf16.mxu0 %v2767
    %3029 = vmatpush1.bf16.msra.mxu0 %v2766
    %3030 = vmatprep.subr.bf16.mxu0 %v2775
    %3031 = vmatpush1.bf16.msra.mxu0 %v2774
    %3032 = vmatprep.subr.bf16.mxu0 %v2783
    %3033 = vmatpush1.bf16.msra.mxu0 %v2782
    %3034 = vmatprep.subr.bf16.mxu0 %v2791
    %3035 = vmatpush1.bf16.msra.mxu0 %v2790
    %3036 = vmatprep.mubr.bf16.mxu0 0
    %3037 = vmatmul.mubr.bf16.gmra.mrb[0].mxu0 0
    %v3038 = vpop.f32.mrb[0].mxu0
    %v3039 = vadd.f32 0.0, %v3038
    %v3040 = vpop.f32.mrb[0].mxu0
    %v3041 = vadd.f32 0.0, %v3040
    %v3042 = vpop.f32.mrb[0].mxu0
    %v3043 = vpop.f32.mrb[0].mxu0
    %3044 = vdwg.mxu0
    %3045 = vmatprep.subr.bf16.mxu0 %v2673
    %3046 = vmatpush1.bf16.msra.mxu0 %v2672
    %3047 = vmatprep.subr.bf16.mxu0 %v2681
    %3048 = vmatpush1.bf16.msra.mxu0 %v2680
    %3049 = vmatprep.subr.bf16.mxu0 %v2689
    %3050 = vmatpush1.bf16.msra.mxu0 %v2688
    %3051 = vmatprep.subr.bf16.mxu0 %v2697
    %3052 = vmatpush1.bf16.msra.mxu0 %v2696
    %3053 = vmatprep.subr.bf16.mxu0 %v2705
    %3054 = vmatpush1.bf16.msra.mxu0 %v2704
    %3055 = vmatprep.subr.bf16.mxu0 %v2713
    %3056 = vmatpush1.bf16.msra.mxu0 %v2712
    %3057 = vmatprep.subr.bf16.mxu0 %v2721
    %3058 = vmatpush1.bf16.msra.mxu0 %v2720
    %3059 = vmatprep.subr.bf16.mxu0 %v2729
    %3060 = vmatpush1.bf16.msra.mxu0 %v2728
    %3061 = vmatprep.subr.bf16.mxu0 %v2737
    %3062 = vmatpush1.bf16.msra.mxu0 %v2736
    %3063 = vmatprep.subr.bf16.mxu0 %v2745
    %3064 = vmatpush1.bf16.msra.mxu0 %v2744
    %3065 = vmatprep.subr.bf16.mxu0 %v2753
    %3066 = vmatpush1.bf16.msra.mxu0 %v2752
    %3067 = vmatprep.subr.bf16.mxu0 %v2761
    %3068 = vmatpush1.bf16.msra.mxu0 %v2760
    %3069 = vmatprep.subr.bf16.mxu0 %v2769
    %3070 = vmatpush1.bf16.msra.mxu0 %v2768
    %3071 = vmatprep.subr.bf16.mxu0 %v2777
    %3072 = vmatpush1.bf16.msra.mxu0 %v2776
    %3073 = vmatprep.subr.bf16.mxu0 %v2785
    %3074 = vmatpush1.bf16.msra.mxu0 %v2784
    %3075 = vmatprep.subr.bf16.mxu0 %v2793
    %3076 = vmatpush1.bf16.msra.mxu0 %v2792
    %3077 = vmatprep.mubr.bf16.mxu0 0
    %3078 = vmatmul.mubr.bf16.gmra.mrb[0].mxu0 0
    %v3079 = vpop.f32.mrb[0].mxu0
    %v3080 = vadd.f32 0.0, %v3079
    %v3081 = vpop.f32.mrb[0].mxu0
    %v3082 = vadd.f32 0.0, %v3081
    %v3083 = vpop.f32.mrb[0].mxu0
    %v3084 = vpop.f32.mrb[0].mxu0
    %3085 = vdwg.mxu0
    %v3094 = vcombine.low %v2957, %v2959
    %v3095 = vcombine.low %v2998, %v3000
    %v3096 = vcombine.low %v3039, %v3041
    %v3097 = vcombine.low %v3080, %v3082
    %v3099 = vunpack.c.l.s4 1966171168
    %v3100 = vunpack.c.0.s8 %v3099
    %v3101 = vlaneseq
    %v3102 = vshrl.u32 %v3101, 7
    %v3103 = vsub.s32 %v3100, %v3102
    %v3104 = vrot.slane %v3094, %v3103
    %v3106 = vunpack.c.l.s4 1966171168
    %v3107 = vunpack.c.0.s8 %v3106
    %v3108 = vlaneseq
    %v3109 = vshrl.u32 %v3108, 7
    %v3110 = vsub.s32 %v3107, %v3109
    %v3111 = vrot.slane %v3095, %v3110
    %v3113 = vunpack.c.l.s4 1966171168
    %v3114 = vunpack.c.0.s8 %v3113
    %v3115 = vlaneseq
    %v3116 = vshrl.u32 %v3115, 7
    %v3117 = vsub.s32 %v3114, %v3116
    %v3118 = vrot.slane %v3096, %v3117
    %v3120 = vunpack.c.l.s4 1966171168
    %v3121 = vunpack.c.0.s8 %v3120
    %v3122 = vlaneseq
    %v3123 = vshrl.u32 %v3122, 7
    %v3124 = vsub.s32 %v3121, %v3123
    %v3125 = vrot.slane %v3097, %v3124
    %v3126 = vcombine.low %v3104, %v3111
    %v3127 = vcombine.low %v3118, %v3125
    %v3129 = vunpack.c.l.s4 1966171168
    %v3130 = vunpack.c.0.s8 %v3129
    %v3131 = vlaneseq
    %v3132 = vshrl.u32 %v3131, 7
    %v3133 = vsub.s32 %v3130, %v3132
    %v3134 = vrot.slane %v3126, %v3133
    %v3136 = vunpack.c.l.s4 1966171168
    %v3137 = vunpack.c.0.s8 %v3136
    %v3138 = vlaneseq
    %v3139 = vshrl.u32 %v3138, 7
    %v3140 = vsub.s32 %v3137, %v3139
    %v3141 = vrot.slane %v3127, %v3140
    %v3142 = vcombine.low %v3134, %v3141
    %v3144 = vadd.f32 %v2153, %v3142
    %v3145 = vxor.u32 %v3144, 2147483648
    %v3146 = vmul.f32 %v3145, 1.442695
    %v3147 = vpow.pop %v3146
    %v3148 = vadd.f32 %v3147, 1.0
    %v3149 = vrcp.pop %v3148
    %v3150 = vmul.f32 1.0, %v3149
    %v3152 = vrot.slane %v3144, 2
    %v3154 = vxor.u32 %v3152, 2147483648
    %v3155 = vmul.f32 %v3154, 1.442695
    %v3156 = vpow.pop %v3155
    %v3157 = vadd.f32 %v3156, 1.0
    %v3158 = vrcp.pop %v3157
    %v3159 = vmul.f32 1.0, %v3158
    %v3160 = vrot.slane %v3144, 4
    %v3162 = vtanh.pop %v3160
    %v3163 = vrot.slane %v3144, 6
    %v3165 = vxor.u32 %v3163, 2147483648
    %v3166 = vmul.f32 %v3165, 1.442695
    %v3167 = vpow.pop %v3166
    %v3168 = vadd.f32 %v3167, 1.0
    %v3169 = vrcp.pop %v3168
    %v3170 = vmul.f32 1.0, %v3169
    %v3171 = vmul.f32 %v3159, 0.0
    %v3172 = vmul.f32 %v3150, %v3162
    %v3173 = vadd.f32 %v3171, %v3172
    %v3174 = vtanh.pop %v3173
    %v3175 = vmul.f32 %v3170, %v3174
    %3176 = vst.msk [vmem:[#allocation4] ss:$2 sm:$0x3] %vm137, %v3175
    %s3177 = scalar_lea.vmem [#allocation3], 1
    %v3178 = vld [vmem:[%s3177] ss:$2 sm:$0xff]
    %v3180 = vlaneseq
    %v3181 = vshrl.u32 %v3180, 7
    %v3182 = vsub.s32 0, %v3181
    %v3183 = vrot.slane %v3175, %v3182
    %v3184 = vlaneseq
    %v3185 = vshrl.u32 %v3184, 7
    %v3186 = vsub.s32 1, %v3185
    %v3187 = vrot.slane %v3175, %v3186
    %v3190 = vpack.c.bf16 %v3183, %v3183
    %v3191 = vpack.c.bf16 %v3187, %v3187
    %v3192 = vld [vmem:[#allocation15] sm:$0xff]
    %v3193 = vld [vmem:[#allocation15 + $0x8] sm:$0xff]
    %v3194 = vld [vmem:[#allocation15 + $0x10] sm:$0xff]
    %v3195 = vld [vmem:[#allocation15 + $0x18] sm:$0xff]
    %v3196 = vld [vmem:[#allocation15 + $0x20] sm:$0xff]
    %v3197 = vld [vmem:[#allocation15 + $0x28] sm:$0xff]
    %v3198 = vld [vmem:[#allocation15 + $0x30] sm:$0xff]
    %v3199 = vld [vmem:[#allocation15 + $0x38] sm:$0xff]
    %v3200 = vld [vmem:[#allocation15 + $0x40] sm:$0xff]
    %v3201 = vld [vmem:[#allocation15 + $0x48] sm:$0xff]
    %v3202 = vld [vmem:[#allocation15 + $0x50] sm:$0xff]
    %v3203 = vld [vmem:[#allocation15 + $0x58] sm:$0xff]
    %v3204 = vld [vmem:[#allocation15 + $0x60] sm:$0xff]
    %v3205 = vld [vmem:[#allocation15 + $0x68] sm:$0xff]
    %v3206 = vld [vmem:[#allocation15 + $0x70] sm:$0xff]
    %v3207 = vld [vmem:[#allocation15 + $0x78] sm:$0xff]
    %v3208 = vld [vmem:[#allocation15 + $0x80] sm:$0xff]
    %v3209 = vld [vmem:[#allocation15 + $0x88] sm:$0xff]
    %v3210 = vld [vmem:[#allocation15 + $0x90] sm:$0xff]
    %v3211 = vld [vmem:[#allocation15 + $0x98] sm:$0xff]
    %v3212 = vld [vmem:[#allocation15 + $0xa0] sm:$0xff]
    %v3213 = vld [vmem:[#allocation15 + $0xa8] sm:$0xff]
    %v3214 = vld [vmem:[#allocation15 + $0xb0] sm:$0xff]
    %v3215 = vld [vmem:[#allocation15 + $0xb8] sm:$0xff]
    %v3216 = vld [vmem:[#allocation15 + $0xc0] sm:$0xff]
    %v3217 = vld [vmem:[#allocation15 + $0xc8] sm:$0xff]
    %v3218 = vld [vmem:[#allocation15 + $0xd0] sm:$0xff]
    %v3219 = vld [vmem:[#allocation15 + $0xd8] sm:$0xff]
    %v3220 = vld [vmem:[#allocation15 + $0xe0] sm:$0xff]
    %v3221 = vld [vmem:[#allocation15 + $0xe8] sm:$0xff]
    %v3222 = vld [vmem:[#allocation15 + $0xf0] sm:$0xff]
    %v3223 = vld [vmem:[#allocation15 + $0xf8] sm:$0xff]
    %v3224 = vld [vmem:[#allocation15 + $0x100] sm:$0xff]
    %v3225 = vld [vmem:[#allocation15 + $0x108] sm:$0xff]
    %v3226 = vld [vmem:[#allocation15 + $0x110] sm:$0xff]
    %v3227 = vld [vmem:[#allocation15 + $0x118] sm:$0xff]
    %v3228 = vld [vmem:[#allocation15 + $0x120] sm:$0xff]
    %v3229 = vld [vmem:[#allocation15 + $0x128] sm:$0xff]
    %v3230 = vld [vmem:[#allocation15 + $0x130] sm:$0xff]
    %v3231 = vld [vmem:[#allocation15 + $0x138] sm:$0xff]
    %v3232 = vld [vmem:[#allocation15 + $0x140] sm:$0xff]
    %v3233 = vld [vmem:[#allocation15 + $0x148] sm:$0xff]
    %v3234 = vld [vmem:[#allocation15 + $0x150] sm:$0xff]
    %v3235 = vld [vmem:[#allocation15 + $0x158] sm:$0xff]
    %v3236 = vld [vmem:[#allocation15 + $0x160] sm:$0xff]
    %v3237 = vld [vmem:[#allocation15 + $0x168] sm:$0xff]
    %v3238 = vld [vmem:[#allocation15 + $0x170] sm:$0xff]
    %v3239 = vld [vmem:[#allocation15 + $0x178] sm:$0xff]
    %v3240 = vld [vmem:[#allocation15 + $0x180] sm:$0xff]
    %v3241 = vld [vmem:[#allocation15 + $0x188] sm:$0xff]
    %v3242 = vld [vmem:[#allocation15 + $0x190] sm:$0xff]
    %v3243 = vld [vmem:[#allocation15 + $0x198] sm:$0xff]
    %v3244 = vld [vmem:[#allocation15 + $0x1a0] sm:$0xff]
    %v3245 = vld [vmem:[#allocation15 + $0x1a8] sm:$0xff]
    %v3246 = vld [vmem:[#allocation15 + $0x1b0] sm:$0xff]
    %v3247 = vld [vmem:[#allocation15 + $0x1b8] sm:$0xff]
    %v3248 = vld [vmem:[#allocation15 + $0x1c0] sm:$0xff]
    %v3249 = vld [vmem:[#allocation15 + $0x1c8] sm:$0xff]
    %v3250 = vld [vmem:[#allocation15 + $0x1d0] sm:$0xff]
    %v3251 = vld [vmem:[#allocation15 + $0x1d8] sm:$0xff]
    %v3252 = vld [vmem:[#allocation15 + $0x1e0] sm:$0xff]
    %v3253 = vld [vmem:[#allocation15 + $0x1e8] sm:$0xff]
    %v3254 = vld [vmem:[#allocation15 + $0x1f0] sm:$0xff]
    %v3255 = vld [vmem:[#allocation15 + $0x1f8] sm:$0xff]
    %v3256 = vld [vmem:[#allocation15 + $0x200] sm:$0xff]
    %v3257 = vld [vmem:[#allocation15 + $0x208] sm:$0xff]
    %v3258 = vld [vmem:[#allocation15 + $0x210] sm:$0xff]
    %v3259 = vld [vmem:[#allocation15 + $0x218] sm:$0xff]
    %v3260 = vld [vmem:[#allocation15 + $0x220] sm:$0xff]
    %v3261 = vld [vmem:[#allocation15 + $0x228] sm:$0xff]
    %v3262 = vld [vmem:[#allocation15 + $0x230] sm:$0xff]
    %v3263 = vld [vmem:[#allocation15 + $0x238] sm:$0xff]
    %v3264 = vld [vmem:[#allocation15 + $0x240] sm:$0xff]
    %v3265 = vld [vmem:[#allocation15 + $0x248] sm:$0xff]
    %v3266 = vld [vmem:[#allocation15 + $0x250] sm:$0xff]
    %v3267 = vld [vmem:[#allocation15 + $0x258] sm:$0xff]
    %v3268 = vld [vmem:[#allocation15 + $0x260] sm:$0xff]
    %v3269 = vld [vmem:[#allocation15 + $0x268] sm:$0xff]
    %v3270 = vld [vmem:[#allocation15 + $0x270] sm:$0xff]
    %v3271 = vld [vmem:[#allocation15 + $0x278] sm:$0xff]
    %v3272 = vld [vmem:[#allocation15 + $0x280] sm:$0xff]
    %v3273 = vld [vmem:[#allocation15 + $0x288] sm:$0xff]
    %v3274 = vld [vmem:[#allocation15 + $0x290] sm:$0xff]
    %v3275 = vld [vmem:[#allocation15 + $0x298] sm:$0xff]
    %v3276 = vld [vmem:[#allocation15 + $0x2a0] sm:$0xff]
    %v3277 = vld [vmem:[#allocation15 + $0x2a8] sm:$0xff]
    %v3278 = vld [vmem:[#allocation15 + $0x2b0] sm:$0xff]
    %v3279 = vld [vmem:[#allocation15 + $0x2b8] sm:$0xff]
    %v3280 = vld [vmem:[#allocation15 + $0x2c0] sm:$0xff]
    %v3281 = vld [vmem:[#allocation15 + $0x2c8] sm:$0xff]
    %v3282 = vld [vmem:[#allocation15 + $0x2d0] sm:$0xff]
    %v3283 = vld [vmem:[#allocation15 + $0x2d8] sm:$0xff]
    %v3284 = vld [vmem:[#allocation15 + $0x2e0] sm:$0xff]
    %v3285 = vld [vmem:[#allocation15 + $0x2e8] sm:$0xff]
    %v3286 = vld [vmem:[#allocation15 + $0x2f0] sm:$0xff]
    %v3287 = vld [vmem:[#allocation15 + $0x2f8] sm:$0xff]
    %v3288 = vld [vmem:[#allocation15 + $0x300] sm:$0xff]
    %v3289 = vld [vmem:[#allocation15 + $0x308] sm:$0xff]
    %v3290 = vld [vmem:[#allocation15 + $0x310] sm:$0xff]
    %v3291 = vld [vmem:[#allocation15 + $0x318] sm:$0xff]
    %v3292 = vld [vmem:[#allocation15 + $0x320] sm:$0xff]
    %v3293 = vld [vmem:[#allocation15 + $0x328] sm:$0xff]
    %v3294 = vld [vmem:[#allocation15 + $0x330] sm:$0xff]
    %v3295 = vld [vmem:[#allocation15 + $0x338] sm:$0xff]
    %v3296 = vld [vmem:[#allocation15 + $0x340] sm:$0xff]
    %v3297 = vld [vmem:[#allocation15 + $0x348] sm:$0xff]
    %v3298 = vld [vmem:[#allocation15 + $0x350] sm:$0xff]
    %v3299 = vld [vmem:[#allocation15 + $0x358] sm:$0xff]
    %v3300 = vld [vmem:[#allocation15 + $0x360] sm:$0xff]
    %v3301 = vld [vmem:[#allocation15 + $0x368] sm:$0xff]
    %v3302 = vld [vmem:[#allocation15 + $0x370] sm:$0xff]
    %v3303 = vld [vmem:[#allocation15 + $0x378] sm:$0xff]
    %v3304 = vld [vmem:[#allocation15 + $0x380] sm:$0xff]
    %v3305 = vld [vmem:[#allocation15 + $0x388] sm:$0xff]
    %v3306 = vld [vmem:[#allocation15 + $0x390] sm:$0xff]
    %v3307 = vld [vmem:[#allocation15 + $0x398] sm:$0xff]
    %v3308 = vld [vmem:[#allocation15 + $0x3a0] sm:$0xff]
    %v3309 = vld [vmem:[#allocation15 + $0x3a8] sm:$0xff]
    %v3310 = vld [vmem:[#allocation15 + $0x3b0] sm:$0xff]
    %v3311 = vld [vmem:[#allocation15 + $0x3b8] sm:$0xff]
    %v3312 = vld [vmem:[#allocation15 + $0x3c0] sm:$0xff]
    %v3313 = vld [vmem:[#allocation15 + $0x3c8] sm:$0xff]
    %v3314 = vld [vmem:[#allocation15 + $0x3d0] sm:$0xff]
    %v3315 = vld [vmem:[#allocation15 + $0x3d8] sm:$0xff]
    %v3316 = vld [vmem:[#allocation15 + $0x3e0] sm:$0xff]
    %v3317 = vld [vmem:[#allocation15 + $0x3e8] sm:$0xff]
    %v3318 = vld [vmem:[#allocation15 + $0x3f0] sm:$0xff]
    %v3319 = vld [vmem:[#allocation15 + $0x3f8] sm:$0xff]
    %v3448 = vunpack.c.l.b16 %v3192
    %v3449 = vunpack.c.h.b16 %v3192
    %v3450 = vunpack.c.l.b16 %v3193
    %v3451 = vunpack.c.h.b16 %v3193
    %v3452 = vunpack.c.l.b16 %v3194
    %v3453 = vunpack.c.h.b16 %v3194
    %v3454 = vunpack.c.l.b16 %v3195
    %v3455 = vunpack.c.h.b16 %v3195
    %v3456 = vunpack.c.l.b16 %v3196
    %v3457 = vunpack.c.h.b16 %v3196
    %v3458 = vunpack.c.l.b16 %v3197
    %v3459 = vunpack.c.h.b16 %v3197
    %v3460 = vunpack.c.l.b16 %v3198
    %v3461 = vunpack.c.h.b16 %v3198
    %v3462 = vunpack.c.l.b16 %v3199
    %v3463 = vunpack.c.h.b16 %v3199
    %v3464 = vunpack.c.l.b16 %v3200
    %v3465 = vunpack.c.h.b16 %v3200
    %v3466 = vunpack.c.l.b16 %v3201
    %v3467 = vunpack.c.h.b16 %v3201
    %v3468 = vunpack.c.l.b16 %v3202
    %v3469 = vunpack.c.h.b16 %v3202
    %v3470 = vunpack.c.l.b16 %v3203
    %v3471 = vunpack.c.h.b16 %v3203
    %v3472 = vunpack.c.l.b16 %v3204
    %v3473 = vunpack.c.h.b16 %v3204
    %v3474 = vunpack.c.l.b16 %v3205
    %v3475 = vunpack.c.h.b16 %v3205
    %v3476 = vunpack.c.l.b16 %v3206
    %v3477 = vunpack.c.h.b16 %v3206
    %v3478 = vunpack.c.l.b16 %v3207
    %v3479 = vunpack.c.h.b16 %v3207
    %v3480 = vunpack.c.l.b16 %v3208
    %v3481 = vunpack.c.h.b16 %v3208
    %v3482 = vunpack.c.l.b16 %v3209
    %v3483 = vunpack.c.h.b16 %v3209
    %v3484 = vunpack.c.l.b16 %v3210
    %v3485 = vunpack.c.h.b16 %v3210
    %v3486 = vunpack.c.l.b16 %v3211
    %v3487 = vunpack.c.h.b16 %v3211
    %v3488 = vunpack.c.l.b16 %v3212
    %v3489 = vunpack.c.h.b16 %v3212
    %v3490 = vunpack.c.l.b16 %v3213
    %v3491 = vunpack.c.h.b16 %v3213
    %v3492 = vunpack.c.l.b16 %v3214
    %v3493 = vunpack.c.h.b16 %v3214
    %v3494 = vunpack.c.l.b16 %v3215
    %v3495 = vunpack.c.h.b16 %v3215
    %v3496 = vunpack.c.l.b16 %v3216
    %v3497 = vunpack.c.h.b16 %v3216
    %v3498 = vunpack.c.l.b16 %v3217
    %v3499 = vunpack.c.h.b16 %v3217
    %v3500 = vunpack.c.l.b16 %v3218
    %v3501 = vunpack.c.h.b16 %v3218
    %v3502 = vunpack.c.l.b16 %v3219
    %v3503 = vunpack.c.h.b16 %v3219
    %v3504 = vunpack.c.l.b16 %v3220
    %v3505 = vunpack.c.h.b16 %v3220
    %v3506 = vunpack.c.l.b16 %v3221
    %v3507 = vunpack.c.h.b16 %v3221
    %v3508 = vunpack.c.l.b16 %v3222
    %v3509 = vunpack.c.h.b16 %v3222
    %v3510 = vunpack.c.l.b16 %v3223
    %v3511 = vunpack.c.h.b16 %v3223
    %v3512 = vunpack.c.l.b16 %v3224
    %v3513 = vunpack.c.h.b16 %v3224
    %v3514 = vunpack.c.l.b16 %v3225
    %v3515 = vunpack.c.h.b16 %v3225
    %v3516 = vunpack.c.l.b16 %v3226
    %v3517 = vunpack.c.h.b16 %v3226
    %v3518 = vunpack.c.l.b16 %v3227
    %v3519 = vunpack.c.h.b16 %v3227
    %v3520 = vunpack.c.l.b16 %v3228
    %v3521 = vunpack.c.h.b16 %v3228
    %v3522 = vunpack.c.l.b16 %v3229
    %v3523 = vunpack.c.h.b16 %v3229
    %v3524 = vunpack.c.l.b16 %v3230
    %v3525 = vunpack.c.h.b16 %v3230
    %v3526 = vunpack.c.l.b16 %v3231
    %v3527 = vunpack.c.h.b16 %v3231
    %v3528 = vunpack.c.l.b16 %v3232
    %v3529 = vunpack.c.h.b16 %v3232
    %v3530 = vunpack.c.l.b16 %v3233
    %v3531 = vunpack.c.h.b16 %v3233
    %v3532 = vunpack.c.l.b16 %v3234
    %v3533 = vunpack.c.h.b16 %v3234
    %v3534 = vunpack.c.l.b16 %v3235
    %v3535 = vunpack.c.h.b16 %v3235
    %v3536 = vunpack.c.l.b16 %v3236
    %v3537 = vunpack.c.h.b16 %v3236
    %v3538 = vunpack.c.l.b16 %v3237
    %v3539 = vunpack.c.h.b16 %v3237
    %v3540 = vunpack.c.l.b16 %v3238
    %v3541 = vunpack.c.h.b16 %v3238
    %v3542 = vunpack.c.l.b16 %v3239
    %v3543 = vunpack.c.h.b16 %v3239
    %v3544 = vunpack.c.l.b16 %v3240
    %v3545 = vunpack.c.h.b16 %v3240
    %v3546 = vunpack.c.l.b16 %v3241
    %v3547 = vunpack.c.h.b16 %v3241
    %v3548 = vunpack.c.l.b16 %v3242
    %v3549 = vunpack.c.h.b16 %v3242
    %v3550 = vunpack.c.l.b16 %v3243
    %v3551 = vunpack.c.h.b16 %v3243
    %v3552 = vunpack.c.l.b16 %v3244
    %v3553 = vunpack.c.h.b16 %v3244
    %v3554 = vunpack.c.l.b16 %v3245
    %v3555 = vunpack.c.h.b16 %v3245
    %v3556 = vunpack.c.l.b16 %v3246
    %v3557 = vunpack.c.h.b16 %v3246
    %v3558 = vunpack.c.l.b16 %v3247
    %v3559 = vunpack.c.h.b16 %v3247
    %v3560 = vunpack.c.l.b16 %v3248
    %v3561 = vunpack.c.h.b16 %v3248
    %v3562 = vunpack.c.l.b16 %v3249
    %v3563 = vunpack.c.h.b16 %v3249
    %v3564 = vunpack.c.l.b16 %v3250
    %v3565 = vunpack.c.h.b16 %v3250
    %v3566 = vunpack.c.l.b16 %v3251
    %v3567 = vunpack.c.h.b16 %v3251
    %v3568 = vunpack.c.l.b16 %v3252
    %v3569 = vunpack.c.h.b16 %v3252
    %v3570 = vunpack.c.l.b16 %v3253
    %v3571 = vunpack.c.h.b16 %v3253
    %v3572 = vunpack.c.l.b16 %v3254
    %v3573 = vunpack.c.h.b16 %v3254
    %v3574 = vunpack.c.l.b16 %v3255
    %v3575 = vunpack.c.h.b16 %v3255
    %v3576 = vunpack.c.l.b16 %v3256
    %v3577 = vunpack.c.h.b16 %v3256
    %v3578 = vunpack.c.l.b16 %v3257
    %v3579 = vunpack.c.h.b16 %v3257
    %v3580 = vunpack.c.l.b16 %v3258
    %v3581 = vunpack.c.h.b16 %v3258
    %v3582 = vunpack.c.l.b16 %v3259
    %v3583 = vunpack.c.h.b16 %v3259
    %v3584 = vunpack.c.l.b16 %v3260
    %v3585 = vunpack.c.h.b16 %v3260
    %v3586 = vunpack.c.l.b16 %v3261
    %v3587 = vunpack.c.h.b16 %v3261
    %v3588 = vunpack.c.l.b16 %v3262
    %v3589 = vunpack.c.h.b16 %v3262
    %v3590 = vunpack.c.l.b16 %v3263
    %v3591 = vunpack.c.h.b16 %v3263
    %v3592 = vunpack.c.l.b16 %v3264
    %v3593 = vunpack.c.h.b16 %v3264
    %v3594 = vunpack.c.l.b16 %v3265
    %v3595 = vunpack.c.h.b16 %v3265
    %v3596 = vunpack.c.l.b16 %v3266
    %v3597 = vunpack.c.h.b16 %v3266
    %v3598 = vunpack.c.l.b16 %v3267
    %v3599 = vunpack.c.h.b16 %v3267
    %v3600 = vunpack.c.l.b16 %v3268
    %v3601 = vunpack.c.h.b16 %v3268
    %v3602 = vunpack.c.l.b16 %v3269
    %v3603 = vunpack.c.h.b16 %v3269
    %v3604 = vunpack.c.l.b16 %v3270
    %v3605 = vunpack.c.h.b16 %v3270
    %v3606 = vunpack.c.l.b16 %v3271
    %v3607 = vunpack.c.h.b16 %v3271
    %v3608 = vunpack.c.l.b16 %v3272
    %v3609 = vunpack.c.h.b16 %v3272
    %v3610 = vunpack.c.l.b16 %v3273
    %v3611 = vunpack.c.h.b16 %v3273
    %v3612 = vunpack.c.l.b16 %v3274
    %v3613 = vunpack.c.h.b16 %v3274
    %v3614 = vunpack.c.l.b16 %v3275
    %v3615 = vunpack.c.h.b16 %v3275
    %v3616 = vunpack.c.l.b16 %v3276
    %v3617 = vunpack.c.h.b16 %v3276
    %v3618 = vunpack.c.l.b16 %v3277
    %v3619 = vunpack.c.h.b16 %v3277
    %v3620 = vunpack.c.l.b16 %v3278
    %v3621 = vunpack.c.h.b16 %v3278
    %v3622 = vunpack.c.l.b16 %v3279
    %v3623 = vunpack.c.h.b16 %v3279
    %v3624 = vunpack.c.l.b16 %v3280
    %v3625 = vunpack.c.h.b16 %v3280
    %v3626 = vunpack.c.l.b16 %v3281
    %v3627 = vunpack.c.h.b16 %v3281
    %v3628 = vunpack.c.l.b16 %v3282
    %v3629 = vunpack.c.h.b16 %v3282
    %v3630 = vunpack.c.l.b16 %v3283
    %v3631 = vunpack.c.h.b16 %v3283
    %v3632 = vunpack.c.l.b16 %v3284
    %v3633 = vunpack.c.h.b16 %v3284
    %v3634 = vunpack.c.l.b16 %v3285
    %v3635 = vunpack.c.h.b16 %v3285
    %v3636 = vunpack.c.l.b16 %v3286
    %v3637 = vunpack.c.h.b16 %v3286
    %v3638 = vunpack.c.l.b16 %v3287
    %v3639 = vunpack.c.h.b16 %v3287
    %v3640 = vunpack.c.l.b16 %v3288
    %v3641 = vunpack.c.h.b16 %v3288
    %v3642 = vunpack.c.l.b16 %v3289
    %v3643 = vunpack.c.h.b16 %v3289
    %v3644 = vunpack.c.l.b16 %v3290
    %v3645 = vunpack.c.h.b16 %v3290
    %v3646 = vunpack.c.l.b16 %v3291
    %v3647 = vunpack.c.h.b16 %v3291
    %v3648 = vunpack.c.l.b16 %v3292
    %v3649 = vunpack.c.h.b16 %v3292
    %v3650 = vunpack.c.l.b16 %v3293
    %v3651 = vunpack.c.h.b16 %v3293
    %v3652 = vunpack.c.l.b16 %v3294
    %v3653 = vunpack.c.h.b16 %v3294
    %v3654 = vunpack.c.l.b16 %v3295
    %v3655 = vunpack.c.h.b16 %v3295
    %v3656 = vunpack.c.l.b16 %v3296
    %v3657 = vunpack.c.h.b16 %v3296
    %v3658 = vunpack.c.l.b16 %v3297
    %v3659 = vunpack.c.h.b16 %v3297
    %v3660 = vunpack.c.l.b16 %v3298
    %v3661 = vunpack.c.h.b16 %v3298
    %v3662 = vunpack.c.l.b16 %v3299
    %v3663 = vunpack.c.h.b16 %v3299
    %v3664 = vunpack.c.l.b16 %v3300
    %v3665 = vunpack.c.h.b16 %v3300
    %v3666 = vunpack.c.l.b16 %v3301
    %v3667 = vunpack.c.h.b16 %v3301
    %v3668 = vunpack.c.l.b16 %v3302
    %v3669 = vunpack.c.h.b16 %v3302
    %v3670 = vunpack.c.l.b16 %v3303
    %v3671 = vunpack.c.h.b16 %v3303
    %v3672 = vunpack.c.l.b16 %v3304
    %v3673 = vunpack.c.h.b16 %v3304
    %v3674 = vunpack.c.l.b16 %v3305
    %v3675 = vunpack.c.h.b16 %v3305
    %v3676 = vunpack.c.l.b16 %v3306
    %v3677 = vunpack.c.h.b16 %v3306
    %v3678 = vunpack.c.l.b16 %v3307
    %v3679 = vunpack.c.h.b16 %v3307
    %v3680 = vunpack.c.l.b16 %v3308
    %v3681 = vunpack.c.h.b16 %v3308
    %v3682 = vunpack.c.l.b16 %v3309
    %v3683 = vunpack.c.h.b16 %v3309
    %v3684 = vunpack.c.l.b16 %v3310
    %v3685 = vunpack.c.h.b16 %v3310
    %v3686 = vunpack.c.l.b16 %v3311
    %v3687 = vunpack.c.h.b16 %v3311
    %v3688 = vunpack.c.l.b16 %v3312
    %v3689 = vunpack.c.h.b16 %v3312
    %v3690 = vunpack.c.l.b16 %v3313
    %v3691 = vunpack.c.h.b16 %v3313
    %v3692 = vunpack.c.l.b16 %v3314
    %v3693 = vunpack.c.h.b16 %v3314
    %v3694 = vunpack.c.l.b16 %v3315
    %v3695 = vunpack.c.h.b16 %v3315
    %v3696 = vunpack.c.l.b16 %v3316
    %v3697 = vunpack.c.h.b16 %v3316
    %v3698 = vunpack.c.l.b16 %v3317
    %v3699 = vunpack.c.h.b16 %v3317
    %v3700 = vunpack.c.l.b16 %v3318
    %v3701 = vunpack.c.h.b16 %v3318
    %v3702 = vunpack.c.l.b16 %v3319
    %v3703 = vunpack.c.h.b16 %v3319
    %v3704 = vpack.c.b16 %v3456, %v3448
    %v3705 = vpack.c.b16 %v3457, %v3449
    %v3706 = vpack.c.b16 %v3458, %v3450
    %v3707 = vpack.c.b16 %v3459, %v3451
    %v3708 = vpack.c.b16 %v3460, %v3452
    %v3709 = vpack.c.b16 %v3461, %v3453
    %v3710 = vpack.c.b16 %v3462, %v3454
    %v3711 = vpack.c.b16 %v3463, %v3455
    %v3712 = vpack.c.b16 %v3472, %v3464
    %v3713 = vpack.c.b16 %v3473, %v3465
    %v3714 = vpack.c.b16 %v3474, %v3466
    %v3715 = vpack.c.b16 %v3475, %v3467
    %v3716 = vpack.c.b16 %v3476, %v3468
    %v3717 = vpack.c.b16 %v3477, %v3469
    %v3718 = vpack.c.b16 %v3478, %v3470
    %v3719 = vpack.c.b16 %v3479, %v3471
    %v3720 = vpack.c.b16 %v3488, %v3480
    %v3721 = vpack.c.b16 %v3489, %v3481
    %v3722 = vpack.c.b16 %v3490, %v3482
    %v3723 = vpack.c.b16 %v3491, %v3483
    %v3724 = vpack.c.b16 %v3492, %v3484
    %v3725 = vpack.c.b16 %v3493, %v3485
    %v3726 = vpack.c.b16 %v3494, %v3486
    %v3727 = vpack.c.b16 %v3495, %v3487
    %v3728 = vpack.c.b16 %v3504, %v3496
    %v3729 = vpack.c.b16 %v3505, %v3497
    %v3730 = vpack.c.b16 %v3506, %v3498
    %v3731 = vpack.c.b16 %v3507, %v3499
    %v3732 = vpack.c.b16 %v3508, %v3500
    %v3733 = vpack.c.b16 %v3509, %v3501
    %v3734 = vpack.c.b16 %v3510, %v3502
    %v3735 = vpack.c.b16 %v3511, %v3503
    %v3736 = vpack.c.b16 %v3520, %v3512
    %v3737 = vpack.c.b16 %v3521, %v3513
    %v3738 = vpack.c.b16 %v3522, %v3514
    %v3739 = vpack.c.b16 %v3523, %v3515
    %v3740 = vpack.c.b16 %v3524, %v3516
    %v3741 = vpack.c.b16 %v3525, %v3517
    %v3742 = vpack.c.b16 %v3526, %v3518
    %v3743 = vpack.c.b16 %v3527, %v3519
    %v3744 = vpack.c.b16 %v3536, %v3528
    %v3745 = vpack.c.b16 %v3537, %v3529
    %v3746 = vpack.c.b16 %v3538, %v3530
    %v3747 = vpack.c.b16 %v3539, %v3531
    %v3748 = vpack.c.b16 %v3540, %v3532
    %v3749 = vpack.c.b16 %v3541, %v3533
    %v3750 = vpack.c.b16 %v3542, %v3534
    %v3751 = vpack.c.b16 %v3543, %v3535
    %v3752 = vpack.c.b16 %v3552, %v3544
    %v3753 = vpack.c.b16 %v3553, %v3545
    %v3754 = vpack.c.b16 %v3554, %v3546
    %v3755 = vpack.c.b16 %v3555, %v3547
    %v3756 = vpack.c.b16 %v3556, %v3548
    %v3757 = vpack.c.b16 %v3557, %v3549
    %v3758 = vpack.c.b16 %v3558, %v3550
    %v3759 = vpack.c.b16 %v3559, %v3551
    %v3760 = vpack.c.b16 %v3568, %v3560
    %v3761 = vpack.c.b16 %v3569, %v3561
    %v3762 = vpack.c.b16 %v3570, %v3562
    %v3763 = vpack.c.b16 %v3571, %v3563
    %v3764 = vpack.c.b16 %v3572, %v3564
    %v3765 = vpack.c.b16 %v3573, %v3565
    %v3766 = vpack.c.b16 %v3574, %v3566
    %v3767 = vpack.c.b16 %v3575, %v3567
    %v3768 = vpack.c.b16 %v3584, %v3576
    %v3769 = vpack.c.b16 %v3585, %v3577
    %v3770 = vpack.c.b16 %v3586, %v3578
    %v3771 = vpack.c.b16 %v3587, %v3579
    %v3772 = vpack.c.b16 %v3588, %v3580
    %v3773 = vpack.c.b16 %v3589, %v3581
    %v3774 = vpack.c.b16 %v3590, %v3582
    %v3775 = vpack.c.b16 %v3591, %v3583
    %v3776 = vpack.c.b16 %v3600, %v3592
    %v3777 = vpack.c.b16 %v3601, %v3593
    %v3778 = vpack.c.b16 %v3602, %v3594
    %v3779 = vpack.c.b16 %v3603, %v3595
    %v3780 = vpack.c.b16 %v3604, %v3596
    %v3781 = vpack.c.b16 %v3605, %v3597
    %v3782 = vpack.c.b16 %v3606, %v3598
    %v3783 = vpack.c.b16 %v3607, %v3599
    %v3784 = vpack.c.b16 %v3616, %v3608
    %v3785 = vpack.c.b16 %v3617, %v3609
    %v3786 = vpack.c.b16 %v3618, %v3610
    %v3787 = vpack.c.b16 %v3619, %v3611
    %v3788 = vpack.c.b16 %v3620, %v3612
    %v3789 = vpack.c.b16 %v3621, %v3613
    %v3790 = vpack.c.b16 %v3622, %v3614
    %v3791 = vpack.c.b16 %v3623, %v3615
    %v3792 = vpack.c.b16 %v3632, %v3624
    %v3793 = vpack.c.b16 %v3633, %v3625
    %v3794 = vpack.c.b16 %v3634, %v3626
    %v3795 = vpack.c.b16 %v3635, %v3627
    %v3796 = vpack.c.b16 %v3636, %v3628
    %v3797 = vpack.c.b16 %v3637, %v3629
    %v3798 = vpack.c.b16 %v3638, %v3630
    %v3799 = vpack.c.b16 %v3639, %v3631
    %v3800 = vpack.c.b16 %v3648, %v3640
    %v3801 = vpack.c.b16 %v3649, %v3641
    %v3802 = vpack.c.b16 %v3650, %v3642
    %v3803 = vpack.c.b16 %v3651, %v3643
    %v3804 = vpack.c.b16 %v3652, %v3644
    %v3805 = vpack.c.b16 %v3653, %v3645
    %v3806 = vpack.c.b16 %v3654, %v3646
    %v3807 = vpack.c.b16 %v3655, %v3647
    %v3808 = vpack.c.b16 %v3664, %v3656
    %v3809 = vpack.c.b16 %v3665, %v3657
    %v3810 = vpack.c.b16 %v3666, %v3658
    %v3811 = vpack.c.b16 %v3667, %v3659
    %v3812 = vpack.c.b16 %v3668, %v3660
    %v3813 = vpack.c.b16 %v3669, %v3661
    %v3814 = vpack.c.b16 %v3670, %v3662
    %v3815 = vpack.c.b16 %v3671, %v3663
    %v3816 = vpack.c.b16 %v3680, %v3672
    %v3817 = vpack.c.b16 %v3681, %v3673
    %v3818 = vpack.c.b16 %v3682, %v3674
    %v3819 = vpack.c.b16 %v3683, %v3675
    %v3820 = vpack.c.b16 %v3684, %v3676
    %v3821 = vpack.c.b16 %v3685, %v3677
    %v3822 = vpack.c.b16 %v3686, %v3678
    %v3823 = vpack.c.b16 %v3687, %v3679
    %v3824 = vpack.c.b16 %v3696, %v3688
    %v3825 = vpack.c.b16 %v3697, %v3689
    %v3826 = vpack.c.b16 %v3698, %v3690
    %v3827 = vpack.c.b16 %v3699, %v3691
    %v3828 = vpack.c.b16 %v3700, %v3692
    %v3829 = vpack.c.b16 %v3701, %v3693
    %v3830 = vpack.c.b16 %v3702, %v3694
    %v3831 = vpack.c.b16 %v3703, %v3695
    %3960 = vmatprep.subr.bf16.mxu0 %v3705
    %3961 = vmatpush1.bf16.msra.mxu0 %v3704
    %3962 = vmatprep.subr.bf16.mxu0 %v3713
    %3963 = vmatpush1.bf16.msra.mxu0 %v3712
    %3964 = vmatprep.subr.bf16.mxu0 %v3721
    %3965 = vmatpush1.bf16.msra.mxu0 %v3720
    %3966 = vmatprep.subr.bf16.mxu0 %v3729
    %3967 = vmatpush1.bf16.msra.mxu0 %v3728
    %3968 = vmatprep.subr.bf16.mxu0 %v3737
    %3969 = vmatpush1.bf16.msra.mxu0 %v3736
    %3970 = vmatprep.subr.bf16.mxu0 %v3745
    %3971 = vmatpush1.bf16.msra.mxu0 %v3744
    %3972 = vmatprep.subr.bf16.mxu0 %v3753
    %3973 = vmatpush1.bf16.msra.mxu0 %v3752
    %3974 = vmatprep.subr.bf16.mxu0 %v3761
    %3975 = vmatpush1.bf16.msra.mxu0 %v3760
    %3976 = vmatprep.subr.bf16.mxu0 %v3769
    %3977 = vmatpush1.bf16.msra.mxu0 %v3768
    %3978 = vmatprep.subr.bf16.mxu0 %v3777
    %3979 = vmatpush1.bf16.msra.mxu0 %v3776
    %3980 = vmatprep.subr.bf16.mxu0 %v3785
    %3981 = vmatpush1.bf16.msra.mxu0 %v3784
    %3982 = vmatprep.subr.bf16.mxu0 %v3793
    %3983 = vmatpush1.bf16.msra.mxu0 %v3792
    %3984 = vmatprep.subr.bf16.mxu0 %v3801
    %3985 = vmatpush1.bf16.msra.mxu0 %v3800
    %3986 = vmatprep.subr.bf16.mxu0 %v3809
    %3987 = vmatpush1.bf16.msra.mxu0 %v3808
    %3988 = vmatprep.subr.bf16.mxu0 %v3817
    %3989 = vmatpush1.bf16.msra.mxu0 %v3816
    %3990 = vmatprep.subr.bf16.mxu0 %v3825
    %3991 = vmatpush1.bf16.msra.mxu0 %v3824
    %3992 = vmatprep.mubr.bf16.mxu0 %v3191
    %3993 = vmatmul.mubr.bf16.gmra.mrb[0].mxu0 %v3190
    %v3994 = vpop.f32.mrb[0].mxu0
    %v3995 = vadd.f32 0.0, %v3994
    %v3996 = vpop.f32.mrb[0].mxu0
    %v3997 = vadd.f32 0.0, %v3996
    %v3998 = vpop.f32.mrb[0].mxu0
    %v3999 = vpop.f32.mrb[0].mxu0
    %4000 = vdwg.mxu0
    %4001 = vmatprep.subr.bf16.mxu0 %v3707
    %4002 = vmatpush1.bf16.msra.mxu0 %v3706
    %4003 = vmatprep.subr.bf16.mxu0 %v3715
    %4004 = vmatpush1.bf16.msra.mxu0 %v3714
    %4005 = vmatprep.subr.bf16.mxu0 %v3723
    %4006 = vmatpush1.bf16.msra.mxu0 %v3722
    %4007 = vmatprep.subr.bf16.mxu0 %v3731
    %4008 = vmatpush1.bf16.msra.mxu0 %v3730
    %4009 = vmatprep.subr.bf16.mxu0 %v3739
    %4010 = vmatpush1.bf16.msra.mxu0 %v3738
    %4011 = vmatprep.subr.bf16.mxu0 %v3747
    %4012 = vmatpush1.bf16.msra.mxu0 %v3746
    %4013 = vmatprep.subr.bf16.mxu0 %v3755
    %4014 = vmatpush1.bf16.msra.mxu0 %v3754
    %4015 = vmatprep.subr.bf16.mxu0 %v3763
    %4016 = vmatpush1.bf16.msra.mxu0 %v3762
    %4017 = vmatprep.subr.bf16.mxu0 %v3771
    %4018 = vmatpush1.bf16.msra.mxu0 %v3770
    %4019 = vmatprep.subr.bf16.mxu0 %v3779
    %4020 = vmatpush1.bf16.msra.mxu0 %v3778
    %4021 = vmatprep.subr.bf16.mxu0 %v3787
    %4022 = vmatpush1.bf16.msra.mxu0 %v3786
    %4023 = vmatprep.subr.bf16.mxu0 %v3795
    %4024 = vmatpush1.bf16.msra.mxu0 %v3794
    %4025 = vmatprep.subr.bf16.mxu0 %v3803
    %4026 = vmatpush1.bf16.msra.mxu0 %v3802
    %4027 = vmatprep.subr.bf16.mxu0 %v3811
    %4028 = vmatpush1.bf16.msra.mxu0 %v3810
    %4029 = vmatprep.subr.bf16.mxu0 %v3819
    %4030 = vmatpush1.bf16.msra.mxu0 %v3818
    %4031 = vmatprep.subr.bf16.mxu0 %v3827
    %4032 = vmatpush1.bf16.msra.mxu0 %v3826
    %4033 = vmatprep.mubr.bf16.mxu0 %v3191
    %4034 = vmatmul.mubr.bf16.gmra.mrb[0].mxu0 %v3190
    %v4035 = vpop.f32.mrb[0].mxu0
    %v4036 = vadd.f32 0.0, %v4035
    %v4037 = vpop.f32.mrb[0].mxu0
    %v4038 = vadd.f32 0.0, %v4037
    %v4039 = vpop.f32.mrb[0].mxu0
    %v4040 = vpop.f32.mrb[0].mxu0
    %4041 = vdwg.mxu0
    %4042 = vmatprep.subr.bf16.mxu0 %v3709
    %4043 = vmatpush1.bf16.msra.mxu0 %v3708
    %4044 = vmatprep.subr.bf16.mxu0 %v3717
    %4045 = vmatpush1.bf16.msra.mxu0 %v3716
    %4046 = vmatprep.subr.bf16.mxu0 %v3725
    %4047 = vmatpush1.bf16.msra.mxu0 %v3724
    %4048 = vmatprep.subr.bf16.mxu0 %v3733
    %4049 = vmatpush1.bf16.msra.mxu0 %v3732
    %4050 = vmatprep.subr.bf16.mxu0 %v3741
    %4051 = vmatpush1.bf16.msra.mxu0 %v3740
    %4052 = vmatprep.subr.bf16.mxu0 %v3749
    %4053 = vmatpush1.bf16.msra.mxu0 %v3748
    %4054 = vmatprep.subr.bf16.mxu0 %v3757
    %4055 = vmatpush1.bf16.msra.mxu0 %v3756
    %4056 = vmatprep.subr.bf16.mxu0 %v3765
    %4057 = vmatpush1.bf16.msra.mxu0 %v3764
    %4058 = vmatprep.subr.bf16.mxu0 %v3773
    %4059 = vmatpush1.bf16.msra.mxu0 %v3772
    %4060 = vmatprep.subr.bf16.mxu0 %v3781
    %4061 = vmatpush1.bf16.msra.mxu0 %v3780
    %4062 = vmatprep.subr.bf16.mxu0 %v3789
    %4063 = vmatpush1.bf16.msra.mxu0 %v3788
    %4064 = vmatprep.subr.bf16.mxu0 %v3797
    %4065 = vmatpush1.bf16.msra.mxu0 %v3796
    %4066 = vmatprep.subr.bf16.mxu0 %v3805
    %4067 = vmatpush1.bf16.msra.mxu0 %v3804
    %4068 = vmatprep.subr.bf16.mxu0 %v3813
    %4069 = vmatpush1.bf16.msra.mxu0 %v3812
    %4070 = vmatprep.subr.bf16.mxu0 %v3821
    %4071 = vmatpush1.bf16.msra.mxu0 %v3820
    %4072 = vmatprep.subr.bf16.mxu0 %v3829
    %4073 = vmatpush1.bf16.msra.mxu0 %v3828
    %4074 = vmatprep.mubr.bf16.mxu0 %v3191
    %4075 = vmatmul.mubr.bf16.gmra.mrb[0].mxu0 %v3190
    %v4076 = vpop.f32.mrb[0].mxu0
    %v4077 = vadd.f32 0.0, %v4076
    %v4078 = vpop.f32.mrb[0].mxu0
    %v4079 = vadd.f32 0.0, %v4078
    %v4080 = vpop.f32.mrb[0].mxu0
    %v4081 = vpop.f32.mrb[0].mxu0
    %4082 = vdwg.mxu0
    %4083 = vmatprep.subr.bf16.mxu0 %v3711
    %4084 = vmatpush1.bf16.msra.mxu0 %v3710
    %4085 = vmatprep.subr.bf16.mxu0 %v3719
    %4086 = vmatpush1.bf16.msra.mxu0 %v3718
    %4087 = vmatprep.subr.bf16.mxu0 %v3727
    %4088 = vmatpush1.bf16.msra.mxu0 %v3726
    %4089 = vmatprep.subr.bf16.mxu0 %v3735
    %4090 = vmatpush1.bf16.msra.mxu0 %v3734
    %4091 = vmatprep.subr.bf16.mxu0 %v3743
    %4092 = vmatpush1.bf16.msra.mxu0 %v3742
    %4093 = vmatprep.subr.bf16.mxu0 %v3751
    %4094 = vmatpush1.bf16.msra.mxu0 %v3750
    %4095 = vmatprep.subr.bf16.mxu0 %v3759
    %4096 = vmatpush1.bf16.msra.mxu0 %v3758
    %4097 = vmatprep.subr.bf16.mxu0 %v3767
    %4098 = vmatpush1.bf16.msra.mxu0 %v3766
    %4099 = vmatprep.subr.bf16.mxu0 %v3775
    %4100 = vmatpush1.bf16.msra.mxu0 %v3774
    %4101 = vmatprep.subr.bf16.mxu0 %v3783
    %4102 = vmatpush1.bf16.msra.mxu0 %v3782
    %4103 = vmatprep.subr.bf16.mxu0 %v3791
    %4104 = vmatpush1.bf16.msra.mxu0 %v3790
    %4105 = vmatprep.subr.bf16.mxu0 %v3799
    %4106 = vmatpush1.bf16.msra.mxu0 %v3798
    %4107 = vmatprep.subr.bf16.mxu0 %v3807
    %4108 = vmatpush1.bf16.msra.mxu0 %v3806
    %4109 = vmatprep.subr.bf16.mxu0 %v3815
    %4110 = vmatpush1.bf16.msra.mxu0 %v3814
    %4111 = vmatprep.subr.bf16.mxu0 %v3823
    %4112 = vmatpush1.bf16.msra.mxu0 %v3822
    %4113 = vmatprep.subr.bf16.mxu0 %v3831
    %4114 = vmatpush1.bf16.msra.mxu0 %v3830
    %4115 = vmatprep.mubr.bf16.mxu0 %v3191
    %4116 = vmatmul.mubr.bf16.gmra.mrb[0].mxu0 %v3190
    %v4117 = vpop.f32.mrb[0].mxu0
    %v4118 = vadd.f32 0.0, %v4117
    %v4119 = vpop.f32.mrb[0].mxu0
    %v4120 = vadd.f32 0.0, %v4119
    %v4121 = vpop.f32.mrb[0].mxu0
    %v4122 = vpop.f32.mrb[0].mxu0
    %4123 = vdwg.mxu0
    %v4132 = vcombine.low %v3995, %v3997
    %v4133 = vcombine.low %v4036, %v4038
    %v4134 = vcombine.low %v4077, %v4079
    %v4135 = vcombine.low %v4118, %v4120
    %v4137 = vunpack.c.l.s4 1966171168
    %v4138 = vunpack.c.0.s8 %v4137
    %v4139 = vlaneseq
    %v4140 = vshrl.u32 %v4139, 7
    %v4141 = vsub.s32 %v4138, %v4140
    %v4142 = vrot.slane %v4132, %v4141
    %v4144 = vunpack.c.l.s4 1966171168
    %v4145 = vunpack.c.0.s8 %v4144
    %v4146 = vlaneseq
    %v4147 = vshrl.u32 %v4146, 7
    %v4148 = vsub.s32 %v4145, %v4147
    %v4149 = vrot.slane %v4133, %v4148
    %v4151 = vunpack.c.l.s4 1966171168
    %v4152 = vunpack.c.0.s8 %v4151
    %v4153 = vlaneseq
    %v4154 = vshrl.u32 %v4153, 7
    %v4155 = vsub.s32 %v4152, %v4154
    %v4156 = vrot.slane %v4134, %v4155
    %v4158 = vunpack.c.l.s4 1966171168
    %v4159 = vunpack.c.0.s8 %v4158
    %v4160 = vlaneseq
    %v4161 = vshrl.u32 %v4160, 7
    %v4162 = vsub.s32 %v4159, %v4161
    %v4163 = vrot.slane %v4135, %v4162
    %v4164 = vcombine.low %v4142, %v4149
    %v4165 = vcombine.low %v4156, %v4163
    %v4167 = vunpack.c.l.s4 1966171168
    %v4168 = vunpack.c.0.s8 %v4167
    %v4169 = vlaneseq
    %v4170 = vshrl.u32 %v4169, 7
    %v4171 = vsub.s32 %v4168, %v4170
    %v4172 = vrot.slane %v4164, %v4171
    %v4174 = vunpack.c.l.s4 1966171168
    %v4175 = vunpack.c.0.s8 %v4174
    %v4176 = vlaneseq
    %v4177 = vshrl.u32 %v4176, 7
    %v4178 = vsub.s32 %v4175, %v4177
    %v4179 = vrot.slane %v4165, %v4178
    %v4180 = vcombine.low %v4172, %v4179
    %v4182 = vadd.f32 %v3178, %v4180
    %v4183 = vxor.u32 %v4182, 2147483648
    %v4184 = vmul.f32 %v4183, 1.442695
    %v4185 = vpow.pop %v4184
    %v4186 = vadd.f32 %v4185, 1.0
    %v4187 = vrcp.pop %v4186
    %v4188 = vmul.f32 1.0, %v4187
    %v4190 = vrot.slane %v4182, 2
    %v4192 = vxor.u32 %v4190, 2147483648
    %v4193 = vmul.f32 %v4192, 1.442695
    %v4194 = vpow.pop %v4193
    %v4195 = vadd.f32 %v4194, 1.0
    %v4196 = vrcp.pop %v4195
    %v4197 = vmul.f32 1.0, %v4196
    %v4198 = vrot.slane %v4182, 4
    %v4200 = vtanh.pop %v4198
    %v4201 = vrot.slane %v4182, 6
    %v4203 = vxor.u32 %v4201, 2147483648
    %v4204 = vmul.f32 %v4203, 1.442695
    %v4205 = vpow.pop %v4204
    %v4206 = vadd.f32 %v4205, 1.0
    %v4207 = vrcp.pop %v4206
    %v4208 = vmul.f32 1.0, %v4207
    %v4209 = vmul.f32 %v4197, %v3173
    %v4210 = vmul.f32 %v4188, %v4200
    %v4211 = vadd.f32 %v4209, %v4210
    %v4212 = vtanh.pop %v4211
    %v4213 = vmul.f32 %v4208, %v4212
    %s4214 = scalar_lea.vmem [#allocation4], 1
    %4215 = vst.msk [vmem:[%s4214] ss:$2 sm:$0x3] %vm137, %v4213
    %v4216 = vld [vmem:[#allocation4] sm:$0xf]
    %v4217 = vld [vmem:[#allocation17] sm:$0xff]
    %v4218 = vld [vmem:[#allocation17 + $0x8] sm:$0xff]
    %v4219 = vld [vmem:[#allocation17 + $0x10] sm:$0xff]
    %v4220 = vld [vmem:[#allocation17 + $0x18] sm:$0xff]
    %v4221 = vld [vmem:[#allocation17 + $0x20] sm:$0xff]
    %v4222 = vld [vmem:[#allocation17 + $0x28] sm:$0xff]
    %v4223 = vld [vmem:[#allocation17 + $0x30] sm:$0xff]
    %v4224 = vld [vmem:[#allocation17 + $0x38] sm:$0xff]
    %v4225 = vld [vmem:[#allocation17 + $0x40] sm:$0xff]
    %v4226 = vld [vmem:[#allocation17 + $0x48] sm:$0xff]
    %v4227 = vld [vmem:[#allocation17 + $0x50] sm:$0xff]
    %v4228 = vld [vmem:[#allocation17 + $0x58] sm:$0xff]
    %v4229 = vld [vmem:[#allocation17 + $0x60] sm:$0xff]
    %v4230 = vld [vmem:[#allocation17 + $0x68] sm:$0xff]
    %v4231 = vld [vmem:[#allocation17 + $0x70] sm:$0xff]
    %v4232 = vld [vmem:[#allocation17 + $0x78] sm:$0xff]
    %v4233 = vld [vmem:[#allocation17 + $0x80] sm:$0xff]
    %v4234 = vld [vmem:[#allocation17 + $0x88] sm:$0xff]
    %v4235 = vld [vmem:[#allocation17 + $0x90] sm:$0xff]
    %v4236 = vld [vmem:[#allocation17 + $0x98] sm:$0xff]
    %v4237 = vld [vmem:[#allocation17 + $0xa0] sm:$0xff]
    %v4238 = vld [vmem:[#allocation17 + $0xa8] sm:$0xff]
    %v4239 = vld [vmem:[#allocation17 + $0xb0] sm:$0xff]
    %v4240 = vld [vmem:[#allocation17 + $0xb8] sm:$0xff]
    %v4241 = vld [vmem:[#allocation17 + $0xc0] sm:$0xff]
    %v4242 = vld [vmem:[#allocation17 + $0xc8] sm:$0xff]
    %v4243 = vld [vmem:[#allocation17 + $0xd0] sm:$0xff]
    %v4244 = vld [vmem:[#allocation17 + $0xd8] sm:$0xff]
    %v4245 = vld [vmem:[#allocation17 + $0xe0] sm:$0xff]
    %v4246 = vld [vmem:[#allocation17 + $0xe8] sm:$0xff]
    %v4247 = vld [vmem:[#allocation17 + $0xf0] sm:$0xff]
    %v4248 = vld [vmem:[#allocation17 + $0xf8] sm:$0xff]
    %v4249 = vld [vmem:[%s8] sm:$0x1]
    %v4251 = vlaneseq
    %v4252 = vshrl.u32 %v4251, 7
    %v4253 = vsub.s32 0, %v4252
    %v4254 = vrot.slane %v4249, %v4253
    %v4258 = vunpack.c.l.s4 1983009808
    %v4259 = vunpack.c.0.s8 %v4258
    %v4260 = vlaneseq
    %v4261 = vshrl.u32 %v4260, 7
    %v4262 = vsub.s32 %v4259, %v4261
    %v4263 = vrot.slane %v4216, %v4262
    %v4264 = vcombine.high %v4263, %v4263
    %4267 = vmatprep.subr.mxu0 0.0
    %4268 = vmatpush1.msra.mxu0 %v4217
    %4269 = vmatprep.subr.mxu0 0.0
    %4270 = vmatpush1.msra.mxu0 %v4218
    %4271 = vmatprep.subr.mxu0 0.0
    %4272 = vmatpush1.msra.mxu0 %v4219
    %4273 = vmatprep.subr.mxu0 0.0
    %4274 = vmatpush1.msra.mxu0 %v4220
    %4275 = vmatprep.subr.mxu0 0.0
    %4276 = vmatpush1.msra.mxu0 %v4221
    %4277 = vmatprep.subr.mxu0 0.0
    %4278 = vmatpush1.msra.mxu0 %v4222
    %4279 = vmatprep.subr.mxu0 0.0
    %4280 = vmatpush1.msra.mxu0 %v4223
    %4281 = vmatprep.subr.mxu0 0.0
    %4282 = vmatpush1.msra.mxu0 %v4224
    %4283 = vmatprep.subr.mxu0 0.0
    %4284 = vmatpush1.msra.mxu0 %v4225
    %4285 = vmatprep.subr.mxu0 0.0
    %4286 = vmatpush1.msra.mxu0 %v4226
    %4287 = vmatprep.subr.mxu0 0.0
    %4288 = vmatpush1.msra.mxu0 %v4227
    %4289 = vmatprep.subr.mxu0 0.0
    %4290 = vmatpush1.msra.mxu0 %v4228
    %4291 = vmatprep.subr.mxu0 0.0
    %4292 = vmatpush1.msra.mxu0 %v4229
    %4293 = vmatprep.subr.mxu0 0.0
    %4294 = vmatpush1.msra.mxu0 %v4230
    %4295 = vmatprep.subr.mxu0 0.0
    %4296 = vmatpush1.msra.mxu0 %v4231
    %4297 = vmatprep.subr.mxu0 0.0
    %4298 = vmatpush1.msra.mxu0 %v4232
    %4299 = vmatprep.subr.mxu0 0.0
    %4300 = vmatpush1.msra.mxu0 %v4233
    %4301 = vmatprep.subr.mxu0 0.0
    %4302 = vmatpush1.msra.mxu0 %v4234
    %4303 = vmatprep.subr.mxu0 0.0
    %4304 = vmatpush1.msra.mxu0 %v4235
    %4305 = vmatprep.subr.mxu0 0.0
    %4306 = vmatpush1.msra.mxu0 %v4236
    %4307 = vmatprep.subr.mxu0 0.0
    %4308 = vmatpush1.msra.mxu0 %v4237
    %4309 = vmatprep.subr.mxu0 0.0
    %4310 = vmatpush1.msra.mxu0 %v4238
    %4311 = vmatprep.subr.mxu0 0.0
    %4312 = vmatpush1.msra.mxu0 %v4239
    %4313 = vmatprep.subr.mxu0 0.0
    %4314 = vmatpush1.msra.mxu0 %v4240
    %4315 = vmatprep.subr.mxu0 0.0
    %4316 = vmatpush1.msra.mxu0 %v4241
    %4317 = vmatprep.subr.mxu0 0.0
    %4318 = vmatpush1.msra.mxu0 %v4242
    %4319 = vmatprep.subr.mxu0 0.0
    %4320 = vmatpush1.msra.mxu0 %v4243
    %4321 = vmatprep.subr.mxu0 0.0
    %4322 = vmatpush1.msra.mxu0 %v4244
    %4323 = vmatprep.subr.mxu0 0.0
    %4324 = vmatpush1.msra.mxu0 %v4245
    %4325 = vmatprep.subr.mxu0 0.0
    %4326 = vmatpush1.msra.mxu0 %v4246
    %4327 = vmatprep.subr.mxu0 0.0
    %4328 = vmatpush1.msra.mxu0 %v4247
    %4329 = vmatprep.subr.mxu0 0.0
    %4330 = vmatpush1.msra.mxu0 %v4248
    %4331 = vmatprep.mubr.f32.mxu0 %v4264
    %4332 = vmatmul.mubr.f32.gmra.mrb[0].mxu0 %v4263
    %v4333 = vpop.f32.mrb[0].mxu0
    %v4334 = vadd.f32 %v4254, %v4333
    %v4335 = vpop.f32.mrb[0].mxu0
    %4336 = vdwg.mxu0
    %v4337 = vxor.u32 %v4334, 2147483648
    %v4338 = vmul.f32 %v4337, 1.442695
    %v4339 = vpow.pop %v4338
    %v4340 = vadd.f32 %v4339, 1.0
    %v4341 = vrcp.pop %v4340
    %v4342 = vmul.f32 1.0, %v4341
    %4343 = vst [vmem:[#allocation18] sm:$0x3] %v4342
    // Predicated region
    $region66: #{temporal_model_pallas.1} parent=1 // pred_check
      _
    $region67: #{temporal_model_pallas.1} parent=1 // pred_check_branch
      %4345 = sbr.rel (0) target = $region69
    $region68: #{temporal_model_pallas.1} parent=1 // pred_region
      %s4347 = ssub.s32 32, 32
      %4348 = vsyncadd [#allocation7], %s4347
      %s4350 = sshll.u32 [#allocation18], 4
      %s4351 = int_to_ptr.vmem [resolvable:$true] %s4350
      %4353 = dma.vmem_to_hbm [thread:$0]  %s4351, 32, %s9, [#allocation7]
    $region69: #{temporal_model_pallas.1} parent=1 // pred_fallthru
      _
    // Predicated region
    $region70: #{temporal_model_pallas.1} parent=1 // pred_check
      _
    $region71: #{temporal_model_pallas.1} parent=1 // pred_check_branch
      %4355 = sbr.rel (0) target = $region73
    $region72: #{temporal_model_pallas.1} parent=1 // pred_region
      %4356 = dma.done [#allocation7], 32
    $region73: #{temporal_model_pallas.1} parent=1 // pred_fallthru
      _
    %4357 = vsyncpa [#allocation6], 1
    %4358 = vsyncpa [#allocation13], 1
    %4359 = vsyncpa [#allocation16], 1
    %4360 = vsyncpa [#allocation7], 1
    %4361 = vsyncpa [#allocation8], 1
    %4362 = vsyncpa [#allocation9], 1

</llo_original>
